<compile_context>
chip_gen: v7x
topology: tpu7x:2x2x1
jax: 0.10.0
libtpu: 0.0.40
codegen_flags: <defaults>
</compile_context>

<pallas_src>
import functools

import jax
import jax.numpy as jnp
from jax.experimental import pallas as pl
from jax.experimental.pallas import tpu as pltpu


def _round_up(x, m):
    return ((x + m - 1) // m) * m


# ----------------------------- Pallas kernel -----------------------------

def fused_lstm_kernel(*refs, num_layers, seq_len, hidden_pad):
    """All LSTM layers (wavefronted) + fc + softmax in one kernel.

    refs layout:
      x_ref                       (T, Bp, Dp)   bf16  time-major padded input
      [wih_l, whh_l, b_l] * L     (Dp|Hp,4Hp) bf16, (Hp,4Hp) bf16, (1,4Hp) f32
      fcw_ref                     (Hp, Op)      bf16
      fcb_ref                     (1, Op)       f32  (padded classes pre-masked to -1e30)
      out_ref                     (Bp, Op)      f32  softmax probabilities
      gx_ref   (scratch)          (T, Bp, 4Hp)  f32  hoisted layer-0 input projection
    PyTorch gate order i, f, g, o (each gate block zero-padded to Hp lanes).
    """
    L = num_layers
    T = seq_len
    Hp = hidden_pad
    G = 4 * Hp

    x_ref = refs[0]
    layer_refs = refs[1:1 + 3 * L]
    fcw_ref = refs[1 + 3 * L]
    fcb_ref = refs[2 + 3 * L]
    out_ref = refs[3 + 3 * L]
    gx_ref = refs[4 + 3 * L]

    Bp = x_ref.shape[1]

    wih = [layer_refs[3 * l][...] for l in range(L)]        # bf16
    whh = [layer_refs[3 * l + 1][...] for l in range(L)]    # bf16
    bias = [layer_refs[3 * l + 2][...] for l in range(L)]   # f32 (1, 4Hp)

    # ---- layer-0 input projection hoisted: one big MXU matmul over all timesteps ----
    x = x_ref[...]                                           # (T, Bp, Dp) bf16
    Dp = x.shape[-1]
    gx0 = jnp.dot(x.reshape(T * Bp, Dp), wih[0],
                  preferred_element_type=jnp.float32)        # (T*Bp, 4Hp) f32
    gx_ref[...] = (gx0 + bias[0]).reshape(T, Bp, G)

    # ---- hoisted activation constants: sigmoid(x)=0.5*tanh(0.5x)+0.5, tanh for g ----
    lane = jax.lax.broadcasted_iota(jnp.int32, (Bp, G), 1)
    is_g = (lane >= 2 * Hp) & (lane < 3 * Hp)
    s_vec = jnp.where(is_g, jnp.float32(1.0), jnp.float32(0.5))
    off_vec = jnp.where(is_g, jnp.float32(0.0), jnp.float32(0.5))

    def lstm_cell(gates, c):
        # One tanh EUP pass over the whole packed gate vector.
        a = jnp.tanh(gates * s_vec) * s_vec + off_vec        # [sig(i)|sig(f)|tanh(g)|sig(o)]
        i = a[:, 0:Hp]
        f = a[:, Hp:2 * Hp]
        g = a[:, 2 * Hp:3 * Hp]
        o = a[:, 3 * Hp:4 * Hp]
        c_new = f * c + i * g
        h_new = o * jnp.tanh(c_new)
        return h_new.astype(jnp.bfloat16), c_new

    h = [jnp.zeros((Bp, Hp), jnp.bfloat16) for _ in range(L)]
    c = [jnp.zeros((Bp, Hp), jnp.float32) for _ in range(L)]

    # ---- wavefront over (layer, time): step w handles layer l at time t = w - l ----
    # Decreasing layer order: layer l reads h[l-1] (layer l-1's output at time t, produced
    # at wavefront step w-1) before layer l-1 overwrites it this step.
    for w in range(T + L - 1):
        hi = min(L - 1, w)
        lo = max(0, w - (T - 1))
        for l in range(hi, lo - 1, -1):
            t = w - l
            rec = jnp.dot(h[l], whh[l], preferred_element_type=jnp.float32)
            if l == 0:
                gates = gx_ref[t] + rec
            else:
                gates = (jnp.dot(h[l - 1], wih[l],
                                 preferred_element_type=jnp.float32)
                         + rec + bias[l])
            h[l], c[l] = lstm_cell(gates, c[l])

    # ---- fused fc + softmax epilogue on the final hidden state only ----
    logits = jnp.dot(h[L - 1], fcw_ref[...],
                     preferred_element_type=jnp.float32) + fcb_ref[...]   # (Bp, Op)
    m = jnp.max(logits, axis=1, keepdims=True)
    e = jnp.exp(logits - m)
    out_ref[...] = e * pl.reciprocal(jnp.sum(e, axis=1, keepdims=True), approx=True)


# ----------------------------- params & packing -----------------------------

def init_params(key, input_dim, hidden_dim, num_layers, output_dim):
    """Params mirroring nn.LSTM / nn.Linear shapes (uniform +-1/sqrt(H))."""
    k = 1.0 / jnp.sqrt(jnp.float32(hidden_dim))
    params = {"layers": []}
    for layer in range(num_layers):
        din = input_dim if layer == 0 else hidden_dim
        key, k1, k2, k3, k4 = jax.random.split(key, 5)
        w_ih = jax.random.uniform(k1, (4 * hidden_dim, din), jnp.float32, -k, k)
        w_hh = jax.random.uniform(k2, (4 * hidden_dim, hidden_dim), jnp.float32, -k, k)
        b_ih = jax.random.uniform(k3, (4 * hidden_dim,), jnp.float32, -k, k)
        b_hh = jax.random.uniform(k4, (4 * hidden_dim,), jnp.float32, -k, k)
        params["layers"].append((w_ih, w_hh, b_ih, b_hh))
    key, k1, k2 = jax.random.split(key, 3)
    params["fc_w"] = jax.random.uniform(k1, (output_dim, hidden_dim), jnp.float32, -k, k)
    params["fc_b"] = jax.random.uniform(k2, (output_dim,), jnp.float32, -k, k)
    return params


def pack_params(params, input_dim, hidden_dim, output_dim):
    """One-time prep: transpose, combine biases, pad per-gate blocks to 128 lanes, cast bf16.

    Gate order i, f, g, o is preserved (do not reorder: on v5e/v6e the MRF pops sequentially
    so the c-path gates arrive before o).  The padded fc-bias lanes carry the -1e30 class
    mask (must stay f32; padded fc-weight columns stay exactly zero).
    """
    Hp = _round_up(hidden_dim, 128)
    Dp = _round_up(input_dim, 128)
    Op = _round_up(output_dim, 128)

    def pad_gate_cols(w):  # (rows, 4H) -> (rows, 4Hp), pad each gate block separately
        blocks = jnp.split(w, 4, axis=1)
        blocks = [jnp.pad(blk, ((0, 0), (0, Hp - hidden_dim))) for blk in blocks]
        return jnp.concatenate(blocks, axis=1)

    layers = []
    for li, (w_ih, w_hh, b_ih, b_hh) in enumerate(params["layers"]):
        din = input_dim if li == 0 else hidden_dim
        dp = Dp if li == 0 else Hp
        wih = pad_gate_cols(w_ih.T)                                     # (din, 4Hp)
        wih = jnp.pad(wih, ((0, dp - din), (0, 0))).astype(jnp.bfloat16)
        whh = pad_gate_cols(w_hh.T)                                     # (H, 4Hp)
        whh = jnp.pad(whh, ((0, Hp - hidden_dim), (0, 0))).astype(jnp.bfloat16)
        b = b_ih + b_hh
        bparts = [jnp.pad(v, (0, Hp - hidden_dim)) for v in jnp.split(b, 4)]
        b = jnp.concatenate(bparts).reshape(1, 4 * Hp).astype(jnp.float32)
        layers.append((wih, whh, b))

    fcw = jnp.pad(params["fc_w"].T,
                  ((0, Hp - hidden_dim), (0, Op - output_dim))).astype(jnp.bfloat16)
    fcb = jnp.concatenate(
        [params["fc_b"].astype(jnp.float32),
         jnp.full((Op - output_dim,), -1e30, jnp.float32)]).reshape(1, Op)
    return {"layers": layers, "fcw": fcw, "fcb": fcb, "Hp": Hp, "Dp": Dp, "Op": Op}


# ----------------------------- forward wrapper -----------------------------

def lstm_forward(x, packed, *, output_dim, num_layers):
    """Matches LSTM.forward: zero (h0,c0), out[:, -1, :], fc, softmax(dim=1)."""
    B, T, din = x.shape
    Hp, Dp, Op = packed["Hp"], packed["Dp"], packed["Op"]
    Bp = _round_up(B, 8)

    # batch-first -> time-major, pad batch to sublane multiple and features to lane multiple
    xt = jnp.transpose(x, (1, 0, 2)).astype(jnp.float32)
    xt = jnp.pad(xt, ((0, 0), (0, Bp - B), (0, Dp - din))).astype(jnp.bfloat16)

    flat_inputs = [xt]
    for (wih, whh, b) in packed["layers"]:
        flat_inputs += [wih, whh, b]
    flat_inputs += [packed["fcw"], packed["fcb"]]

    kernel = functools.partial(
        fused_lstm_kernel, num_layers=num_layers, seq_len=T, hidden_pad=Hp)

    vmem = pl.BlockSpec(memory_space=pltpu.MemorySpace.VMEM)
    out_p = pl.pallas_call(
        kernel,
        out_shape=jax.ShapeDtypeStruct((Bp, Op), jnp.float32),
        in_specs=[vmem] * len(flat_inputs),
        out_specs=vmem,
        scratch_shapes=[
            pltpu.VMEM((T, Bp, 4 * Hp), jnp.float32),   # hoisted layer-0 gate projection
        ],
        compiler_params=pltpu.CompilerParams(vmem_limit_bytes=32 * 1024 * 1024),
    )(*flat_inputs)

    return out_p[:B, :output_dim]


# ----------------------------- pure-JAX reference -----------------------------

def lstm_reference(x, params, hidden_dim):
    B, T, _ = x.shape
    seq = jnp.transpose(x, (1, 0, 2)).astype(jnp.float32)
    H = hidden_dim
    for (w_ih, w_hh, b_ih, b_hh) in params["layers"]:
        h = jnp.zeros((B, H), jnp.float32)
        c = jnp.zeros((B, H), jnp.float32)
        ys = []
        for t in range(T):
            gates = seq[t] @ w_ih.T + h @ w_hh.T + b_ih + b_hh
            i = jax.nn.sigmoid(gates[:, 0:H])
            f = jax.nn.sigmoid(gates[:, H:2 * H])
            g = jnp.tanh(gates[:, 2 * H:3 * H])
            o = jax.nn.sigmoid(gates[:, 3 * H:4 * H])
            c = f * c + i * g
            h = o * jnp.tanh(c)
            ys.append(h)
        seq = jnp.stack(ys)
    logits = seq[-1] @ params["fc_w"].T + params["fc_b"]
    return jax.nn.softmax(logits, axis=1)


if __name__ == "__main__":
    # Small shapes consistent with the module's forward pass.
    batch, seq_len = 2, 8
    input_dim, hidden_dim, num_layers, output_dim = 4, 32, 2, 6

    key = jax.random.PRNGKey(0)
    key, xk = jax.random.split(key)
    x = jax.random.normal(xk, (batch, seq_len, input_dim), jnp.float32)

    params = init_params(key, input_dim, hidden_dim, num_layers, output_dim)
    packed = pack_params(params, input_dim, hidden_dim, output_dim)

    fwd = jax.jit(lambda xx: lstm_forward(
        xx, packed, output_dim=output_dim, num_layers=num_layers))
    out = jax.block_until_ready(fwd(x))

    assert out.shape == (batch, output_dim)
    assert bool(jnp.all(jnp.isfinite(out)))
    # softmax rows sum to ~1 (approx EUP reciprocal in the kernel -> looser tolerance)
    assert bool(jnp.all(jnp.abs(jnp.sum(out, axis=1) - 1.0) < 1e-2))
    # match the f32 pure-JAX reference (bf16 matmul operands -> loose tolerance)
    ref = lstm_reference(x, params, hidden_dim)
    assert bool(jnp.max(jnp.abs(out - ref)) < 5e-2)

    print("KERNEL_OK")
</pallas_src>

<mosaic_0001>
module attributes {stable_mosaic.version = 11 : i64} {
  func.func @fused_lstm_kernel(%arg0: memref<8x8x128xbf16, #tpu.memory_space<vmem>>, %arg1: memref<128x512xbf16, #tpu.memory_space<vmem>>, %arg2: memref<128x512xbf16, #tpu.memory_space<vmem>>, %arg3: memref<1x512xf32, #tpu.memory_space<vmem>>, %arg4: memref<128x512xbf16, #tpu.memory_space<vmem>>, %arg5: memref<128x512xbf16, #tpu.memory_space<vmem>>, %arg6: memref<1x512xf32, #tpu.memory_space<vmem>>, %arg7: memref<128x128xbf16, #tpu.memory_space<vmem>>, %arg8: memref<1x128xf32, #tpu.memory_space<vmem>>, %arg9: memref<8x128xf32, #tpu.memory_space<vmem>>, %arg10: memref<8x8x512xf32, #tpu.memory_space<vmem>>) attributes {dimension_semantics = [], scalar_prefetch = 0 : i64, scratch_operands = 1 : i64, tpu.core_type = #tpu.core_type<tc>} {
    %c0 = arith.constant 0 : index
    %c0_0 = arith.constant 0 : index
    %0 = vector.load %arg1[%c0, %c0_0] : memref<128x512xbf16, #tpu.memory_space<vmem>>, vector<128x512xbf16>
    %c0_1 = arith.constant 0 : index
    %c0_2 = arith.constant 0 : index
    %1 = vector.load %arg4[%c0_1, %c0_2] : memref<128x512xbf16, #tpu.memory_space<vmem>>, vector<128x512xbf16>
    %c0_3 = arith.constant 0 : index
    %c0_4 = arith.constant 0 : index
    %2 = vector.load %arg2[%c0_3, %c0_4] : memref<128x512xbf16, #tpu.memory_space<vmem>>, vector<128x512xbf16>
    %c0_5 = arith.constant 0 : index
    %c0_6 = arith.constant 0 : index
    %3 = vector.load %arg5[%c0_5, %c0_6] : memref<128x512xbf16, #tpu.memory_space<vmem>>, vector<128x512xbf16>
    %c0_7 = arith.constant 0 : index
    %c0_8 = arith.constant 0 : index
    %4 = vector.load %arg3[%c0_7, %c0_8] : memref<1x512xf32, #tpu.memory_space<vmem>>, vector<1x512xf32>
    %c0_9 = arith.constant 0 : index
    %c0_10 = arith.constant 0 : index
    %5 = vector.load %arg6[%c0_9, %c0_10] : memref<1x512xf32, #tpu.memory_space<vmem>>, vector<1x512xf32>
    %c0_11 = arith.constant 0 : index
    %c0_12 = arith.constant 0 : index
    %c0_13 = arith.constant 0 : index
    %6 = vector.load %arg0[%c0_11, %c0_12, %c0_13] : memref<8x8x128xbf16, #tpu.memory_space<vmem>>, vector<8x8x128xbf16>
    %7 = vector.shape_cast %6 : vector<8x8x128xbf16> to vector<64x128xbf16>
    %cst = arith.constant dense<0.000000e+00> : vector<64x512xf32>
    %8 = tpu.matmul %7, %0, %cst {dimension_numbers = #tpu.dot_dimension_numbers<[1], [0], [0], [1], [0, 0, 1, 1], [], []>} : vector<64x128xbf16>, vector<128x512xbf16>, vector<64x512xf32> -> vector<64x512xf32>
    %9 = vector.broadcast %4 : vector<1x512xf32> to vector<64x512xf32>
    %10 = arith.addf %8, %9 : vector<64x512xf32>
    %11 = vector.shape_cast %10 : vector<64x512xf32> to vector<8x8x512xf32>
    %c0_14 = arith.constant 0 : index
    %c0_15 = arith.constant 0 : index
    %c0_16 = arith.constant 0 : index
    %12 = vector.load %arg10[%c0_14, %c0_15, %c0_16] : memref<8x8x512xf32, #tpu.memory_space<vmem>>, vector<8x8x512xf32>
    tpu.vector_store %arg10[%c0_14, %c0_15, %c0_16], %11 {strides = array<i32>} : memref<8x8x512xf32, #tpu.memory_space<vmem>>, vector<8x8x512xf32>,
    %13 = tpu.iota {dimensions = array<i32: 1>} : vector<8x512xi32>
    %c256_i32 = arith.constant 256 : i32
    %14 = vector.broadcast %c256_i32 : i32 to vector<8x512xi32>
    %15 = arith.cmpi sge, %13, %14 : vector<8x512xi32>
    %c384_i32 = arith.constant 384 : i32
    %16 = vector.broadcast %c384_i32 : i32 to vector<8x512xi32>
    %17 = arith.cmpi slt, %13, %16 : vector<8x512xi32>
    %18 = arith.andi %15, %17 : vector<8x512xi1>
    %cst_17 = arith.constant 1.000000e+00 : f32
    %cst_18 = arith.constant 5.000000e-01 : f32
    %19 = vector.broadcast %cst_17 : f32 to vector<8x512xf32>
    %20 = vector.broadcast %cst_18 : f32 to vector<8x512xf32>
    %21 = arith.select %18, %19, %20 : vector<8x512xi1>, vector<8x512xf32>
    %cst_19 = arith.constant 0.000000e+00 : f32
    %cst_20 = arith.constant 5.000000e-01 : f32
    %22 = vector.broadcast %cst_19 : f32 to vector<8x512xf32>
    %23 = vector.broadcast %cst_20 : f32 to vector<8x512xf32>
    %24 = arith.select %18, %22, %23 : vector<8x512xi1>, vector<8x512xf32>
    %cst_21 = arith.constant 0.000000e+00 : bf16
    %25 = vector.broadcast %cst_21 : bf16 to vector<8x128xbf16>
    %cst_22 = arith.constant 0.000000e+00 : bf16
    %26 = vector.broadcast %cst_22 : bf16 to vector<8x128xbf16>
    %cst_23 = arith.constant 0.000000e+00 : f32
    %27 = vector.broadcast %cst_23 : f32 to vector<8x128xf32>
    %cst_24 = arith.constant 0.000000e+00 : f32
    %28 = vector.broadcast %cst_24 : f32 to vector<8x128xf32>
    %cst_25 = arith.constant dense<0.000000e+00> : vector<8x512xf32>
    %29 = tpu.matmul %25, %2, %cst_25 {dimension_numbers = #tpu.dot_dimension_numbers<[1], [0], [0], [1], [0, 0, 1, 1], [], []>} : vector<8x128xbf16>, vector<128x512xbf16>, vector<8x512xf32> -> vector<8x512xf32>
    %c0_26 = arith.constant 0 : index
    %c0_27 = arith.constant 0 : index
    %c0_28 = arith.constant 0 : index
    %30 = vector.load %arg10[%c0_26, %c0_27, %c0_28] : memref<8x8x512xf32, #tpu.memory_space<vmem>>, vector<1x8x512xf32>
    %31 = vector.shape_cast %30 : vector<1x8x512xf32> to vector<8x512xf32>
    %32 = arith.addf %31, %29 : vector<8x512xf32>
    %33 = arith.mulf %32, %21 : vector<8x512xf32>
    %34 = math.tanh %33 : vector<8x512xf32>
    %35 = arith.mulf %34, %21 : vector<8x512xf32>
    %36 = arith.addf %35, %24 : vector<8x512xf32>
    %37 = vector.extract_strided_slice %36 {offsets = [0, 0], sizes = [8, 128], strides = [1, 1]} : vector<8x512xf32> to vector<8x128xf32>
    %38 = vector.extract_strided_slice %36 {offsets = [0, 128], sizes = [8, 128], strides = [1, 1]} : vector<8x512xf32> to vector<8x128xf32>
    %39 = vector.extract_strided_slice %36 {offsets = [0, 256], sizes = [8, 128], strides = [1, 1]} : vector<8x512xf32> to vector<8x128xf32>
    %40 = vector.extract_strided_slice %36 {offsets = [0, 384], sizes = [8, 128], strides = [1, 1]} : vector<8x512xf32> to vector<8x128xf32>
    %41 = arith.mulf %38, %27 : vector<8x128xf32>
    %42 = arith.mulf %37, %39 : vector<8x128xf32>
    %43 = arith.addf %41, %42 : vector<8x128xf32>
    %44 = math.tanh %43 : vector<8x128xf32>
    %45 = arith.mulf %40, %44 : vector<8x128xf32>
    %46 = arith.truncf %45 : vector<8x128xf32> to vector<8x128xbf16>
    %cst_29 = arith.constant dense<0.000000e+00> : vector<8x512xf32>
    %47 = tpu.matmul %26, %3, %cst_29 {dimension_numbers = #tpu.dot_dimension_numbers<[1], [0], [0], [1], [0, 0, 1, 1], [], []>} : vector<8x128xbf16>, vector<128x512xbf16>, vector<8x512xf32> -> vector<8x512xf32>
    %cst_30 = arith.constant dense<0.000000e+00> : vector<8x512xf32>
    %48 = tpu.matmul %46, %1, %cst_30 {dimension_numbers = #tpu.dot_dimension_numbers<[1], [0], [0], [1], [0, 0, 1, 1], [], []>} : vector<8x128xbf16>, vector<128x512xbf16>, vector<8x512xf32> -> vector<8x512xf32>
    %49 = arith.addf %48, %47 : vector<8x512xf32>
    %50 = vector.broadcast %5 : vector<1x512xf32> to vector<8x512xf32>
    %51 = arith.addf %49, %50 : vector<8x512xf32>
    %52 = arith.mulf %51, %21 : vector<8x512xf32>
    %53 = math.tanh %52 : vector<8x512xf32>
    %54 = arith.mulf %53, %21 : vector<8x512xf32>
    %55 = arith.addf %54, %24 : vector<8x512xf32>
    %56 = vector.extract_strided_slice %55 {offsets = [0, 0], sizes = [8, 128], strides = [1, 1]} : vector<8x512xf32> to vector<8x128xf32>
    %57 = vector.extract_strided_slice %55 {offsets = [0, 128], sizes = [8, 128], strides = [1, 1]} : vector<8x512xf32> to vector<8x128xf32>
    %58 = vector.extract_strided_slice %55 {offsets = [0, 256], sizes = [8, 128], strides = [1, 1]} : vector<8x512xf32> to vector<8x128xf32>
    %59 = vector.extract_strided_slice %55 {offsets = [0, 384], sizes = [8, 128], strides = [1, 1]} : vector<8x512xf32> to vector<8x128xf32>
    %60 = arith.mulf %57, %28 : vector<8x128xf32>
    %61 = arith.mulf %56, %58 : vector<8x128xf32>
    %62 = arith.addf %60, %61 : vector<8x128xf32>
    %63 = math.tanh %62 : vector<8x128xf32>
    %64 = arith.mulf %59, %63 : vector<8x128xf32>
    %65 = arith.truncf %64 : vector<8x128xf32> to vector<8x128xbf16>
    %cst_31 = arith.constant dense<0.000000e+00> : vector<8x512xf32>
    %66 = tpu.matmul %46, %2, %cst_31 {dimension_numbers = #tpu.dot_dimension_numbers<[1], [0], [0], [1], [0, 0, 1, 1], [], []>} : vector<8x128xbf16>, vector<128x512xbf16>, vector<8x512xf32> -> vector<8x512xf32>
    %c1 = arith.constant 1 : index
    %c0_32 = arith.constant 0 : index
    %c0_33 = arith.constant 0 : index
    %67 = vector.load %arg10[%c1, %c0_32, %c0_33] : memref<8x8x512xf32, #tpu.memory_space<vmem>>, vector<1x8x512xf32>
    %68 = vector.shape_cast %67 : vector<1x8x512xf32> to vector<8x512xf32>
    %69 = arith.addf %68, %66 : vector<8x512xf32>
    %70 = arith.mulf %69, %21 : vector<8x512xf32>
    %71 = math.tanh %70 : vector<8x512xf32>
    %72 = arith.mulf %71, %21 : vector<8x512xf32>
    %73 = arith.addf %72, %24 : vector<8x512xf32>
    %74 = vector.extract_strided_slice %73 {offsets = [0, 0], sizes = [8, 128], strides = [1, 1]} : vector<8x512xf32> to vector<8x128xf32>
    %75 = vector.extract_strided_slice %73 {offsets = [0, 128], sizes = [8, 128], strides = [1, 1]} : vector<8x512xf32> to vector<8x128xf32>
    %76 = vector.extract_strided_slice %73 {offsets = [0, 256], sizes = [8, 128], strides = [1, 1]} : vector<8x512xf32> to vector<8x128xf32>
    %77 = vector.extract_strided_slice %73 {offsets = [0, 384], sizes = [8, 128], strides = [1, 1]} : vector<8x512xf32> to vector<8x128xf32>
    %78 = arith.mulf %75, %43 : vector<8x128xf32>
    %79 = arith.mulf %74, %76 : vector<8x128xf32>
    %80 = arith.addf %78, %79 : vector<8x128xf32>
    %81 = math.tanh %80 : vector<8x128xf32>
    %82 = arith.mulf %77, %81 : vector<8x128xf32>
    %83 = arith.truncf %82 : vector<8x128xf32> to vector<8x128xbf16>
    %cst_34 = arith.constant dense<0.000000e+00> : vector<8x512xf32>
    %84 = tpu.matmul %65, %3, %cst_34 {dimension_numbers = #tpu.dot_dimension_numbers<[1], [0], [0], [1], [0, 0, 1, 1], [], []>} : vector<8x128xbf16>, vector<128x512xbf16>, vector<8x512xf32> -> vector<8x512xf32>
    %cst_35 = arith.constant dense<0.000000e+00> : vector<8x512xf32>
    %85 = tpu.matmul %83, %1, %cst_35 {dimension_numbers = #tpu.dot_dimension_numbers<[1], [0], [0], [1], [0, 0, 1, 1], [], []>} : vector<8x128xbf16>, vector<128x512xbf16>, vector<8x512xf32> -> vector<8x512xf32>
    %86 = arith.addf %85, %84 : vector<8x512xf32>
    %87 = vector.broadcast %5 : vector<1x512xf32> to vector<8x512xf32>
    %88 = arith.addf %86, %87 : vector<8x512xf32>
    %89 = arith.mulf %88, %21 : vector<8x512xf32>
    %90 = math.tanh %89 : vector<8x512xf32>
    %91 = arith.mulf %90, %21 : vector<8x512xf32>
    %92 = arith.addf %91, %24 : vector<8x512xf32>
    %93 = vector.extract_strided_slice %92 {offsets = [0, 0], sizes = [8, 128], strides = [1, 1]} : vector<8x512xf32> to vector<8x128xf32>
    %94 = vector.extract_strided_slice %92 {offsets = [0, 128], sizes = [8, 128], strides = [1, 1]} : vector<8x512xf32> to vector<8x128xf32>
    %95 = vector.extract_strided_slice %92 {offsets = [0, 256], sizes = [8, 128], strides = [1, 1]} : vector<8x512xf32> to vector<8x128xf32>
    %96 = vector.extract_strided_slice %92 {offsets = [0, 384], sizes = [8, 128], strides = [1, 1]} : vector<8x512xf32> to vector<8x128xf32>
    %97 = arith.mulf %94, %62 : vector<8x128xf32>
    %98 = arith.mulf %93, %95 : vector<8x128xf32>
    %99 = arith.addf %97, %98 : vector<8x128xf32>
    %100 = math.tanh %99 : vector<8x128xf32>
    %101 = arith.mulf %96, %100 : vector<8x128xf32>
    %102 = arith.truncf %101 : vector<8x128xf32> to vector<8x128xbf16>
    %cst_36 = arith.constant dense<0.000000e+00> : vector<8x512xf32>
    %103 = tpu.matmul %83, %2, %cst_36 {dimension_numbers = #tpu.dot_dimension_numbers<[1], [0], [0], [1], [0, 0, 1, 1], [], []>} : vector<8x128xbf16>, vector<128x512xbf16>, vector<8x512xf32> -> vector<8x512xf32>
    %c2 = arith.constant 2 : index
    %c0_37 = arith.constant 0 : index
    %c0_38 = arith.constant 0 : index
    %104 = vector.load %arg10[%c2, %c0_37, %c0_38] : memref<8x8x512xf32, #tpu.memory_space<vmem>>, vector<1x8x512xf32>
    %105 = vector.shape_cast %104 : vector<1x8x512xf32> to vector<8x512xf32>
    %106 = arith.addf %105, %103 : vector<8x512xf32>
    %107 = arith.mulf %106, %21 : vector<8x512xf32>
    %108 = math.tanh %107 : vector<8x512xf32>
    %109 = arith.mulf %108, %21 : vector<8x512xf32>
    %110 = arith.addf %109, %24 : vector<8x512xf32>
    %111 = vector.extract_strided_slice %110 {offsets = [0, 0], sizes = [8, 128], strides = [1, 1]} : vector<8x512xf32> to vector<8x128xf32>
    %112 = vector.extract_strided_slice %110 {offsets = [0, 128], sizes = [8, 128], strides = [1, 1]} : vector<8x512xf32> to vector<8x128xf32>
    %113 = vector.extract_strided_slice %110 {offsets = [0, 256], sizes = [8, 128], strides = [1, 1]} : vector<8x512xf32> to vector<8x128xf32>
    %114 = vector.extract_strided_slice %110 {offsets = [0, 384], sizes = [8, 128], strides = [1, 1]} : vector<8x512xf32> to vector<8x128xf32>
    %115 = arith.mulf %112, %80 : vector<8x128xf32>
    %116 = arith.mulf %111, %113 : vector<8x128xf32>
    %117 = arith.addf %115, %116 : vector<8x128xf32>
    %118 = math.tanh %117 : vector<8x128xf32>
    %119 = arith.mulf %114, %118 : vector<8x128xf32>
    %120 = arith.truncf %119 : vector<8x128xf32> to vector<8x128xbf16>
    %cst_39 = arith.constant dense<0.000000e+00> : vector<8x512xf32>
    %121 = tpu.matmul %102, %3, %cst_39 {dimension_numbers = #tpu.dot_dimension_numbers<[1], [0], [0], [1], [0, 0, 1, 1], [], []>} : vector<8x128xbf16>, vector<128x512xbf16>, vector<8x512xf32> -> vector<8x512xf32>
    %cst_40 = arith.constant dense<0.000000e+00> : vector<8x512xf32>
    %122 = tpu.matmul %120, %1, %cst_40 {dimension_numbers = #tpu.dot_dimension_numbers<[1], [0], [0], [1], [0, 0, 1, 1], [], []>} : vector<8x128xbf16>, vector<128x512xbf16>, vector<8x512xf32> -> vector<8x512xf32>
    %123 = arith.addf %122, %121 : vector<8x512xf32>
    %124 = vector.broadcast %5 : vector<1x512xf32> to vector<8x512xf32>
    %125 = arith.addf %123, %124 : vector<8x512xf32>
    %126 = arith.mulf %125, %21 : vector<8x512xf32>
    %127 = math.tanh %126 : vector<8x512xf32>
    %128 = arith.mulf %127, %21 : vector<8x512xf32>
    %129 = arith.addf %128, %24 : vector<8x512xf32>
    %130 = vector.extract_strided_slice %129 {offsets = [0, 0], sizes = [8, 128], strides = [1, 1]} : vector<8x512xf32> to vector<8x128xf32>
    %131 = vector.extract_strided_slice %129 {offsets = [0, 128], sizes = [8, 128], strides = [1, 1]} : vector<8x512xf32> to vector<8x128xf32>
    %132 = vector.extract_strided_slice %129 {offsets = [0, 256], sizes = [8, 128], strides = [1, 1]} : vector<8x512xf32> to vector<8x128xf32>
    %133 = vector.extract_strided_slice %129 {offsets = [0, 384], sizes = [8, 128], strides = [1, 1]} : vector<8x512xf32> to vector<8x128xf32>
    %134 = arith.mulf %131, %99 : vector<8x128xf32>
    %135 = arith.mulf %130, %132 : vector<8x128xf32>
    %136 = arith.addf %134, %135 : vector<8x128xf32>
    %137 = math.tanh %136 : vector<8x128xf32>
    %138 = arith.mulf %133, %137 : vector<8x128xf32>
    %139 = arith.truncf %138 : vector<8x128xf32> to vector<8x128xbf16>
    %cst_41 = arith.constant dense<0.000000e+00> : vector<8x512xf32>
    %140 = tpu.matmul %120, %2, %cst_41 {dimension_numbers = #tpu.dot_dimension_numbers<[1], [0], [0], [1], [0, 0, 1, 1], [], []>} : vector<8x128xbf16>, vector<128x512xbf16>, vector<8x512xf32> -> vector<8x512xf32>
    %c3 = arith.constant 3 : index
    %c0_42 = arith.constant 0 : index
    %c0_43 = arith.constant 0 : index
    %141 = vector.load %arg10[%c3, %c0_42, %c0_43] : memref<8x8x512xf32, #tpu.memory_space<vmem>>, vector<1x8x512xf32>
    %142 = vector.shape_cast %141 : vector<1x8x512xf32> to vector<8x512xf32>
    %143 = arith.addf %142, %140 : vector<8x512xf32>
    %144 = arith.mulf %143, %21 : vector<8x512xf32>
    %145 = math.tanh %144 : vector<8x512xf32>
    %146 = arith.mulf %145, %21 : vector<8x512xf32>
    %147 = arith.addf %146, %24 : vector<8x512xf32>
    %148 = vector.extract_strided_slice %147 {offsets = [0, 0], sizes = [8, 128], strides = [1, 1]} : vector<8x512xf32> to vector<8x128xf32>
    %149 = vector.extract_strided_slice %147 {offsets = [0, 128], sizes = [8, 128], strides = [1, 1]} : vector<8x512xf32> to vector<8x128xf32>
    %150 = vector.extract_strided_slice %147 {offsets = [0, 256], sizes = [8, 128], strides = [1, 1]} : vector<8x512xf32> to vector<8x128xf32>
    %151 = vector.extract_strided_slice %147 {offsets = [0, 384], sizes = [8, 128], strides = [1, 1]} : vector<8x512xf32> to vector<8x128xf32>
    %152 = arith.mulf %149, %117 : vector<8x128xf32>
    %153 = arith.mulf %148, %150 : vector<8x128xf32>
    %154 = arith.addf %152, %153 : vector<8x128xf32>
    %155 = math.tanh %154 : vector<8x128xf32>
    %156 = arith.mulf %151, %155 : vector<8x128xf32>
    %157 = arith.truncf %156 : vector<8x128xf32> to vector<8x128xbf16>
    %cst_44 = arith.constant dense<0.000000e+00> : vector<8x512xf32>
    %158 = tpu.matmul %139, %3, %cst_44 {dimension_numbers = #tpu.dot_dimension_numbers<[1], [0], [0], [1], [0, 0, 1, 1], [], []>} : vector<8x128xbf16>, vector<128x512xbf16>, vector<8x512xf32> -> vector<8x512xf32>
    %cst_45 = arith.constant dense<0.000000e+00> : vector<8x512xf32>
    %159 = tpu.matmul %157, %1, %cst_45 {dimension_numbers = #tpu.dot_dimension_numbers<[1], [0], [0], [1], [0, 0, 1, 1], [], []>} : vector<8x128xbf16>, vector<128x512xbf16>, vector<8x512xf32> -> vector<8x512xf32>
    %160 = arith.addf %159, %158 : vector<8x512xf32>
    %161 = vector.broadcast %5 : vector<1x512xf32> to vector<8x512xf32>
    %162 = arith.addf %160, %161 : vector<8x512xf32>
    %163 = arith.mulf %162, %21 : vector<8x512xf32>
    %164 = math.tanh %163 : vector<8x512xf32>
    %165 = arith.mulf %164, %21 : vector<8x512xf32>
    %166 = arith.addf %165, %24 : vector<8x512xf32>
    %167 = vector.extract_strided_slice %166 {offsets = [0, 0], sizes = [8, 128], strides = [1, 1]} : vector<8x512xf32> to vector<8x128xf32>
    %168 = vector.extract_strided_slice %166 {offsets = [0, 128], sizes = [8, 128], strides = [1, 1]} : vector<8x512xf32> to vector<8x128xf32>
    %169 = vector.extract_strided_slice %166 {offsets = [0, 256], sizes = [8, 128], strides = [1, 1]} : vector<8x512xf32> to vector<8x128xf32>
    %170 = vector.extract_strided_slice %166 {offsets = [0, 384], sizes = [8, 128], strides = [1, 1]} : vector<8x512xf32> to vector<8x128xf32>
    %171 = arith.mulf %168, %136 : vector<8x128xf32>
    %172 = arith.mulf %167, %169 : vector<8x128xf32>
    %173 = arith.addf %171, %172 : vector<8x128xf32>
    %174 = math.tanh %173 : vector<8x128xf32>
    %175 = arith.mulf %170, %174 : vector<8x128xf32>
    %176 = arith.truncf %175 : vector<8x128xf32> to vector<8x128xbf16>
    %cst_46 = arith.constant dense<0.000000e+00> : vector<8x512xf32>
    %177 = tpu.matmul %157, %2, %cst_46 {dimension_numbers = #tpu.dot_dimension_numbers<[1], [0], [0], [1], [0, 0, 1, 1], [], []>} : vector<8x128xbf16>, vector<128x512xbf16>, vector<8x512xf32> -> vector<8x512xf32>
    %c4 = arith.constant 4 : index
    %c0_47 = arith.constant 0 : index
    %c0_48 = arith.constant 0 : index
    %178 = vector.load %arg10[%c4, %c0_47, %c0_48] : memref<8x8x512xf32, #tpu.memory_space<vmem>>, vector<1x8x512xf32>
    %179 = vector.shape_cast %178 : vector<1x8x512xf32> to vector<8x512xf32>
    %180 = arith.addf %179, %177 : vector<8x512xf32>
    %181 = arith.mulf %180, %21 : vector<8x512xf32>
    %182 = math.tanh %181 : vector<8x512xf32>
    %183 = arith.mulf %182, %21 : vector<8x512xf32>
    %184 = arith.addf %183, %24 : vector<8x512xf32>
    %185 = vector.extract_strided_slice %184 {offsets = [0, 0], sizes = [8, 128], strides = [1, 1]} : vector<8x512xf32> to vector<8x128xf32>
    %186 = vector.extract_strided_slice %184 {offsets = [0, 128], sizes = [8, 128], strides = [1, 1]} : vector<8x512xf32> to vector<8x128xf32>
    %187 = vector.extract_strided_slice %184 {offsets = [0, 256], sizes = [8, 128], strides = [1, 1]} : vector<8x512xf32> to vector<8x128xf32>
    %188 = vector.extract_strided_slice %184 {offsets = [0, 384], sizes = [8, 128], strides = [1, 1]} : vector<8x512xf32> to vector<8x128xf32>
    %189 = arith.mulf %186, %154 : vector<8x128xf32>
    %190 = arith.mulf %185, %187 : vector<8x128xf32>
    %191 = arith.addf %189, %190 : vector<8x128xf32>
    %192 = math.tanh %191 : vector<8x128xf32>
    %193 = arith.mulf %188, %192 : vector<8x128xf32>
    %194 = arith.truncf %193 : vector<8x128xf32> to vector<8x128xbf16>
    %cst_49 = arith.constant dense<0.000000e+00> : vector<8x512xf32>
    %195 = tpu.matmul %176, %3, %cst_49 {dimension_numbers = #tpu.dot_dimension_numbers<[1], [0], [0], [1], [0, 0, 1, 1], [], []>} : vector<8x128xbf16>, vector<128x512xbf16>, vector<8x512xf32> -> vector<8x512xf32>
    %cst_50 = arith.constant dense<0.000000e+00> : vector<8x512xf32>
    %196 = tpu.matmul %194, %1, %cst_50 {dimension_numbers = #tpu.dot_dimension_numbers<[1], [0], [0], [1], [0, 0, 1, 1], [], []>} : vector<8x128xbf16>, vector<128x512xbf16>, vector<8x512xf32> -> vector<8x512xf32>
    %197 = arith.addf %196, %195 : vector<8x512xf32>
    %198 = vector.broadcast %5 : vector<1x512xf32> to vector<8x512xf32>
    %199 = arith.addf %197, %198 : vector<8x512xf32>
    %200 = arith.mulf %199, %21 : vector<8x512xf32>
    %201 = math.tanh %200 : vector<8x512xf32>
    %202 = arith.mulf %201, %21 : vector<8x512xf32>
    %203 = arith.addf %202, %24 : vector<8x512xf32>
    %204 = vector.extract_strided_slice %203 {offsets = [0, 0], sizes = [8, 128], strides = [1, 1]} : vector<8x512xf32> to vector<8x128xf32>
    %205 = vector.extract_strided_slice %203 {offsets = [0, 128], sizes = [8, 128], strides = [1, 1]} : vector<8x512xf32> to vector<8x128xf32>
    %206 = vector.extract_strided_slice %203 {offsets = [0, 256], sizes = [8, 128], strides = [1, 1]} : vector<8x512xf32> to vector<8x128xf32>
    %207 = vector.extract_strided_slice %203 {offsets = [0, 384], sizes = [8, 128], strides = [1, 1]} : vector<8x512xf32> to vector<8x128xf32>
    %208 = arith.mulf %205, %173 : vector<8x128xf32>
    %209 = arith.mulf %204, %206 : vector<8x128xf32>
    %210 = arith.addf %208, %209 : vector<8x128xf32>
    %211 = math.tanh %210 : vector<8x128xf32>
    %212 = arith.mulf %207, %211 : vector<8x128xf32>
    %213 = arith.truncf %212 : vector<8x128xf32> to vector<8x128xbf16>
    %cst_51 = arith.constant dense<0.000000e+00> : vector<8x512xf32>
    %214 = tpu.matmul %194, %2, %cst_51 {dimension_numbers = #tpu.dot_dimension_numbers<[1], [0], [0], [1], [0, 0, 1, 1], [], []>} : vector<8x128xbf16>, vector<128x512xbf16>, vector<8x512xf32> -> vector<8x512xf32>
    %c5 = arith.constant 5 : index
    %c0_52 = arith.constant 0 : index
    %c0_53 = arith.constant 0 : index
    %215 = vector.load %arg10[%c5, %c0_52, %c0_53] : memref<8x8x512xf32, #tpu.memory_space<vmem>>, vector<1x8x512xf32>
    %216 = vector.shape_cast %215 : vector<1x8x512xf32> to vector<8x512xf32>
    %217 = arith.addf %216, %214 : vector<8x512xf32>
    %218 = arith.mulf %217, %21 : vector<8x512xf32>
    %219 = math.tanh %218 : vector<8x512xf32>
    %220 = arith.mulf %219, %21 : vector<8x512xf32>
    %221 = arith.addf %220, %24 : vector<8x512xf32>
    %222 = vector.extract_strided_slice %221 {offsets = [0, 0], sizes = [8, 128], strides = [1, 1]} : vector<8x512xf32> to vector<8x128xf32>
    %223 = vector.extract_strided_slice %221 {offsets = [0, 128], sizes = [8, 128], strides = [1, 1]} : vector<8x512xf32> to vector<8x128xf32>
    %224 = vector.extract_strided_slice %221 {offsets = [0, 256], sizes = [8, 128], strides = [1, 1]} : vector<8x512xf32> to vector<8x128xf32>
    %225 = vector.extract_strided_slice %221 {offsets = [0, 384], sizes = [8, 128], strides = [1, 1]} : vector<8x512xf32> to vector<8x128xf32>
    %226 = arith.mulf %223, %191 : vector<8x128xf32>
    %227 = arith.mulf %222, %224 : vector<8x128xf32>
    %228 = arith.addf %226, %227 : vector<8x128xf32>
    %229 = math.tanh %228 : vector<8x128xf32>
    %230 = arith.mulf %225, %229 : vector<8x128xf32>
    %231 = arith.truncf %230 : vector<8x128xf32> to vector<8x128xbf16>
    %cst_54 = arith.constant dense<0.000000e+00> : vector<8x512xf32>
    %232 = tpu.matmul %213, %3, %cst_54 {dimension_numbers = #tpu.dot_dimension_numbers<[1], [0], [0], [1], [0, 0, 1, 1], [], []>} : vector<8x128xbf16>, vector<128x512xbf16>, vector<8x512xf32> -> vector<8x512xf32>
    %cst_55 = arith.constant dense<0.000000e+00> : vector<8x512xf32>
    %233 = tpu.matmul %231, %1, %cst_55 {dimension_numbers = #tpu.dot_dimension_numbers<[1], [0], [0], [1], [0, 0, 1, 1], [], []>} : vector<8x128xbf16>, vector<128x512xbf16>, vector<8x512xf32> -> vector<8x512xf32>
    %234 = arith.addf %233, %232 : vector<8x512xf32>
    %235 = vector.broadcast %5 : vector<1x512xf32> to vector<8x512xf32>
    %236 = arith.addf %234, %235 : vector<8x512xf32>
    %237 = arith.mulf %236, %21 : vector<8x512xf32>
    %238 = math.tanh %237 : vector<8x512xf32>
    %239 = arith.mulf %238, %21 : vector<8x512xf32>
    %240 = arith.addf %239, %24 : vector<8x512xf32>
    %241 = vector.extract_strided_slice %240 {offsets = [0, 0], sizes = [8, 128], strides = [1, 1]} : vector<8x512xf32> to vector<8x128xf32>
    %242 = vector.extract_strided_slice %240 {offsets = [0, 128], sizes = [8, 128], strides = [1, 1]} : vector<8x512xf32> to vector<8x128xf32>
    %243 = vector.extract_strided_slice %240 {offsets = [0, 256], sizes = [8, 128], strides = [1, 1]} : vector<8x512xf32> to vector<8x128xf32>
    %244 = vector.extract_strided_slice %240 {offsets = [0, 384], sizes = [8, 128], strides = [1, 1]} : vector<8x512xf32> to vector<8x128xf32>
    %245 = arith.mulf %242, %210 : vector<8x128xf32>
    %246 = arith.mulf %241, %243 : vector<8x128xf32>
    %247 = arith.addf %245, %246 : vector<8x128xf32>
    %248 = math.tanh %247 : vector<8x128xf32>
    %249 = arith.mulf %244, %248 : vector<8x128xf32>
    %250 = arith.truncf %249 : vector<8x128xf32> to vector<8x128xbf16>
    %cst_56 = arith.constant dense<0.000000e+00> : vector<8x512xf32>
    %251 = tpu.matmul %231, %2, %cst_56 {dimension_numbers = #tpu.dot_dimension_numbers<[1], [0], [0], [1], [0, 0, 1, 1], [], []>} : vector<8x128xbf16>, vector<128x512xbf16>, vector<8x512xf32> -> vector<8x512xf32>
    %c6 = arith.constant 6 : index
    %c0_57 = arith.constant 0 : index
    %c0_58 = arith.constant 0 : index
    %252 = vector.load %arg10[%c6, %c0_57, %c0_58] : memref<8x8x512xf32, #tpu.memory_space<vmem>>, vector<1x8x512xf32>
    %253 = vector.shape_cast %252 : vector<1x8x512xf32> to vector<8x512xf32>
    %254 = arith.addf %253, %251 : vector<8x512xf32>
    %255 = arith.mulf %254, %21 : vector<8x512xf32>
    %256 = math.tanh %255 : vector<8x512xf32>
    %257 = arith.mulf %256, %21 : vector<8x512xf32>
    %258 = arith.addf %257, %24 : vector<8x512xf32>
    %259 = vector.extract_strided_slice %258 {offsets = [0, 0], sizes = [8, 128], strides = [1, 1]} : vector<8x512xf32> to vector<8x128xf32>
    %260 = vector.extract_strided_slice %258 {offsets = [0, 128], sizes = [8, 128], strides = [1, 1]} : vector<8x512xf32> to vector<8x128xf32>
    %261 = vector.extract_strided_slice %258 {offsets = [0, 256], sizes = [8, 128], strides = [1, 1]} : vector<8x512xf32> to vector<8x128xf32>
    %262 = vector.extract_strided_slice %258 {offsets = [0, 384], sizes = [8, 128], strides = [1, 1]} : vector<8x512xf32> to vector<8x128xf32>
    %263 = arith.mulf %260, %228 : vector<8x128xf32>
    %264 = arith.mulf %259, %261 : vector<8x128xf32>
    %265 = arith.addf %263, %264 : vector<8x128xf32>
    %266 = math.tanh %265 : vector<8x128xf32>
    %267 = arith.mulf %262, %266 : vector<8x128xf32>
    %268 = arith.truncf %267 : vector<8x128xf32> to vector<8x128xbf16>
    %cst_59 = arith.constant dense<0.000000e+00> : vector<8x512xf32>
    %269 = tpu.matmul %250, %3, %cst_59 {dimension_numbers = #tpu.dot_dimension_numbers<[1], [0], [0], [1], [0, 0, 1, 1], [], []>} : vector<8x128xbf16>, vector<128x512xbf16>, vector<8x512xf32> -> vector<8x512xf32>
    %cst_60 = arith.constant dense<0.000000e+00> : vector<8x512xf32>
    %270 = tpu.matmul %268, %1, %cst_60 {dimension_numbers = #tpu.dot_dimension_numbers<[1], [0], [0], [1], [0, 0, 1, 1], [], []>} : vector<8x128xbf16>, vector<128x512xbf16>, vector<8x512xf32> -> vector<8x512xf32>
    %271 = arith.addf %270, %269 : vector<8x512xf32>
    %272 = vector.broadcast %5 : vector<1x512xf32> to vector<8x512xf32>
    %273 = arith.addf %271, %272 : vector<8x512xf32>
    %274 = arith.mulf %273, %21 : vector<8x512xf32>
    %275 = math.tanh %274 : vector<8x512xf32>
    %276 = arith.mulf %275, %21 : vector<8x512xf32>
    %277 = arith.addf %276, %24 : vector<8x512xf32>
    %278 = vector.extract_strided_slice %277 {offsets = [0, 0], sizes = [8, 128], strides = [1, 1]} : vector<8x512xf32> to vector<8x128xf32>
    %279 = vector.extract_strided_slice %277 {offsets = [0, 128], sizes = [8, 128], strides = [1, 1]} : vector<8x512xf32> to vector<8x128xf32>
    %280 = vector.extract_strided_slice %277 {offsets = [0, 256], sizes = [8, 128], strides = [1, 1]} : vector<8x512xf32> to vector<8x128xf32>
    %281 = vector.extract_strided_slice %277 {offsets = [0, 384], sizes = [8, 128], strides = [1, 1]} : vector<8x512xf32> to vector<8x128xf32>
    %282 = arith.mulf %279, %247 : vector<8x128xf32>
    %283 = arith.mulf %278, %280 : vector<8x128xf32>
    %284 = arith.addf %282, %283 : vector<8x128xf32>
    %285 = math.tanh %284 : vector<8x128xf32>
    %286 = arith.mulf %281, %285 : vector<8x128xf32>
    %287 = arith.truncf %286 : vector<8x128xf32> to vector<8x128xbf16>
    %cst_61 = arith.constant dense<0.000000e+00> : vector<8x512xf32>
    %288 = tpu.matmul %268, %2, %cst_61 {dimension_numbers = #tpu.dot_dimension_numbers<[1], [0], [0], [1], [0, 0, 1, 1], [], []>} : vector<8x128xbf16>, vector<128x512xbf16>, vector<8x512xf32> -> vector<8x512xf32>
    %c7 = arith.constant 7 : index
    %c0_62 = arith.constant 0 : index
    %c0_63 = arith.constant 0 : index
    %289 = vector.load %arg10[%c7, %c0_62, %c0_63] : memref<8x8x512xf32, #tpu.memory_space<vmem>>, vector<1x8x512xf32>
    %290 = vector.shape_cast %289 : vector<1x8x512xf32> to vector<8x512xf32>
    %291 = arith.addf %290, %288 : vector<8x512xf32>
    %292 = arith.mulf %291, %21 : vector<8x512xf32>
    %293 = math.tanh %292 : vector<8x512xf32>
    %294 = arith.mulf %293, %21 : vector<8x512xf32>
    %295 = arith.addf %294, %24 : vector<8x512xf32>
    %296 = vector.extract_strided_slice %295 {offsets = [0, 0], sizes = [8, 128], strides = [1, 1]} : vector<8x512xf32> to vector<8x128xf32>
    %297 = vector.extract_strided_slice %295 {offsets = [0, 128], sizes = [8, 128], strides = [1, 1]} : vector<8x512xf32> to vector<8x128xf32>
    %298 = vector.extract_strided_slice %295 {offsets = [0, 256], sizes = [8, 128], strides = [1, 1]} : vector<8x512xf32> to vector<8x128xf32>
    %299 = vector.extract_strided_slice %295 {offsets = [0, 384], sizes = [8, 128], strides = [1, 1]} : vector<8x512xf32> to vector<8x128xf32>
    %300 = arith.mulf %297, %265 : vector<8x128xf32>
    %301 = arith.mulf %296, %298 : vector<8x128xf32>
    %302 = arith.addf %300, %301 : vector<8x128xf32>
    %303 = math.tanh %302 : vector<8x128xf32>
    %304 = arith.mulf %299, %303 : vector<8x128xf32>
    %305 = arith.truncf %304 : vector<8x128xf32> to vector<8x128xbf16>
    %cst_64 = arith.constant dense<0.000000e+00> : vector<8x512xf32>
    %306 = tpu.matmul %287, %3, %cst_64 {dimension_numbers = #tpu.dot_dimension_numbers<[1], [0], [0], [1], [0, 0, 1, 1], [], []>} : vector<8x128xbf16>, vector<128x512xbf16>, vector<8x512xf32> -> vector<8x512xf32>
    %cst_65 = arith.constant dense<0.000000e+00> : vector<8x512xf32>
    %307 = tpu.matmul %305, %1, %cst_65 {dimension_numbers = #tpu.dot_dimension_numbers<[1], [0], [0], [1], [0, 0, 1, 1], [], []>} : vector<8x128xbf16>, vector<128x512xbf16>, vector<8x512xf32> -> vector<8x512xf32>
    %308 = arith.addf %307, %306 : vector<8x512xf32>
    %309 = vector.broadcast %5 : vector<1x512xf32> to vector<8x512xf32>
    %310 = arith.addf %308, %309 : vector<8x512xf32>
    %311 = arith.mulf %310, %21 : vector<8x512xf32>
    %312 = math.tanh %311 : vector<8x512xf32>
    %313 = arith.mulf %312, %21 : vector<8x512xf32>
    %314 = arith.addf %313, %24 : vector<8x512xf32>
    %315 = vector.extract_strided_slice %314 {offsets = [0, 0], sizes = [8, 128], strides = [1, 1]} : vector<8x512xf32> to vector<8x128xf32>
    %316 = vector.extract_strided_slice %314 {offsets = [0, 128], sizes = [8, 128], strides = [1, 1]} : vector<8x512xf32> to vector<8x128xf32>
    %317 = vector.extract_strided_slice %314 {offsets = [0, 256], sizes = [8, 128], strides = [1, 1]} : vector<8x512xf32> to vector<8x128xf32>
    %318 = vector.extract_strided_slice %314 {offsets = [0, 384], sizes = [8, 128], strides = [1, 1]} : vector<8x512xf32> to vector<8x128xf32>
    %319 = arith.mulf %316, %284 : vector<8x128xf32>
    %320 = arith.mulf %315, %317 : vector<8x128xf32>
    %321 = arith.addf %319, %320 : vector<8x128xf32>
    %322 = math.tanh %321 : vector<8x128xf32>
    %323 = arith.mulf %318, %322 : vector<8x128xf32>
    %324 = arith.truncf %323 : vector<8x128xf32> to vector<8x128xbf16>
    %c0_66 = arith.constant 0 : index
    %c0_67 = arith.constant 0 : index
    %325 = vector.load %arg7[%c0_66, %c0_67] : memref<128x128xbf16, #tpu.memory_space<vmem>>, vector<128x128xbf16>
    %cst_68 = arith.constant dense<0.000000e+00> : vector<8x128xf32>
    %326 = tpu.matmul %324, %325, %cst_68 {dimension_numbers = #tpu.dot_dimension_numbers<[1], [0], [0], [1], [0, 0, 1, 1], [], []>} : vector<8x128xbf16>, vector<128x128xbf16>, vector<8x128xf32> -> vector<8x128xf32>
    %c0_69 = arith.constant 0 : index
    %c0_70 = arith.constant 0 : index
    %327 = vector.load %arg8[%c0_69, %c0_70] : memref<1x128xf32, #tpu.memory_space<vmem>>, vector<1x128xf32>
    %328 = vector.broadcast %327 : vector<1x128xf32> to vector<8x128xf32>
    %329 = arith.addf %326, %328 : vector<8x128xf32>
    %cst_71 = arith.constant dense<0xFF800000> : vector<8xf32>
    %330 = vector.multi_reduction <maximumf>, %329, %cst_71 [1] : vector<8x128xf32> to vector<8xf32>
    %331 = vector.shape_cast %330 : vector<8xf32> to vector<8x1xf32>
    %332 = vector.broadcast %331 : vector<8x1xf32> to vector<8x128xf32>
    %333 = arith.subf %329, %332 : vector<8x128xf32>
    %334 = math.exp %333 : vector<8x128xf32>
    %cst_72 = arith.constant dense<0.000000e+00> : vector<8xf32>
    %335 = vector.multi_reduction <add>, %334, %cst_72 [1] : vector<8x128xf32> to vector<8xf32>
    %336 = vector.shape_cast %335 : vector<8xf32> to vector<8x1xf32>
    %337 = tpu.reciprocal %336 {approx = true} : vector<8x1xf32> -> vector<8x1xf32>
    %338 = vector.broadcast %337 : vector<8x1xf32> to vector<8x128xf32>
    %339 = arith.mulf %334, %338 : vector<8x128xf32>
    %c0_73 = arith.constant 0 : index
    %c0_74 = arith.constant 0 : index
    %340 = vector.load %arg9[%c0_73, %c0_74] : memref<8x128xf32, #tpu.memory_space<vmem>>, vector<8x128xf32>
    tpu.vector_store %arg9[%c0_73, %c0_74], %339 {strides = array<i32>} : memref<8x128xf32, #tpu.memory_space<vmem>>, vector<8x128xf32>,
    return
  }
}

</mosaic_0001>

<llo_original>
// kernel: _lambda_.1
$region0: #{_lambda_.1}
  #allocation0 [shape = 'u32[]', space=smem, size = 0x4, offset = 0x4, fixed_abs, tag = 'smem constant byte address 0x4 - core index']
  #allocation1 [shape = 'u32[144,128]{1,0:T(1,128)}', space=vmem, size = 0x12000, scoped, tag = 'internal scratch']
  #allocation2 [shape = 'f32[8,8,512]{2,1,0:T(8,128)}', space=vmem, size = 0x20000, scoped, tag = 'scratch operand']
  %s0 = inlined_call_operand.vmem [shape: bf16[8,8,128], index: 0, kind: input, shape index: {}]
  %s1 = inlined_call_operand.vmem [shape: bf16[128,512], index: 1, kind: input, shape index: {}]
  %s2 = inlined_call_operand.vmem [shape: bf16[128,512], index: 2, kind: input, shape index: {}]
  %s3 = inlined_call_operand.vmem [shape: f32[1,512], index: 3, kind: input, shape index: {}]
  %s4 = inlined_call_operand.vmem [shape: bf16[128,512], index: 4, kind: input, shape index: {}]
  %s5 = inlined_call_operand.vmem [shape: bf16[128,512], index: 5, kind: input, shape index: {}]
  %s6 = inlined_call_operand.vmem [shape: f32[1,512], index: 6, kind: input, shape index: {}]
  %s7 = inlined_call_operand.vmem [shape: bf16[128,128], index: 7, kind: input, shape index: {}]
  %s8 = inlined_call_operand.vmem [shape: f32[1,128], index: 8, kind: input, shape index: {}]
  %s9 = inlined_call_operand.vmem [shape: f32[8,128], index: 9, kind: output, shape index: {}]
  %s10 = sld [smem:[#allocation0]]
  $region46: #{_lambda_.1} parent=0
    _
  %s12 = ssub.s32 1, %s10
  %s13 = scalar_select 0, %s12, %s10
  // Predicated region
  $region2: #{_lambda_.1} parent=0 // pred_check
    _
  $region3: #{_lambda_.1} parent=0 // pred_check_branch
    %15 = sbr.rel (0) target = $region5
  $region4: #{_lambda_.1} parent=0 // pred_region
    _
  $region5: #{_lambda_.1} parent=0 // pred_fallthru
    _
  // Predicated region
  $region6: #{_lambda_.1} parent=0 // pred_check
    _
  $region7: #{_lambda_.1} parent=0 // pred_check_branch
    %17 = sbr.rel (0) target = $region9
  $region8: #{_lambda_.1} parent=0 // pred_region
    _
  $region9: #{_lambda_.1} parent=0 // pred_fallthru
    _
  // Predicated region
  $region10: #{_lambda_.1} parent=0 // pred_check
    _
  $region11: #{_lambda_.1} parent=0 // pred_check_branch
    %19 = sbr.rel (0) target = $region13
  $region12: #{_lambda_.1} parent=0 // pred_region
    _
  $region13: #{_lambda_.1} parent=0 // pred_fallthru
    _
  // Predicated region
  $region14: #{_lambda_.1} parent=0 // pred_check
    _
  $region15: #{_lambda_.1} parent=0 // pred_check_branch
    %21 = sbr.rel (0) target = $region17
  $region16: #{_lambda_.1} parent=0 // pred_region
    _
  $region17: #{_lambda_.1} parent=0 // pred_fallthru
    _
  // Predicated region
  $region18: #{_lambda_.1} parent=0 // pred_check
    _
  $region19: #{_lambda_.1} parent=0 // pred_check_branch
    %23 = sbr.rel (0) target = $region21
  $region20: #{_lambda_.1} parent=0 // pred_region
    _
  $region21: #{_lambda_.1} parent=0 // pred_fallthru
    _
  // Predicated region
  $region22: #{_lambda_.1} parent=0 // pred_check
    _
  $region23: #{_lambda_.1} parent=0 // pred_check_branch
    %25 = sbr.rel (0) target = $region25
  $region24: #{_lambda_.1} parent=0 // pred_region
    _
  $region25: #{_lambda_.1} parent=0 // pred_fallthru
    _
  // Predicated region
  $region26: #{_lambda_.1} parent=0 // pred_check
    _
  $region27: #{_lambda_.1} parent=0 // pred_check_branch
    %27 = sbr.rel (0) target = $region29
  $region28: #{_lambda_.1} parent=0 // pred_region
    _
  $region29: #{_lambda_.1} parent=0 // pred_fallthru
    _
  // Predicated region
  $region30: #{_lambda_.1} parent=0 // pred_check
    _
  $region31: #{_lambda_.1} parent=0 // pred_check_branch
    %29 = sbr.rel (0) target = $region33
  $region32: #{_lambda_.1} parent=0 // pred_region
    _
  $region33: #{_lambda_.1} parent=0 // pred_fallthru
    _
  // Predicated region
  $region34: #{_lambda_.1} parent=0 // pred_check
    _
  $region35: #{_lambda_.1} parent=0 // pred_check_branch
    %31 = sbr.rel (0) target = $region37
  $region36: #{_lambda_.1} parent=0 // pred_region
    _
  $region37: #{_lambda_.1} parent=0 // pred_fallthru
    _
  %v33 = vld [vmem:[%s1] sm:$0xff]
  %v34 = vld [vmem:[%s1 + $0x8] sm:$0xff]
  %v35 = vld [vmem:[%s1 + $0x10] sm:$0xff]
  %v36 = vld [vmem:[%s1 + $0x18] sm:$0xff]
  %v37 = vld [vmem:[%s1 + $0x20] sm:$0xff]
  %v38 = vld [vmem:[%s1 + $0x28] sm:$0xff]
  %v39 = vld [vmem:[%s1 + $0x30] sm:$0xff]
  %v40 = vld [vmem:[%s1 + $0x38] sm:$0xff]
  %v41 = vld [vmem:[%s1 + $0x40] sm:$0xff]
  %v42 = vld [vmem:[%s1 + $0x48] sm:$0xff]
  %v43 = vld [vmem:[%s1 + $0x50] sm:$0xff]
  %v44 = vld [vmem:[%s1 + $0x58] sm:$0xff]
  %v45 = vld [vmem:[%s1 + $0x60] sm:$0xff]
  %v46 = vld [vmem:[%s1 + $0x68] sm:$0xff]
  %v47 = vld [vmem:[%s1 + $0x70] sm:$0xff]
  %v48 = vld [vmem:[%s1 + $0x78] sm:$0xff]
  %v49 = vld [vmem:[%s1 + $0x80] sm:$0xff]
  %v50 = vld [vmem:[%s1 + $0x88] sm:$0xff]
  %v51 = vld [vmem:[%s1 + $0x90] sm:$0xff]
  %v52 = vld [vmem:[%s1 + $0x98] sm:$0xff]
  %v53 = vld [vmem:[%s1 + $0xa0] sm:$0xff]
  %v54 = vld [vmem:[%s1 + $0xa8] sm:$0xff]
  %v55 = vld [vmem:[%s1 + $0xb0] sm:$0xff]
  %v56 = vld [vmem:[%s1 + $0xb8] sm:$0xff]
  %v57 = vld [vmem:[%s1 + $0xc0] sm:$0xff]
  %v58 = vld [vmem:[%s1 + $0xc8] sm:$0xff]
  %v59 = vld [vmem:[%s1 + $0xd0] sm:$0xff]
  %v60 = vld [vmem:[%s1 + $0xd8] sm:$0xff]
  %v61 = vld [vmem:[%s1 + $0xe0] sm:$0xff]
  %v62 = vld [vmem:[%s1 + $0xe8] sm:$0xff]
  %v63 = vld [vmem:[%s1 + $0xf0] sm:$0xff]
  %v64 = vld [vmem:[%s1 + $0xf8] sm:$0xff]
  %v65 = vld [vmem:[%s4] sm:$0xff]
  %v66 = vld [vmem:[%s4 + $0x8] sm:$0xff]
  %v67 = vld [vmem:[%s4 + $0x10] sm:$0xff]
  %v68 = vld [vmem:[%s4 + $0x18] sm:$0xff]
  %v69 = vld [vmem:[%s4 + $0x20] sm:$0xff]
  %v70 = vld [vmem:[%s4 + $0x28] sm:$0xff]
  %v71 = vld [vmem:[%s4 + $0x30] sm:$0xff]
  %v72 = vld [vmem:[%s4 + $0x38] sm:$0xff]
  %v73 = vld [vmem:[%s4 + $0x40] sm:$0xff]
  %v74 = vld [vmem:[%s4 + $0x48] sm:$0xff]
  %v75 = vld [vmem:[%s4 + $0x50] sm:$0xff]
  %v76 = vld [vmem:[%s4 + $0x58] sm:$0xff]
  %v77 = vld [vmem:[%s4 + $0x60] sm:$0xff]
  %v78 = vld [vmem:[%s4 + $0x68] sm:$0xff]
  %v79 = vld [vmem:[%s4 + $0x70] sm:$0xff]
  %v80 = vld [vmem:[%s4 + $0x78] sm:$0xff]
  %v81 = vld [vmem:[%s4 + $0x80] sm:$0xff]
  %v82 = vld [vmem:[%s4 + $0x88] sm:$0xff]
  %v83 = vld [vmem:[%s4 + $0x90] sm:$0xff]
  %v84 = vld [vmem:[%s4 + $0x98] sm:$0xff]
  %v85 = vld [vmem:[%s4 + $0xa0] sm:$0xff]
  %v86 = vld [vmem:[%s4 + $0xa8] sm:$0xff]
  %v87 = vld [vmem:[%s4 + $0xb0] sm:$0xff]
  %v88 = vld [vmem:[%s4 + $0xb8] sm:$0xff]
  %v89 = vld [vmem:[%s4 + $0xc0] sm:$0xff]
  %v90 = vld [vmem:[%s4 + $0xc8] sm:$0xff]
  %v91 = vld [vmem:[%s4 + $0xd0] sm:$0xff]
  %v92 = vld [vmem:[%s4 + $0xd8] sm:$0xff]
  %v93 = vld [vmem:[%s4 + $0xe0] sm:$0xff]
  %v94 = vld [vmem:[%s4 + $0xe8] sm:$0xff]
  %v95 = vld [vmem:[%s4 + $0xf0] sm:$0xff]
  %v96 = vld [vmem:[%s4 + $0xf8] sm:$0xff]
  %v97 = vld [vmem:[%s2] sm:$0xff]
  %v98 = vld [vmem:[%s2 + $0x8] sm:$0xff]
  %v99 = vld [vmem:[%s2 + $0x10] sm:$0xff]
  %v100 = vld [vmem:[%s2 + $0x18] sm:$0xff]
  %v101 = vld [vmem:[%s2 + $0x20] sm:$0xff]
  %v102 = vld [vmem:[%s2 + $0x28] sm:$0xff]
  %v103 = vld [vmem:[%s2 + $0x30] sm:$0xff]
  %v104 = vld [vmem:[%s2 + $0x38] sm:$0xff]
  %v105 = vld [vmem:[%s2 + $0x40] sm:$0xff]
  %v106 = vld [vmem:[%s2 + $0x48] sm:$0xff]
  %v107 = vld [vmem:[%s2 + $0x50] sm:$0xff]
  %v108 = vld [vmem:[%s2 + $0x58] sm:$0xff]
  %v109 = vld [vmem:[%s2 + $0x60] sm:$0xff]
  %v110 = vld [vmem:[%s2 + $0x68] sm:$0xff]
  %v111 = vld [vmem:[%s2 + $0x70] sm:$0xff]
  %v112 = vld [vmem:[%s2 + $0x78] sm:$0xff]
  %v113 = vld [vmem:[%s2 + $0x80] sm:$0xff]
  %v114 = vld [vmem:[%s2 + $0x88] sm:$0xff]
  %v115 = vld [vmem:[%s2 + $0x90] sm:$0xff]
  %v116 = vld [vmem:[%s2 + $0x98] sm:$0xff]
  %v117 = vld [vmem:[%s2 + $0xa0] sm:$0xff]
  %v118 = vld [vmem:[%s2 + $0xa8] sm:$0xff]
  %v119 = vld [vmem:[%s2 + $0xb0] sm:$0xff]
  %v120 = vld [vmem:[%s2 + $0xb8] sm:$0xff]
  %v121 = vld [vmem:[%s2 + $0xc0] sm:$0xff]
  %v122 = vld [vmem:[%s2 + $0xc8] sm:$0xff]
  %v123 = vld [vmem:[%s2 + $0xd0] sm:$0xff]
  %v124 = vld [vmem:[%s2 + $0xd8] sm:$0xff]
  %v125 = vld [vmem:[%s2 + $0xe0] sm:$0xff]
  %v126 = vld [vmem:[%s2 + $0xe8] sm:$0xff]
  %v127 = vld [vmem:[%s2 + $0xf0] sm:$0xff]
  %v128 = vld [vmem:[%s2 + $0xf8] sm:$0xff]
  %v129 = vld [vmem:[%s5] sm:$0xff]
  %v130 = vld [vmem:[%s5 + $0x8] sm:$0xff]
  %v131 = vld [vmem:[%s5 + $0x10] sm:$0xff]
  %v132 = vld [vmem:[%s5 + $0x18] sm:$0xff]
  %v133 = vld [vmem:[%s5 + $0x20] sm:$0xff]
  %v134 = vld [vmem:[%s5 + $0x28] sm:$0xff]
  %v135 = vld [vmem:[%s5 + $0x30] sm:$0xff]
  %v136 = vld [vmem:[%s5 + $0x38] sm:$0xff]
  %v137 = vld [vmem:[%s5 + $0x40] sm:$0xff]
  %v138 = vld [vmem:[%s5 + $0x48] sm:$0xff]
  %v139 = vld [vmem:[%s5 + $0x50] sm:$0xff]
  %v140 = vld [vmem:[%s5 + $0x58] sm:$0xff]
  %v141 = vld [vmem:[%s5 + $0x60] sm:$0xff]
  %v142 = vld [vmem:[%s5 + $0x68] sm:$0xff]
  %v143 = vld [vmem:[%s5 + $0x70] sm:$0xff]
  %v144 = vld [vmem:[%s5 + $0x78] sm:$0xff]
  %v145 = vld [vmem:[%s5 + $0x80] sm:$0xff]
  %v146 = vld [vmem:[%s5 + $0x88] sm:$0xff]
  %v147 = vld [vmem:[%s5 + $0x90] sm:$0xff]
  %v148 = vld [vmem:[%s5 + $0x98] sm:$0xff]
  %v149 = vld [vmem:[%s5 + $0xa0] sm:$0xff]
  %v150 = vld [vmem:[%s5 + $0xa8] sm:$0xff]
  %v151 = vld [vmem:[%s5 + $0xb0] sm:$0xff]
  %v152 = vld [vmem:[%s5 + $0xb8] sm:$0xff]
  %v153 = vld [vmem:[%s5 + $0xc0] sm:$0xff]
  %v154 = vld [vmem:[%s5 + $0xc8] sm:$0xff]
  %v155 = vld [vmem:[%s5 + $0xd0] sm:$0xff]
  %v156 = vld [vmem:[%s5 + $0xd8] sm:$0xff]
  %v157 = vld [vmem:[%s5 + $0xe0] sm:$0xff]
  %v158 = vld [vmem:[%s5 + $0xe8] sm:$0xff]
  %v159 = vld [vmem:[%s5 + $0xf0] sm:$0xff]
  %v160 = vld [vmem:[%s5 + $0xf8] sm:$0xff]
  %v161 = vld [vmem:[%s3] sm:$0xf]
  %v162 = vld [vmem:[%s6] sm:$0xf]
  %v163 = vld [vmem:[%s0] sm:$0xf]
  %v164 = vld [vmem:[%s0 + $0x4] sm:$0xf]
  %v165 = vld [vmem:[%s0 + $0x8] sm:$0xf]
  %v166 = vld [vmem:[%s0 + $0xc] sm:$0xf]
  %v167 = vld [vmem:[%s0 + $0x10] sm:$0xf]
  %v168 = vld [vmem:[%s0 + $0x14] sm:$0xf]
  %v169 = vld [vmem:[%s0 + $0x18] sm:$0xf]
  %v170 = vld [vmem:[%s0 + $0x1c] sm:$0xf]
  %v172 = vlaneseq
  %v173 = vshrl.u32 %v172, 7
  %v174 = vsub.s32 0, %v173
  %v175 = vrot.slane %v161, %v174
  %v176 = vlaneseq
  %v177 = vshrl.u32 %v176, 7
  %v178 = vsub.s32 1, %v177
  %v179 = vrot.slane %v161, %v178
  %v180 = vlaneseq
  %v181 = vshrl.u32 %v180, 7
  %v182 = vsub.s32 2, %v181
  %v183 = vrot.slane %v161, %v182
  %v184 = vlaneseq
  %v185 = vshrl.u32 %v184, 7
  %v186 = vsub.s32 3, %v185
  %v187 = vrot.slane %v161, %v186
  %v200 = vunpack.c.l.b16 %v163
  %v201 = vunpack.c.l.b16 %v164
  %v202 = vunpack.c.l.b16 %v165
  %v203 = vunpack.c.l.b16 %v166
  %v204 = vunpack.c.l.b16 %v167
  %v205 = vunpack.c.l.b16 %v168
  %v206 = vunpack.c.l.b16 %v169
  %v207 = vunpack.c.l.b16 %v170
  %v208 = vpack.c.b16 %v201, %v200
  %v209 = vpack.c.b16 %v203, %v202
  %v210 = vpack.c.b16 %v205, %v204
  %v211 = vpack.c.b16 %v207, %v206
  %v248 = vunpack.c.l.b16 %v33
  %v249 = vunpack.c.h.b16 %v33
  %v250 = vunpack.c.l.b16 %v34
  %v251 = vunpack.c.h.b16 %v34
  %v252 = vunpack.c.l.b16 %v35
  %v253 = vunpack.c.h.b16 %v35
  %v254 = vunpack.c.l.b16 %v36
  %v255 = vunpack.c.h.b16 %v36
  %v256 = vunpack.c.l.b16 %v37
  %v257 = vunpack.c.h.b16 %v37
  %v258 = vunpack.c.l.b16 %v38
  %v259 = vunpack.c.h.b16 %v38
  %v260 = vunpack.c.l.b16 %v39
  %v261 = vunpack.c.h.b16 %v39
  %v262 = vunpack.c.l.b16 %v40
  %v263 = vunpack.c.h.b16 %v40
  %v264 = vunpack.c.l.b16 %v41
  %v265 = vunpack.c.h.b16 %v41
  %v266 = vunpack.c.l.b16 %v42
  %v267 = vunpack.c.h.b16 %v42
  %v268 = vunpack.c.l.b16 %v43
  %v269 = vunpack.c.h.b16 %v43
  %v270 = vunpack.c.l.b16 %v44
  %v271 = vunpack.c.h.b16 %v44
  %v272 = vunpack.c.l.b16 %v45
  %v273 = vunpack.c.h.b16 %v45
  %v274 = vunpack.c.l.b16 %v46
  %v275 = vunpack.c.h.b16 %v46
  %v276 = vunpack.c.l.b16 %v47
  %v277 = vunpack.c.h.b16 %v47
  %v278 = vunpack.c.l.b16 %v48
  %v279 = vunpack.c.h.b16 %v48
  %v280 = vunpack.c.l.b16 %v49
  %v281 = vunpack.c.h.b16 %v49
  %v282 = vunpack.c.l.b16 %v50
  %v283 = vunpack.c.h.b16 %v50
  %v284 = vunpack.c.l.b16 %v51
  %v285 = vunpack.c.h.b16 %v51
  %v286 = vunpack.c.l.b16 %v52
  %v287 = vunpack.c.h.b16 %v52
  %v288 = vunpack.c.l.b16 %v53
  %v289 = vunpack.c.h.b16 %v53
  %v290 = vunpack.c.l.b16 %v54
  %v291 = vunpack.c.h.b16 %v54
  %v292 = vunpack.c.l.b16 %v55
  %v293 = vunpack.c.h.b16 %v55
  %v294 = vunpack.c.l.b16 %v56
  %v295 = vunpack.c.h.b16 %v56
  %v296 = vunpack.c.l.b16 %v57
  %v297 = vunpack.c.h.b16 %v57
  %v298 = vunpack.c.l.b16 %v58
  %v299 = vunpack.c.h.b16 %v58
  %v300 = vunpack.c.l.b16 %v59
  %v301 = vunpack.c.h.b16 %v59
  %v302 = vunpack.c.l.b16 %v60
  %v303 = vunpack.c.h.b16 %v60
  %v304 = vunpack.c.l.b16 %v61
  %v305 = vunpack.c.h.b16 %v61
  %v306 = vunpack.c.l.b16 %v62
  %v307 = vunpack.c.h.b16 %v62
  %v308 = vunpack.c.l.b16 %v63
  %v309 = vunpack.c.h.b16 %v63
  %v310 = vunpack.c.l.b16 %v64
  %v311 = vunpack.c.h.b16 %v64
  %v312 = vpack.c.b16 %v252, %v248
  %v313 = vpack.c.b16 %v253, %v249
  %v314 = vpack.c.b16 %v254, %v250
  %v315 = vpack.c.b16 %v255, %v251
  %v316 = vpack.c.b16 %v260, %v256
  %v317 = vpack.c.b16 %v261, %v257
  %v318 = vpack.c.b16 %v262, %v258
  %v319 = vpack.c.b16 %v263, %v259
  %v320 = vpack.c.b16 %v268, %v264
  %v321 = vpack.c.b16 %v269, %v265
  %v322 = vpack.c.b16 %v270, %v266
  %v323 = vpack.c.b16 %v271, %v267
  %v324 = vpack.c.b16 %v276, %v272
  %v325 = vpack.c.b16 %v277, %v273
  %v326 = vpack.c.b16 %v278, %v274
  %v327 = vpack.c.b16 %v279, %v275
  %v328 = vpack.c.b16 %v284, %v280
  %v329 = vpack.c.b16 %v285, %v281
  %v330 = vpack.c.b16 %v286, %v282
  %v331 = vpack.c.b16 %v287, %v283
  %v332 = vpack.c.b16 %v292, %v288
  %v333 = vpack.c.b16 %v293, %v289
  %v334 = vpack.c.b16 %v294, %v290
  %v335 = vpack.c.b16 %v295, %v291
  %v336 = vpack.c.b16 %v300, %v296
  %v337 = vpack.c.b16 %v301, %v297
  %v338 = vpack.c.b16 %v302, %v298
  %v339 = vpack.c.b16 %v303, %v299
  %v340 = vpack.c.b16 %v308, %v304
  %v341 = vpack.c.b16 %v309, %v305
  %v342 = vpack.c.b16 %v310, %v306
  %v343 = vpack.c.b16 %v311, %v307
  %376 = vmatprep.subr.bf16.mxu0 %v313
  %377 = vmatpush1.bf16.msra.mxu0 %v312
  %378 = vmatprep.subr.bf16.mxu0 %v317
  %379 = vmatpush1.bf16.msra.mxu0 %v316
  %380 = vmatprep.subr.bf16.mxu0 %v321
  %381 = vmatpush1.bf16.msra.mxu0 %v320
  %382 = vmatprep.subr.bf16.mxu0 %v325
  %383 = vmatpush1.bf16.msra.mxu0 %v324
  %384 = vmatprep.subr.bf16.mxu0 %v329
  %385 = vmatpush1.bf16.msra.mxu0 %v328
  %386 = vmatprep.subr.bf16.mxu0 %v333
  %387 = vmatpush1.bf16.msra.mxu0 %v332
  %388 = vmatprep.subr.bf16.mxu0 %v337
  %389 = vmatpush1.bf16.msra.mxu0 %v336
  %390 = vmatprep.subr.bf16.mxu0 %v341
  %391 = vmatpush1.bf16.msra.mxu0 %v340
  %392 = vmatprep.subr.bf16.mxu0 0
  %393 = vmatpush1.bf16.msra.mxu0 0
  %394 = vmatprep.subr.bf16.mxu0 0
  %395 = vmatpush1.bf16.msra.mxu0 0
  %396 = vmatprep.subr.bf16.mxu0 0
  %397 = vmatpush1.bf16.msra.mxu0 0
  %398 = vmatprep.subr.bf16.mxu0 0
  %399 = vmatpush1.bf16.msra.mxu0 0
  %400 = vmatprep.subr.bf16.mxu0 0
  %401 = vmatpush1.bf16.msra.mxu0 0
  %402 = vmatprep.subr.bf16.mxu0 0
  %403 = vmatpush1.bf16.msra.mxu0 0
  %404 = vmatprep.subr.bf16.mxu0 0
  %405 = vmatpush1.bf16.msra.mxu0 0
  %406 = vmatprep.subr.bf16.mxu0 0
  %407 = vmatpush1.bf16.msra.mxu0 0
  %408 = vmatprep.mubr.bf16.mxu0 0
  %409 = vmatmul.mubr.bf16.gmra.mrb[0].mxu0 %v208
  %v410 = vpop.f32.mrb[0].mxu0
  %v411 = vadd.f32 %v175, %v410
  %v412 = vpop.f32.mrb[0].mxu0
  %v413 = vadd.f32 %v179, %v412
  %v414 = vpop.f32.mrb[0].mxu0
  %v415 = vadd.f32 %v175, %v414
  %v416 = vpop.f32.mrb[0].mxu0
  %v417 = vadd.f32 %v179, %v416
  %418 = vmatprep.mubr.bf16.mxu0 0
  %419 = vmatmul.mubr.bf16.gmra.mrb[0].mxu0 %v209
  %v420 = vpop.f32.mrb[0].mxu0
  %v421 = vadd.f32 %v175, %v420
  %v422 = vpop.f32.mrb[0].mxu0
  %v423 = vadd.f32 %v179, %v422
  %v424 = vpop.f32.mrb[0].mxu0
  %v425 = vadd.f32 %v175, %v424
  %v426 = vpop.f32.mrb[0].mxu0
  %v427 = vadd.f32 %v179, %v426
  %428 = vmatprep.mubr.bf16.mxu0 0
  %429 = vmatmul.mubr.bf16.gmra.mrb[0].mxu0 %v210
  %v430 = vpop.f32.mrb[0].mxu0
  %v431 = vadd.f32 %v175, %v430
  %v432 = vpop.f32.mrb[0].mxu0
  %v433 = vadd.f32 %v179, %v432
  %v434 = vpop.f32.mrb[0].mxu0
  %v435 = vadd.f32 %v175, %v434
  %v436 = vpop.f32.mrb[0].mxu0
  %v437 = vadd.f32 %v179, %v436
  %438 = vmatprep.mubr.bf16.mxu0 0
  %439 = vmatmul.mubr.bf16.gmra.mrb[0].mxu0 %v211
  %v440 = vpop.f32.mrb[0].mxu0
  %v441 = vadd.f32 %v175, %v440
  %v442 = vpop.f32.mrb[0].mxu0
  %v443 = vadd.f32 %v179, %v442
  %v444 = vpop.f32.mrb[0].mxu0
  %v445 = vadd.f32 %v175, %v444
  %v446 = vpop.f32.mrb[0].mxu0
  %v447 = vadd.f32 %v179, %v446
  %448 = vdwg.mxu0
  %449 = vmatprep.subr.bf16.mxu0 %v315
  %450 = vmatpush1.bf16.msra.mxu0 %v314
  %451 = vmatprep.subr.bf16.mxu0 %v319
  %452 = vmatpush1.bf16.msra.mxu0 %v318
  %453 = vmatprep.subr.bf16.mxu0 %v323
  %454 = vmatpush1.bf16.msra.mxu0 %v322
  %455 = vmatprep.subr.bf16.mxu0 %v327
  %456 = vmatpush1.bf16.msra.mxu0 %v326
  %457 = vmatprep.subr.bf16.mxu0 %v331
  %458 = vmatpush1.bf16.msra.mxu0 %v330
  %459 = vmatprep.subr.bf16.mxu0 %v335
  %460 = vmatpush1.bf16.msra.mxu0 %v334
  %461 = vmatprep.subr.bf16.mxu0 %v339
  %462 = vmatpush1.bf16.msra.mxu0 %v338
  %463 = vmatprep.subr.bf16.mxu0 %v343
  %464 = vmatpush1.bf16.msra.mxu0 %v342
  %465 = vmatprep.subr.bf16.mxu0 0
  %466 = vmatpush1.bf16.msra.mxu0 0
  %467 = vmatprep.subr.bf16.mxu0 0
  %468 = vmatpush1.bf16.msra.mxu0 0
  %469 = vmatprep.subr.bf16.mxu0 0
  %470 = vmatpush1.bf16.msra.mxu0 0
  %471 = vmatprep.subr.bf16.mxu0 0
  %472 = vmatpush1.bf16.msra.mxu0 0
  %473 = vmatprep.subr.bf16.mxu0 0
  %474 = vmatpush1.bf16.msra.mxu0 0
  %475 = vmatprep.subr.bf16.mxu0 0
  %476 = vmatpush1.bf16.msra.mxu0 0
  %477 = vmatprep.subr.bf16.mxu0 0
  %478 = vmatpush1.bf16.msra.mxu0 0
  %479 = vmatprep.subr.bf16.mxu0 0
  %480 = vmatpush1.bf16.msra.mxu0 0
  %481 = vmatprep.mubr.bf16.mxu0 0
  %482 = vmatmul.mubr.bf16.gmra.mrb[0].mxu0 %v208
  %v483 = vpop.f32.mrb[0].mxu0
  %v484 = vadd.f32 %v183, %v483
  %v485 = vpop.f32.mrb[0].mxu0
  %v486 = vadd.f32 %v187, %v485
  %v487 = vpop.f32.mrb[0].mxu0
  %v488 = vadd.f32 %v183, %v487
  %v489 = vpop.f32.mrb[0].mxu0
  %v490 = vadd.f32 %v187, %v489
  %491 = vmatprep.mubr.bf16.mxu0 0
  %492 = vmatmul.mubr.bf16.gmra.mrb[0].mxu0 %v209
  %v493 = vpop.f32.mrb[0].mxu0
  %v494 = vadd.f32 %v183, %v493
  %v495 = vpop.f32.mrb[0].mxu0
  %v496 = vadd.f32 %v187, %v495
  %v497 = vpop.f32.mrb[0].mxu0
  %v498 = vadd.f32 %v183, %v497
  %v499 = vpop.f32.mrb[0].mxu0
  %v500 = vadd.f32 %v187, %v499
  %501 = vmatprep.mubr.bf16.mxu0 0
  %502 = vmatmul.mubr.bf16.gmra.mrb[0].mxu0 %v210
  %v503 = vpop.f32.mrb[0].mxu0
  %v504 = vadd.f32 %v183, %v503
  %v505 = vpop.f32.mrb[0].mxu0
  %v506 = vadd.f32 %v187, %v505
  %v507 = vpop.f32.mrb[0].mxu0
  %v508 = vadd.f32 %v183, %v507
  %v509 = vpop.f32.mrb[0].mxu0
  %v510 = vadd.f32 %v187, %v509
  %511 = vmatprep.mubr.bf16.mxu0 0
  %512 = vmatmul.mubr.bf16.gmra.mrb[0].mxu0 %v211
  %v513 = vpop.f32.mrb[0].mxu0
  %v514 = vadd.f32 %v183, %v513
  %v515 = vpop.f32.mrb[0].mxu0
  %v516 = vadd.f32 %v187, %v515
  %v517 = vpop.f32.mrb[0].mxu0
  %v518 = vadd.f32 %v183, %v517
  %v519 = vpop.f32.mrb[0].mxu0
  %v520 = vadd.f32 %v187, %v519
  %521 = vdwg.mxu0
  %522 = vst [vmem:[#allocation2] sm:$0xff] %v411
  %523 = vst [vmem:[#allocation2 + $0x8] sm:$0xff] %v413
  %524 = vst [vmem:[#allocation2 + $0x10] sm:$0xff] %v484
  %525 = vst [vmem:[#allocation2 + $0x18] sm:$0xff] %v486
  %526 = vst [vmem:[#allocation2 + $0x20] sm:$0xff] %v415
  %527 = vst [vmem:[#allocation2 + $0x28] sm:$0xff] %v417
  %528 = vst [vmem:[#allocation2 + $0x30] sm:$0xff] %v488
  %529 = vst [vmem:[#allocation2 + $0x38] sm:$0xff] %v490
  %530 = vst [vmem:[#allocation2 + $0x40] sm:$0xff] %v421
  %531 = vst [vmem:[#allocation2 + $0x48] sm:$0xff] %v423
  %532 = vst [vmem:[#allocation2 + $0x50] sm:$0xff] %v494
  %533 = vst [vmem:[#allocation2 + $0x58] sm:$0xff] %v496
  %534 = vst [vmem:[#allocation2 + $0x60] sm:$0xff] %v425
  %535 = vst [vmem:[#allocation2 + $0x68] sm:$0xff] %v427
  %536 = vst [vmem:[#allocation2 + $0x70] sm:$0xff] %v498
  %537 = vst [vmem:[#allocation2 + $0x78] sm:$0xff] %v500
  %538 = vst [vmem:[#allocation2 + $0x80] sm:$0xff] %v431
  %539 = vst [vmem:[#allocation2 + $0x88] sm:$0xff] %v433
  %540 = vst [vmem:[#allocation2 + $0x90] sm:$0xff] %v504
  %541 = vst [vmem:[#allocation2 + $0x98] sm:$0xff] %v506
  %542 = vst [vmem:[#allocation2 + $0xa0] sm:$0xff] %v435
  %543 = vst [vmem:[#allocation2 + $0xa8] sm:$0xff] %v437
  %544 = vst [vmem:[#allocation2 + $0xb0] sm:$0xff] %v508
  %545 = vst [vmem:[#allocation2 + $0xb8] sm:$0xff] %v510
  %546 = vst [vmem:[#allocation2 + $0xc0] sm:$0xff] %v441
  %547 = vst [vmem:[#allocation2 + $0xc8] sm:$0xff] %v443
  %548 = vst [vmem:[#allocation2 + $0xd0] sm:$0xff] %v514
  %549 = vst [vmem:[#allocation2 + $0xd8] sm:$0xff] %v516
  %550 = vst [vmem:[#allocation2 + $0xe0] sm:$0xff] %v445
  %551 = vst [vmem:[#allocation2 + $0xe8] sm:$0xff] %v447
  %552 = vst [vmem:[#allocation2 + $0xf0] sm:$0xff] %v518
  %553 = vst [vmem:[#allocation2 + $0xf8] sm:$0xff] %v520
  %v554 = vlaneseq
  %v555 = vand.u32 %v554, 127
  %v556 = vadd.s32 %v555, 128
  %v557 = vadd.s32 %v555, 256
  %v558 = vadd.s32 %v555, 384
  %vm559 = vcmp.ge.s32.totalorder %v555, 256
  %vm560 = vcmp.ge.s32.totalorder %v556, 256
  %vm561 = vcmp.ge.s32.totalorder %v557, 256
  %vm562 = vcmp.ge.s32.totalorder %v558, 256
  %vm563 = vcmp.lt.s32.totalorder %v555, 384
  %vm564 = vcmp.lt.s32.totalorder %v556, 384
  %vm565 = vcmp.lt.s32.totalorder %v557, 384
  %vm566 = vcmp.lt.s32.totalorder %v558, 384
  %vm567 = vmand %vm559, %vm563
  %vm568 = vmand %vm560, %vm564
  %vm569 = vmand %vm561, %vm565
  %vm570 = vmand %vm562, %vm566
  %v571 = vsel %vm567, 1.0, 0.5
  %v572 = vsel %vm568, 1.0, 0.5
  %v573 = vsel %vm569, 1.0, 0.5
  %v574 = vsel %vm570, 1.0, 0.5
  %v575 = vsel %vm567, 0.0, 0.5
  %v576 = vsel %vm568, 0.0, 0.5
  %v577 = vsel %vm569, 0.0, 0.5
  %v578 = vsel %vm570, 0.0, 0.5
  %v611 = vunpack.c.l.b16 %v97
  %v612 = vunpack.c.h.b16 %v97
  %v613 = vunpack.c.l.b16 %v98
  %v614 = vunpack.c.h.b16 %v98
  %v615 = vunpack.c.l.b16 %v99
  %v616 = vunpack.c.h.b16 %v99
  %v617 = vunpack.c.l.b16 %v100
  %v618 = vunpack.c.h.b16 %v100
  %v619 = vunpack.c.l.b16 %v101
  %v620 = vunpack.c.h.b16 %v101
  %v621 = vunpack.c.l.b16 %v102
  %v622 = vunpack.c.h.b16 %v102
  %v623 = vunpack.c.l.b16 %v103
  %v624 = vunpack.c.h.b16 %v103
  %v625 = vunpack.c.l.b16 %v104
  %v626 = vunpack.c.h.b16 %v104
  %v627 = vunpack.c.l.b16 %v105
  %v628 = vunpack.c.h.b16 %v105
  %v629 = vunpack.c.l.b16 %v106
  %v630 = vunpack.c.h.b16 %v106
  %v631 = vunpack.c.l.b16 %v107
  %v632 = vunpack.c.h.b16 %v107
  %v633 = vunpack.c.l.b16 %v108
  %v634 = vunpack.c.h.b16 %v108
  %v635 = vunpack.c.l.b16 %v109
  %v636 = vunpack.c.h.b16 %v109
  %v637 = vunpack.c.l.b16 %v110
  %v638 = vunpack.c.h.b16 %v110
  %v639 = vunpack.c.l.b16 %v111
  %v640 = vunpack.c.h.b16 %v111
  %v641 = vunpack.c.l.b16 %v112
  %v642 = vunpack.c.h.b16 %v112
  %v643 = vunpack.c.l.b16 %v113
  %v644 = vunpack.c.h.b16 %v113
  %v645 = vunpack.c.l.b16 %v114
  %v646 = vunpack.c.h.b16 %v114
  %v647 = vunpack.c.l.b16 %v115
  %v648 = vunpack.c.h.b16 %v115
  %v649 = vunpack.c.l.b16 %v116
  %v650 = vunpack.c.h.b16 %v116
  %v651 = vunpack.c.l.b16 %v117
  %v652 = vunpack.c.h.b16 %v117
  %v653 = vunpack.c.l.b16 %v118
  %v654 = vunpack.c.h.b16 %v118
  %v655 = vunpack.c.l.b16 %v119
  %v656 = vunpack.c.h.b16 %v119
  %v657 = vunpack.c.l.b16 %v120
  %v658 = vunpack.c.h.b16 %v120
  %v659 = vunpack.c.l.b16 %v121
  %v660 = vunpack.c.h.b16 %v121
  %v661 = vunpack.c.l.b16 %v122
  %v662 = vunpack.c.h.b16 %v122
  %v663 = vunpack.c.l.b16 %v123
  %v664 = vunpack.c.h.b16 %v123
  %v665 = vunpack.c.l.b16 %v124
  %v666 = vunpack.c.h.b16 %v124
  %v667 = vunpack.c.l.b16 %v125
  %v668 = vunpack.c.h.b16 %v125
  %v669 = vunpack.c.l.b16 %v126
  %v670 = vunpack.c.h.b16 %v126
  %v671 = vunpack.c.l.b16 %v127
  %v672 = vunpack.c.h.b16 %v127
  %v673 = vunpack.c.l.b16 %v128
  %v674 = vunpack.c.h.b16 %v128
  %v675 = vpack.c.b16 %v615, %v611
  %v676 = vpack.c.b16 %v616, %v612
  %v677 = vpack.c.b16 %v617, %v613
  %v678 = vpack.c.b16 %v618, %v614
  %v679 = vpack.c.b16 %v623, %v619
  %v680 = vpack.c.b16 %v624, %v620
  %v681 = vpack.c.b16 %v625, %v621
  %v682 = vpack.c.b16 %v626, %v622
  %v683 = vpack.c.b16 %v631, %v627
  %v684 = vpack.c.b16 %v632, %v628
  %v685 = vpack.c.b16 %v633, %v629
  %v686 = vpack.c.b16 %v634, %v630
  %v687 = vpack.c.b16 %v639, %v635
  %v688 = vpack.c.b16 %v640, %v636
  %v689 = vpack.c.b16 %v641, %v637
  %v690 = vpack.c.b16 %v642, %v638
  %v691 = vpack.c.b16 %v647, %v643
  %v692 = vpack.c.b16 %v648, %v644
  %v693 = vpack.c.b16 %v649, %v645
  %v694 = vpack.c.b16 %v650, %v646
  %v695 = vpack.c.b16 %v655, %v651
  %v696 = vpack.c.b16 %v656, %v652
  %v697 = vpack.c.b16 %v657, %v653
  %v698 = vpack.c.b16 %v658, %v654
  %v699 = vpack.c.b16 %v663, %v659
  %v700 = vpack.c.b16 %v664, %v660
  %v701 = vpack.c.b16 %v665, %v661
  %v702 = vpack.c.b16 %v666, %v662
  %v703 = vpack.c.b16 %v671, %v667
  %v704 = vpack.c.b16 %v672, %v668
  %v705 = vpack.c.b16 %v673, %v669
  %v706 = vpack.c.b16 %v674, %v670
  %739 = vmatprep.subr.bf16.mxu0 %v676
  %740 = vmatpush1.bf16.msra.mxu0 %v675
  %741 = vmatprep.subr.bf16.mxu0 %v680
  %742 = vmatpush1.bf16.msra.mxu0 %v679
  %743 = vmatprep.subr.bf16.mxu0 %v684
  %744 = vmatpush1.bf16.msra.mxu0 %v683
  %745 = vmatprep.subr.bf16.mxu0 %v688
  %746 = vmatpush1.bf16.msra.mxu0 %v687
  %747 = vmatprep.subr.bf16.mxu0 %v692
  %748 = vmatpush1.bf16.msra.mxu0 %v691
  %749 = vmatprep.subr.bf16.mxu0 %v696
  %750 = vmatpush1.bf16.msra.mxu0 %v695
  %751 = vmatprep.subr.bf16.mxu0 %v700
  %752 = vmatpush1.bf16.msra.mxu0 %v699
  %753 = vmatprep.subr.bf16.mxu0 %v704
  %754 = vmatpush1.bf16.msra.mxu0 %v703
  %755 = vmatprep.subr.bf16.mxu0 0
  %756 = vmatpush1.bf16.msra.mxu0 0
  %757 = vmatprep.subr.bf16.mxu0 0
  %758 = vmatpush1.bf16.msra.mxu0 0
  %759 = vmatprep.subr.bf16.mxu0 0
  %760 = vmatpush1.bf16.msra.mxu0 0
  %761 = vmatprep.subr.bf16.mxu0 0
  %762 = vmatpush1.bf16.msra.mxu0 0
  %763 = vmatprep.subr.bf16.mxu0 0
  %764 = vmatpush1.bf16.msra.mxu0 0
  %765 = vmatprep.subr.bf16.mxu0 0
  %766 = vmatpush1.bf16.msra.mxu0 0
  %767 = vmatprep.subr.bf16.mxu0 0
  %768 = vmatpush1.bf16.msra.mxu0 0
  %769 = vmatprep.subr.bf16.mxu0 0
  %770 = vmatpush1.bf16.msra.mxu0 0
  %771 = vmatprep.mubr.bf16.mxu0 0
  %772 = vmatmul.mubr.bf16.gmra.mrb[0].mxu0 0
  %v773 = vpop.f32.mrb[0].mxu0
  %v774 = vadd.f32 0.0, %v773
  %v775 = vpop.f32.mrb[0].mxu0
  %v776 = vadd.f32 0.0, %v775
  %v777 = vpop.f32.mrb[0].mxu0
  %v778 = vpop.f32.mrb[0].mxu0
  %779 = vdwg.mxu0
  %780 = vmatprep.subr.bf16.mxu0 %v678
  %781 = vmatpush1.bf16.msra.mxu0 %v677
  %782 = vmatprep.subr.bf16.mxu0 %v682
  %783 = vmatpush1.bf16.msra.mxu0 %v681
  %784 = vmatprep.subr.bf16.mxu0 %v686
  %785 = vmatpush1.bf16.msra.mxu0 %v685
  %786 = vmatprep.subr.bf16.mxu0 %v690
  %787 = vmatpush1.bf16.msra.mxu0 %v689
  %788 = vmatprep.subr.bf16.mxu0 %v694
  %789 = vmatpush1.bf16.msra.mxu0 %v693
  %790 = vmatprep.subr.bf16.mxu0 %v698
  %791 = vmatpush1.bf16.msra.mxu0 %v697
  %792 = vmatprep.subr.bf16.mxu0 %v702
  %793 = vmatpush1.bf16.msra.mxu0 %v701
  %794 = vmatprep.subr.bf16.mxu0 %v706
  %795 = vmatpush1.bf16.msra.mxu0 %v705
  %796 = vmatprep.subr.bf16.mxu0 0
  %797 = vmatpush1.bf16.msra.mxu0 0
  %798 = vmatprep.subr.bf16.mxu0 0
  %799 = vmatpush1.bf16.msra.mxu0 0
  %800 = vmatprep.subr.bf16.mxu0 0
  %801 = vmatpush1.bf16.msra.mxu0 0
  %802 = vmatprep.subr.bf16.mxu0 0
  %803 = vmatpush1.bf16.msra.mxu0 0
  %804 = vmatprep.subr.bf16.mxu0 0
  %805 = vmatpush1.bf16.msra.mxu0 0
  %806 = vmatprep.subr.bf16.mxu0 0
  %807 = vmatpush1.bf16.msra.mxu0 0
  %808 = vmatprep.subr.bf16.mxu0 0
  %809 = vmatpush1.bf16.msra.mxu0 0
  %810 = vmatprep.subr.bf16.mxu0 0
  %811 = vmatpush1.bf16.msra.mxu0 0
  %812 = vmatprep.mubr.bf16.mxu0 0
  %813 = vmatmul.mubr.bf16.gmra.mrb[0].mxu0 0
  %v814 = vpop.f32.mrb[0].mxu0
  %v815 = vadd.f32 0.0, %v814
  %v816 = vpop.f32.mrb[0].mxu0
  %v817 = vadd.f32 0.0, %v816
  %v818 = vpop.f32.mrb[0].mxu0
  %v819 = vpop.f32.mrb[0].mxu0
  %820 = vdwg.mxu0
  %v821 = vld [vmem:[#allocation2] sm:$0xff]
  %v822 = vld [vmem:[#allocation2 + $0x8] sm:$0xff]
  %v823 = vld [vmem:[#allocation2 + $0x10] sm:$0xff]
  %v824 = vld [vmem:[#allocation2 + $0x18] sm:$0xff]
  %v825 = vadd.f32 %v821, %v774
  %v826 = vadd.f32 %v822, %v776
  %v827 = vadd.f32 %v823, %v815
  %v828 = vadd.f32 %v824, %v817
  %v829 = vmul.f32 %v825, %v571
  %v830 = vmul.f32 %v826, %v572
  %v831 = vmul.f32 %v827, %v573
  %v832 = vmul.f32 %v828, %v574
  %v833 = vtanh.pop %v829
  %v834 = vtanh.pop %v830
  %v835 = vtanh.pop %v831
  %v836 = vtanh.pop %v832
  %v837 = vmul.f32 %v833, %v571
  %v838 = vmul.f32 %v834, %v572
  %v839 = vmul.f32 %v835, %v573
  %v840 = vmul.f32 %v836, %v574
  %v841 = vadd.f32 %v837, %v575
  %v842 = vadd.f32 %v838, %v576
  %v843 = vadd.f32 %v839, %v577
  %v844 = vadd.f32 %v840, %v578
  %v845 = vmul.f32 %v842, 0.0
  %v846 = vmul.f32 %v841, %v843
  %v847 = vadd.f32 %v845, %v846
  %v848 = vtanh.pop %v847
  %v849 = vmul.f32 %v844, %v848
  %v850 = vpack.c.bf16 %v849, %v849
  %v883 = vunpack.c.l.b16 %v129
  %v884 = vunpack.c.h.b16 %v129
  %v885 = vunpack.c.l.b16 %v130
  %v886 = vunpack.c.h.b16 %v130
  %v887 = vunpack.c.l.b16 %v131
  %v888 = vunpack.c.h.b16 %v131
  %v889 = vunpack.c.l.b16 %v132
  %v890 = vunpack.c.h.b16 %v132
  %v891 = vunpack.c.l.b16 %v133
  %v892 = vunpack.c.h.b16 %v133
  %v893 = vunpack.c.l.b16 %v134
  %v894 = vunpack.c.h.b16 %v134
  %v895 = vunpack.c.l.b16 %v135
  %v896 = vunpack.c.h.b16 %v135
  %v897 = vunpack.c.l.b16 %v136
  %v898 = vunpack.c.h.b16 %v136
  %v899 = vunpack.c.l.b16 %v137
  %v900 = vunpack.c.h.b16 %v137
  %v901 = vunpack.c.l.b16 %v138
  %v902 = vunpack.c.h.b16 %v138
  %v903 = vunpack.c.l.b16 %v139
  %v904 = vunpack.c.h.b16 %v139
  %v905 = vunpack.c.l.b16 %v140
  %v906 = vunpack.c.h.b16 %v140
  %v907 = vunpack.c.l.b16 %v141
  %v908 = vunpack.c.h.b16 %v141
  %v909 = vunpack.c.l.b16 %v142
  %v910 = vunpack.c.h.b16 %v142
  %v911 = vunpack.c.l.b16 %v143
  %v912 = vunpack.c.h.b16 %v143
  %v913 = vunpack.c.l.b16 %v144
  %v914 = vunpack.c.h.b16 %v144
  %v915 = vunpack.c.l.b16 %v145
  %v916 = vunpack.c.h.b16 %v145
  %v917 = vunpack.c.l.b16 %v146
  %v918 = vunpack.c.h.b16 %v146
  %v919 = vunpack.c.l.b16 %v147
  %v920 = vunpack.c.h.b16 %v147
  %v921 = vunpack.c.l.b16 %v148
  %v922 = vunpack.c.h.b16 %v148
  %v923 = vunpack.c.l.b16 %v149
  %v924 = vunpack.c.h.b16 %v149
  %v925 = vunpack.c.l.b16 %v150
  %v926 = vunpack.c.h.b16 %v150
  %v927 = vunpack.c.l.b16 %v151
  %v928 = vunpack.c.h.b16 %v151
  %v929 = vunpack.c.l.b16 %v152
  %v930 = vunpack.c.h.b16 %v152
  %v931 = vunpack.c.l.b16 %v153
  %v932 = vunpack.c.h.b16 %v153
  %v933 = vunpack.c.l.b16 %v154
  %v934 = vunpack.c.h.b16 %v154
  %v935 = vunpack.c.l.b16 %v155
  %v936 = vunpack.c.h.b16 %v155
  %v937 = vunpack.c.l.b16 %v156
  %v938 = vunpack.c.h.b16 %v156
  %v939 = vunpack.c.l.b16 %v157
  %v940 = vunpack.c.h.b16 %v157
  %v941 = vunpack.c.l.b16 %v158
  %v942 = vunpack.c.h.b16 %v158
  %v943 = vunpack.c.l.b16 %v159
  %v944 = vunpack.c.h.b16 %v159
  %v945 = vunpack.c.l.b16 %v160
  %v946 = vunpack.c.h.b16 %v160
  %v947 = vpack.c.b16 %v887, %v883
  %v948 = vpack.c.b16 %v888, %v884
  %v949 = vpack.c.b16 %v889, %v885
  %v950 = vpack.c.b16 %v890, %v886
  %v951 = vpack.c.b16 %v895, %v891
  %v952 = vpack.c.b16 %v896, %v892
  %v953 = vpack.c.b16 %v897, %v893
  %v954 = vpack.c.b16 %v898, %v894
  %v955 = vpack.c.b16 %v903, %v899
  %v956 = vpack.c.b16 %v904, %v900
  %v957 = vpack.c.b16 %v905, %v901
  %v958 = vpack.c.b16 %v906, %v902
  %v959 = vpack.c.b16 %v911, %v907
  %v960 = vpack.c.b16 %v912, %v908
  %v961 = vpack.c.b16 %v913, %v909
  %v962 = vpack.c.b16 %v914, %v910
  %v963 = vpack.c.b16 %v919, %v915
  %v964 = vpack.c.b16 %v920, %v916
  %v965 = vpack.c.b16 %v921, %v917
  %v966 = vpack.c.b16 %v922, %v918
  %v967 = vpack.c.b16 %v927, %v923
  %v968 = vpack.c.b16 %v928, %v924
  %v969 = vpack.c.b16 %v929, %v925
  %v970 = vpack.c.b16 %v930, %v926
  %v971 = vpack.c.b16 %v935, %v931
  %v972 = vpack.c.b16 %v936, %v932
  %v973 = vpack.c.b16 %v937, %v933
  %v974 = vpack.c.b16 %v938, %v934
  %v975 = vpack.c.b16 %v943, %v939
  %v976 = vpack.c.b16 %v944, %v940
  %v977 = vpack.c.b16 %v945, %v941
  %v978 = vpack.c.b16 %v946, %v942
  %1011 = vmatprep.subr.bf16.mxu0 %v948
  %1012 = vmatpush1.bf16.msra.mxu0 %v947
  %1013 = vmatprep.subr.bf16.mxu0 %v952
  %1014 = vmatpush1.bf16.msra.mxu0 %v951
  %1015 = vmatprep.subr.bf16.mxu0 %v956
  %1016 = vmatpush1.bf16.msra.mxu0 %v955
  %1017 = vmatprep.subr.bf16.mxu0 %v960
  %1018 = vmatpush1.bf16.msra.mxu0 %v959
  %1019 = vmatprep.subr.bf16.mxu0 %v964
  %1020 = vmatpush1.bf16.msra.mxu0 %v963
  %1021 = vmatprep.subr.bf16.mxu0 %v968
  %1022 = vmatpush1.bf16.msra.mxu0 %v967
  %1023 = vmatprep.subr.bf16.mxu0 %v972
  %1024 = vmatpush1.bf16.msra.mxu0 %v971
  %1025 = vmatprep.subr.bf16.mxu0 %v976
  %1026 = vmatpush1.bf16.msra.mxu0 %v975
  %1027 = vmatprep.subr.bf16.mxu0 0
  %1028 = vmatpush1.bf16.msra.mxu0 0
  %1029 = vmatprep.subr.bf16.mxu0 0
  %1030 = vmatpush1.bf16.msra.mxu0 0
  %1031 = vmatprep.subr.bf16.mxu0 0
  %1032 = vmatpush1.bf16.msra.mxu0 0
  %1033 = vmatprep.subr.bf16.mxu0 0
  %1034 = vmatpush1.bf16.msra.mxu0 0
  %1035 = vmatprep.subr.bf16.mxu0 0
  %1036 = vmatpush1.bf16.msra.mxu0 0
  %1037 = vmatprep.subr.bf16.mxu0 0
  %1038 = vmatpush1.bf16.msra.mxu0 0
  %1039 = vmatprep.subr.bf16.mxu0 0
  %1040 = vmatpush1.bf16.msra.mxu0 0
  %1041 = vmatprep.subr.bf16.mxu0 0
  %1042 = vmatpush1.bf16.msra.mxu0 0
  %1043 = vmatprep.mubr.bf16.mxu0 0
  %1044 = vmatmul.mubr.bf16.gmra.mrb[0].mxu0 0
  %v1045 = vpop.f32.mrb[0].mxu0
  %v1046 = vadd.f32 0.0, %v1045
  %v1047 = vpop.f32.mrb[0].mxu0
  %v1048 = vadd.f32 0.0, %v1047
  %v1049 = vpop.f32.mrb[0].mxu0
  %v1050 = vpop.f32.mrb[0].mxu0
  %1051 = vdwg.mxu0
  %1052 = vmatprep.subr.bf16.mxu0 %v950
  %1053 = vmatpush1.bf16.msra.mxu0 %v949
  %1054 = vmatprep.subr.bf16.mxu0 %v954
  %1055 = vmatpush1.bf16.msra.mxu0 %v953
  %1056 = vmatprep.subr.bf16.mxu0 %v958
  %1057 = vmatpush1.bf16.msra.mxu0 %v957
  %1058 = vmatprep.subr.bf16.mxu0 %v962
  %1059 = vmatpush1.bf16.msra.mxu0 %v961
  %1060 = vmatprep.subr.bf16.mxu0 %v966
  %1061 = vmatpush1.bf16.msra.mxu0 %v965
  %1062 = vmatprep.subr.bf16.mxu0 %v970
  %1063 = vmatpush1.bf16.msra.mxu0 %v969
  %1064 = vmatprep.subr.bf16.mxu0 %v974
  %1065 = vmatpush1.bf16.msra.mxu0 %v973
  %1066 = vmatprep.subr.bf16.mxu0 %v978
  %1067 = vmatpush1.bf16.msra.mxu0 %v977
  %1068 = vmatprep.subr.bf16.mxu0 0
  %1069 = vmatpush1.bf16.msra.mxu0 0
  %1070 = vmatprep.subr.bf16.mxu0 0
  %1071 = vmatpush1.bf16.msra.mxu0 0
  %1072 = vmatprep.subr.bf16.mxu0 0
  %1073 = vmatpush1.bf16.msra.mxu0 0
  %1074 = vmatprep.subr.bf16.mxu0 0
  %1075 = vmatpush1.bf16.msra.mxu0 0
  %1076 = vmatprep.subr.bf16.mxu0 0
  %1077 = vmatpush1.bf16.msra.mxu0 0
  %1078 = vmatprep.subr.bf16.mxu0 0
  %1079 = vmatpush1.bf16.msra.mxu0 0
  %1080 = vmatprep.subr.bf16.mxu0 0
  %1081 = vmatpush1.bf16.msra.mxu0 0
  %1082 = vmatprep.subr.bf16.mxu0 0
  %1083 = vmatpush1.bf16.msra.mxu0 0
  %1084 = vmatprep.mubr.bf16.mxu0 0
  %1085 = vmatmul.mubr.bf16.gmra.mrb[0].mxu0 0
  %v1086 = vpop.f32.mrb[0].mxu0
  %v1087 = vadd.f32 0.0, %v1086
  %v1088 = vpop.f32.mrb[0].mxu0
  %v1089 = vadd.f32 0.0, %v1088
  %v1090 = vpop.f32.mrb[0].mxu0
  %v1091 = vpop.f32.mrb[0].mxu0
  %1092 = vdwg.mxu0
  %v1125 = vunpack.c.l.b16 %v65
  %v1126 = vunpack.c.h.b16 %v65
  %v1127 = vunpack.c.l.b16 %v66
  %v1128 = vunpack.c.h.b16 %v66
  %v1129 = vunpack.c.l.b16 %v67
  %v1130 = vunpack.c.h.b16 %v67
  %v1131 = vunpack.c.l.b16 %v68
  %v1132 = vunpack.c.h.b16 %v68
  %v1133 = vunpack.c.l.b16 %v69
  %v1134 = vunpack.c.h.b16 %v69
  %v1135 = vunpack.c.l.b16 %v70
  %v1136 = vunpack.c.h.b16 %v70
  %v1137 = vunpack.c.l.b16 %v71
  %v1138 = vunpack.c.h.b16 %v71
  %v1139 = vunpack.c.l.b16 %v72
  %v1140 = vunpack.c.h.b16 %v72
  %v1141 = vunpack.c.l.b16 %v73
  %v1142 = vunpack.c.h.b16 %v73
  %v1143 = vunpack.c.l.b16 %v74
  %v1144 = vunpack.c.h.b16 %v74
  %v1145 = vunpack.c.l.b16 %v75
  %v1146 = vunpack.c.h.b16 %v75
  %v1147 = vunpack.c.l.b16 %v76
  %v1148 = vunpack.c.h.b16 %v76
  %v1149 = vunpack.c.l.b16 %v77
  %v1150 = vunpack.c.h.b16 %v77
  %v1151 = vunpack.c.l.b16 %v78
  %v1152 = vunpack.c.h.b16 %v78
  %v1153 = vunpack.c.l.b16 %v79
  %v1154 = vunpack.c.h.b16 %v79
  %v1155 = vunpack.c.l.b16 %v80
  %v1156 = vunpack.c.h.b16 %v80
  %v1157 = vunpack.c.l.b16 %v81
  %v1158 = vunpack.c.h.b16 %v81
  %v1159 = vunpack.c.l.b16 %v82
  %v1160 = vunpack.c.h.b16 %v82
  %v1161 = vunpack.c.l.b16 %v83
  %v1162 = vunpack.c.h.b16 %v83
  %v1163 = vunpack.c.l.b16 %v84
  %v1164 = vunpack.c.h.b16 %v84
  %v1165 = vunpack.c.l.b16 %v85
  %v1166 = vunpack.c.h.b16 %v85
  %v1167 = vunpack.c.l.b16 %v86
  %v1168 = vunpack.c.h.b16 %v86
  %v1169 = vunpack.c.l.b16 %v87
  %v1170 = vunpack.c.h.b16 %v87
  %v1171 = vunpack.c.l.b16 %v88
  %v1172 = vunpack.c.h.b16 %v88
  %v1173 = vunpack.c.l.b16 %v89
  %v1174 = vunpack.c.h.b16 %v89
  %v1175 = vunpack.c.l.b16 %v90
  %v1176 = vunpack.c.h.b16 %v90
  %v1177 = vunpack.c.l.b16 %v91
  %v1178 = vunpack.c.h.b16 %v91
  %v1179 = vunpack.c.l.b16 %v92
  %v1180 = vunpack.c.h.b16 %v92
  %v1181 = vunpack.c.l.b16 %v93
  %v1182 = vunpack.c.h.b16 %v93
  %v1183 = vunpack.c.l.b16 %v94
  %v1184 = vunpack.c.h.b16 %v94
  %v1185 = vunpack.c.l.b16 %v95
  %v1186 = vunpack.c.h.b16 %v95
  %v1187 = vunpack.c.l.b16 %v96
  %v1188 = vunpack.c.h.b16 %v96
  %v1189 = vpack.c.b16 %v1129, %v1125
  %v1190 = vpack.c.b16 %v1130, %v1126
  %v1191 = vpack.c.b16 %v1131, %v1127
  %v1192 = vpack.c.b16 %v1132, %v1128
  %v1193 = vpack.c.b16 %v1137, %v1133
  %v1194 = vpack.c.b16 %v1138, %v1134
  %v1195 = vpack.c.b16 %v1139, %v1135
  %v1196 = vpack.c.b16 %v1140, %v1136
  %v1197 = vpack.c.b16 %v1145, %v1141
  %v1198 = vpack.c.b16 %v1146, %v1142
  %v1199 = vpack.c.b16 %v1147, %v1143
  %v1200 = vpack.c.b16 %v1148, %v1144
  %v1201 = vpack.c.b16 %v1153, %v1149
  %v1202 = vpack.c.b16 %v1154, %v1150
  %v1203 = vpack.c.b16 %v1155, %v1151
  %v1204 = vpack.c.b16 %v1156, %v1152
  %v1205 = vpack.c.b16 %v1161, %v1157
  %v1206 = vpack.c.b16 %v1162, %v1158
  %v1207 = vpack.c.b16 %v1163, %v1159
  %v1208 = vpack.c.b16 %v1164, %v1160
  %v1209 = vpack.c.b16 %v1169, %v1165
  %v1210 = vpack.c.b16 %v1170, %v1166
  %v1211 = vpack.c.b16 %v1171, %v1167
  %v1212 = vpack.c.b16 %v1172, %v1168
  %v1213 = vpack.c.b16 %v1177, %v1173
  %v1214 = vpack.c.b16 %v1178, %v1174
  %v1215 = vpack.c.b16 %v1179, %v1175
  %v1216 = vpack.c.b16 %v1180, %v1176
  %v1217 = vpack.c.b16 %v1185, %v1181
  %v1218 = vpack.c.b16 %v1186, %v1182
  %v1219 = vpack.c.b16 %v1187, %v1183
  %v1220 = vpack.c.b16 %v1188, %v1184
  %1253 = vmatprep.subr.bf16.mxu0 %v1190
  %1254 = vmatpush1.bf16.msra.mxu0 %v1189
  %1255 = vmatprep.subr.bf16.mxu0 %v1194
  %1256 = vmatpush1.bf16.msra.mxu0 %v1193
  %1257 = vmatprep.subr.bf16.mxu0 %v1198
  %1258 = vmatpush1.bf16.msra.mxu0 %v1197
  %1259 = vmatprep.subr.bf16.mxu0 %v1202
  %1260 = vmatpush1.bf16.msra.mxu0 %v1201
  %1261 = vmatprep.subr.bf16.mxu0 %v1206
  %1262 = vmatpush1.bf16.msra.mxu0 %v1205
  %1263 = vmatprep.subr.bf16.mxu0 %v1210
  %1264 = vmatpush1.bf16.msra.mxu0 %v1209
  %1265 = vmatprep.subr.bf16.mxu0 %v1214
  %1266 = vmatpush1.bf16.msra.mxu0 %v1213
  %1267 = vmatprep.subr.bf16.mxu0 %v1218
  %1268 = vmatpush1.bf16.msra.mxu0 %v1217
  %1269 = vmatprep.subr.bf16.mxu0 0
  %1270 = vmatpush1.bf16.msra.mxu0 0
  %1271 = vmatprep.subr.bf16.mxu0 0
  %1272 = vmatpush1.bf16.msra.mxu0 0
  %1273 = vmatprep.subr.bf16.mxu0 0
  %1274 = vmatpush1.bf16.msra.mxu0 0
  %1275 = vmatprep.subr.bf16.mxu0 0
  %1276 = vmatpush1.bf16.msra.mxu0 0
  %1277 = vmatprep.subr.bf16.mxu0 0
  %1278 = vmatpush1.bf16.msra.mxu0 0
  %1279 = vmatprep.subr.bf16.mxu0 0
  %1280 = vmatpush1.bf16.msra.mxu0 0
  %1281 = vmatprep.subr.bf16.mxu0 0
  %1282 = vmatpush1.bf16.msra.mxu0 0
  %1283 = vmatprep.subr.bf16.mxu0 0
  %1284 = vmatpush1.bf16.msra.mxu0 0
  %1285 = vmatprep.mubr.bf16.mxu0 0
  %1286 = vmatmul.mubr.bf16.gmra.mrb[0].mxu0 %v850
  %v1287 = vpop.f32.mrb[0].mxu0
  %v1288 = vadd.f32 %v1046, %v1287
  %v1289 = vpop.f32.mrb[0].mxu0
  %v1290 = vadd.f32 %v1048, %v1289
  %v1291 = vpop.f32.mrb[0].mxu0
  %v1292 = vpop.f32.mrb[0].mxu0
  %1293 = vdwg.mxu0
  %1294 = vmatprep.subr.bf16.mxu0 %v1192
  %1295 = vmatpush1.bf16.msra.mxu0 %v1191
  %1296 = vmatprep.subr.bf16.mxu0 %v1196
  %1297 = vmatpush1.bf16.msra.mxu0 %v1195
  %1298 = vmatprep.subr.bf16.mxu0 %v1200
  %1299 = vmatpush1.bf16.msra.mxu0 %v1199
  %1300 = vmatprep.subr.bf16.mxu0 %v1204
  %1301 = vmatpush1.bf16.msra.mxu0 %v1203
  %1302 = vmatprep.subr.bf16.mxu0 %v1208
  %1303 = vmatpush1.bf16.msra.mxu0 %v1207
  %1304 = vmatprep.subr.bf16.mxu0 %v1212
  %1305 = vmatpush1.bf16.msra.mxu0 %v1211
  %1306 = vmatprep.subr.bf16.mxu0 %v1216
  %1307 = vmatpush1.bf16.msra.mxu0 %v1215
  %1308 = vmatprep.subr.bf16.mxu0 %v1220
  %1309 = vmatpush1.bf16.msra.mxu0 %v1219
  %1310 = vmatprep.subr.bf16.mxu0 0
  %1311 = vmatpush1.bf16.msra.mxu0 0
  %1312 = vmatprep.subr.bf16.mxu0 0
  %1313 = vmatpush1.bf16.msra.mxu0 0
  %1314 = vmatprep.subr.bf16.mxu0 0
  %1315 = vmatpush1.bf16.msra.mxu0 0
  %1316 = vmatprep.subr.bf16.mxu0 0
  %1317 = vmatpush1.bf16.msra.mxu0 0
  %1318 = vmatprep.subr.bf16.mxu0 0
  %1319 = vmatpush1.bf16.msra.mxu0 0
  %1320 = vmatprep.subr.bf16.mxu0 0
  %1321 = vmatpush1.bf16.msra.mxu0 0
  %1322 = vmatprep.subr.bf16.mxu0 0
  %1323 = vmatpush1.bf16.msra.mxu0 0
  %1324 = vmatprep.subr.bf16.mxu0 0
  %1325 = vmatpush1.bf16.msra.mxu0 0
  %1326 = vmatprep.mubr.bf16.mxu0 0
  %1327 = vmatmul.mubr.bf16.gmra.mrb[0].mxu0 %v850
  %v1328 = vpop.f32.mrb[0].mxu0
  %v1329 = vadd.f32 %v1087, %v1328
  %v1330 = vpop.f32.mrb[0].mxu0
  %v1331 = vadd.f32 %v1089, %v1330
  %v1332 = vpop.f32.mrb[0].mxu0
  %v1333 = vpop.f32.mrb[0].mxu0
  %1334 = vdwg.mxu0
  %v1336 = vlaneseq
  %v1337 = vshrl.u32 %v1336, 7
  %v1338 = vsub.s32 0, %v1337
  %v1339 = vrot.slane %v162, %v1338
  %v1340 = vlaneseq
  %v1341 = vshrl.u32 %v1340, 7
  %v1342 = vsub.s32 1, %v1341
  %v1343 = vrot.slane %v162, %v1342
  %v1344 = vlaneseq
  %v1345 = vshrl.u32 %v1344, 7
  %v1346 = vsub.s32 2, %v1345
  %v1347 = vrot.slane %v162, %v1346
  %v1348 = vlaneseq
  %v1349 = vshrl.u32 %v1348, 7
  %v1350 = vsub.s32 3, %v1349
  %v1351 = vrot.slane %v162, %v1350
  %v1356 = vadd.f32 %v1288, %v1339
  %v1357 = vadd.f32 %v1290, %v1343
  %v1358 = vadd.f32 %v1329, %v1347
  %v1359 = vadd.f32 %v1331, %v1351
  %v1360 = vmul.f32 %v1356, %v571
  %v1361 = vmul.f32 %v1357, %v572
  %v1362 = vmul.f32 %v1358, %v573
  %v1363 = vmul.f32 %v1359, %v574
  %v1364 = vtanh.pop %v1360
  %v1365 = vtanh.pop %v1361
  %v1366 = vtanh.pop %v1362
  %v1367 = vtanh.pop %v1363
  %v1368 = vmul.f32 %v1364, %v571
  %v1369 = vmul.f32 %v1365, %v572
  %v1370 = vmul.f32 %v1366, %v573
  %v1371 = vmul.f32 %v1367, %v574
  %v1372 = vadd.f32 %v1368, %v575
  %v1373 = vadd.f32 %v1369, %v576
  %v1374 = vadd.f32 %v1370, %v577
  %v1375 = vadd.f32 %v1371, %v578
  %v1376 = vmul.f32 %v1373, 0.0
  %v1377 = vmul.f32 %v1372, %v1374
  %v1378 = vadd.f32 %v1376, %v1377
  %v1379 = vtanh.pop %v1378
  %v1380 = vmul.f32 %v1375, %v1379
  %v1381 = vpack.c.bf16 %v1380, %v1380
  %1382 = vmatprep.subr.bf16.mxu0 %v676
  %1383 = vmatpush1.bf16.msra.mxu0 %v675
  %1384 = vmatprep.subr.bf16.mxu0 %v680
  %1385 = vmatpush1.bf16.msra.mxu0 %v679
  %1386 = vmatprep.subr.bf16.mxu0 %v684
  %1387 = vmatpush1.bf16.msra.mxu0 %v683
  %1388 = vmatprep.subr.bf16.mxu0 %v688
  %1389 = vmatpush1.bf16.msra.mxu0 %v687
  %1390 = vmatprep.subr.bf16.mxu0 %v692
  %1391 = vmatpush1.bf16.msra.mxu0 %v691
  %1392 = vmatprep.subr.bf16.mxu0 %v696
  %1393 = vmatpush1.bf16.msra.mxu0 %v695
  %1394 = vmatprep.subr.bf16.mxu0 %v700
  %1395 = vmatpush1.bf16.msra.mxu0 %v699
  %1396 = vmatprep.subr.bf16.mxu0 %v704
  %1397 = vmatpush1.bf16.msra.mxu0 %v703
  %1398 = vmatprep.subr.bf16.mxu0 0
  %1399 = vmatpush1.bf16.msra.mxu0 0
  %1400 = vmatprep.subr.bf16.mxu0 0
  %1401 = vmatpush1.bf16.msra.mxu0 0
  %1402 = vmatprep.subr.bf16.mxu0 0
  %1403 = vmatpush1.bf16.msra.mxu0 0
  %1404 = vmatprep.subr.bf16.mxu0 0
  %1405 = vmatpush1.bf16.msra.mxu0 0
  %1406 = vmatprep.subr.bf16.mxu0 0
  %1407 = vmatpush1.bf16.msra.mxu0 0
  %1408 = vmatprep.subr.bf16.mxu0 0
  %1409 = vmatpush1.bf16.msra.mxu0 0
  %1410 = vmatprep.subr.bf16.mxu0 0
  %1411 = vmatpush1.bf16.msra.mxu0 0
  %1412 = vmatprep.subr.bf16.mxu0 0
  %1413 = vmatpush1.bf16.msra.mxu0 0
  %1414 = vmatprep.mubr.bf16.mxu0 0
  %1415 = vmatmul.mubr.bf16.gmra.mrb[0].mxu0 %v850
  %v1416 = vpop.f32.mrb[0].mxu0
  %v1417 = vadd.f32 0.0, %v1416
  %v1418 = vpop.f32.mrb[0].mxu0
  %v1419 = vadd.f32 0.0, %v1418
  %v1420 = vpop.f32.mrb[0].mxu0
  %v1421 = vpop.f32.mrb[0].mxu0
  %1422 = vdwg.mxu0
  %1423 = vmatprep.subr.bf16.mxu0 %v678
  %1424 = vmatpush1.bf16.msra.mxu0 %v677
  %1425 = vmatprep.subr.bf16.mxu0 %v682
  %1426 = vmatpush1.bf16.msra.mxu0 %v681
  %1427 = vmatprep.subr.bf16.mxu0 %v686
  %1428 = vmatpush1.bf16.msra.mxu0 %v685
  %1429 = vmatprep.subr.bf16.mxu0 %v690
  %1430 = vmatpush1.bf16.msra.mxu0 %v689
  %1431 = vmatprep.subr.bf16.mxu0 %v694
  %1432 = vmatpush1.bf16.msra.mxu0 %v693
  %1433 = vmatprep.subr.bf16.mxu0 %v698
  %1434 = vmatpush1.bf16.msra.mxu0 %v697
  %1435 = vmatprep.subr.bf16.mxu0 %v702
  %1436 = vmatpush1.bf16.msra.mxu0 %v701
  %1437 = vmatprep.subr.bf16.mxu0 %v706
  %1438 = vmatpush1.bf16.msra.mxu0 %v705
  %1439 = vmatprep.subr.bf16.mxu0 0
  %1440 = vmatpush1.bf16.msra.mxu0 0
  %1441 = vmatprep.subr.bf16.mxu0 0
  %1442 = vmatpush1.bf16.msra.mxu0 0
  %1443 = vmatprep.subr.bf16.mxu0 0
  %1444 = vmatpush1.bf16.msra.mxu0 0
  %1445 = vmatprep.subr.bf16.mxu0 0
  %1446 = vmatpush1.bf16.msra.mxu0 0
  %1447 = vmatprep.subr.bf16.mxu0 0
  %1448 = vmatpush1.bf16.msra.mxu0 0
  %1449 = vmatprep.subr.bf16.mxu0 0
  %1450 = vmatpush1.bf16.msra.mxu0 0
  %1451 = vmatprep.subr.bf16.mxu0 0
  %1452 = vmatpush1.bf16.msra.mxu0 0
  %1453 = vmatprep.subr.bf16.mxu0 0
  %1454 = vmatpush1.bf16.msra.mxu0 0
  %1455 = vmatprep.mubr.bf16.mxu0 0
  %1456 = vmatmul.mubr.bf16.gmra.mrb[0].mxu0 %v850
  %v1457 = vpop.f32.mrb[0].mxu0
  %v1458 = vadd.f32 0.0, %v1457
  %v1459 = vpop.f32.mrb[0].mxu0
  %v1460 = vadd.f32 0.0, %v1459
  %v1461 = vpop.f32.mrb[0].mxu0
  %v1462 = vpop.f32.mrb[0].mxu0
  %1463 = vdwg.mxu0
  %s1464 = scalar_lea.vmem [#allocation2], 32
  %v1465 = vld [vmem:[%s1464] sm:$0xff]
  %v1466 = vld [vmem:[%s1464 + $0x8] sm:$0xff]
  %v1467 = vld [vmem:[%s1464 + $0x10] sm:$0xff]
  %v1468 = vld [vmem:[%s1464 + $0x18] sm:$0xff]
  %v1469 = vadd.f32 %v1465, %v1417
  %v1470 = vadd.f32 %v1466, %v1419
  %v1471 = vadd.f32 %v1467, %v1458
  %v1472 = vadd.f32 %v1468, %v1460
  %v1473 = vmul.f32 %v1469, %v571
  %v1474 = vmul.f32 %v1470, %v572
  %v1475 = vmul.f32 %v1471, %v573
  %v1476 = vmul.f32 %v1472, %v574
  %v1477 = vtanh.pop %v1473
  %v1478 = vtanh.pop %v1474
  %v1479 = vtanh.pop %v1475
  %v1480 = vtanh.pop %v1476
  %v1481 = vmul.f32 %v1477, %v571
  %v1482 = vmul.f32 %v1478, %v572
  %v1483 = vmul.f32 %v1479, %v573
  %v1484 = vmul.f32 %v1480, %v574
  %v1485 = vadd.f32 %v1481, %v575
  %v1486 = vadd.f32 %v1482, %v576
  %v1487 = vadd.f32 %v1483, %v577
  %v1488 = vadd.f32 %v1484, %v578
  %v1489 = vmul.f32 %v1486, %v847
  %v1490 = vmul.f32 %v1485, %v1487
  %v1491 = vadd.f32 %v1489, %v1490
  %v1492 = vtanh.pop %v1491
  %v1493 = vmul.f32 %v1488, %v1492
  %v1494 = vpack.c.bf16 %v1493, %v1493
  %1495 = vmatprep.subr.bf16.mxu0 %v948
  %1496 = vmatpush1.bf16.msra.mxu0 %v947
  %1497 = vmatprep.subr.bf16.mxu0 %v952
  %1498 = vmatpush1.bf16.msra.mxu0 %v951
  %1499 = vmatprep.subr.bf16.mxu0 %v956
  %1500 = vmatpush1.bf16.msra.mxu0 %v955
  %1501 = vmatprep.subr.bf16.mxu0 %v960
  %1502 = vmatpush1.bf16.msra.mxu0 %v959
  %1503 = vmatprep.subr.bf16.mxu0 %v964
  %1504 = vmatpush1.bf16.msra.mxu0 %v963
  %1505 = vmatprep.subr.bf16.mxu0 %v968
  %1506 = vmatpush1.bf16.msra.mxu0 %v967
  %1507 = vmatprep.subr.bf16.mxu0 %v972
  %1508 = vmatpush1.bf16.msra.mxu0 %v971
  %1509 = vmatprep.subr.bf16.mxu0 %v976
  %1510 = vmatpush1.bf16.msra.mxu0 %v975
  %1511 = vmatprep.subr.bf16.mxu0 0
  %1512 = vmatpush1.bf16.msra.mxu0 0
  %1513 = vmatprep.subr.bf16.mxu0 0
  %1514 = vmatpush1.bf16.msra.mxu0 0
  %1515 = vmatprep.subr.bf16.mxu0 0
  %1516 = vmatpush1.bf16.msra.mxu0 0
  %1517 = vmatprep.subr.bf16.mxu0 0
  %1518 = vmatpush1.bf16.msra.mxu0 0
  %1519 = vmatprep.subr.bf16.mxu0 0
  %1520 = vmatpush1.bf16.msra.mxu0 0
  %1521 = vmatprep.subr.bf16.mxu0 0
  %1522 = vmatpush1.bf16.msra.mxu0 0
  %1523 = vmatprep.subr.bf16.mxu0 0
  %1524 = vmatpush1.bf16.msra.mxu0 0
  %1525 = vmatprep.subr.bf16.mxu0 0
  %1526 = vmatpush1.bf16.msra.mxu0 0
  %1527 = vmatprep.mubr.bf16.mxu0 0
  %1528 = vmatmul.mubr.bf16.gmra.mrb[0].mxu0 %v1381
  %v1529 = vpop.f32.mrb[0].mxu0
  %v1530 = vadd.f32 0.0, %v1529
  %v1531 = vpop.f32.mrb[0].mxu0
  %v1532 = vadd.f32 0.0, %v1531
  %v1533 = vpop.f32.mrb[0].mxu0
  %v1534 = vpop.f32.mrb[0].mxu0
  %1535 = vdwg.mxu0
  %1536 = vmatprep.subr.bf16.mxu0 %v950
  %1537 = vmatpush1.bf16.msra.mxu0 %v949
  %1538 = vmatprep.subr.bf16.mxu0 %v954
  %1539 = vmatpush1.bf16.msra.mxu0 %v953
  %1540 = vmatprep.subr.bf16.mxu0 %v958
  %1541 = vmatpush1.bf16.msra.mxu0 %v957
  %1542 = vmatprep.subr.bf16.mxu0 %v962
  %1543 = vmatpush1.bf16.msra.mxu0 %v961
  %1544 = vmatprep.subr.bf16.mxu0 %v966
  %1545 = vmatpush1.bf16.msra.mxu0 %v965
  %1546 = vmatprep.subr.bf16.mxu0 %v970
  %1547 = vmatpush1.bf16.msra.mxu0 %v969
  %1548 = vmatprep.subr.bf16.mxu0 %v974
  %1549 = vmatpush1.bf16.msra.mxu0 %v973
  %1550 = vmatprep.subr.bf16.mxu0 %v978
  %1551 = vmatpush1.bf16.msra.mxu0 %v977
  %1552 = vmatprep.subr.bf16.mxu0 0
  %1553 = vmatpush1.bf16.msra.mxu0 0
  %1554 = vmatprep.subr.bf16.mxu0 0
  %1555 = vmatpush1.bf16.msra.mxu0 0
  %1556 = vmatprep.subr.bf16.mxu0 0
  %1557 = vmatpush1.bf16.msra.mxu0 0
  %1558 = vmatprep.subr.bf16.mxu0 0
  %1559 = vmatpush1.bf16.msra.mxu0 0
  %1560 = vmatprep.subr.bf16.mxu0 0
  %1561 = vmatpush1.bf16.msra.mxu0 0
  %1562 = vmatprep.subr.bf16.mxu0 0
  %1563 = vmatpush1.bf16.msra.mxu0 0
  %1564 = vmatprep.subr.bf16.mxu0 0
  %1565 = vmatpush1.bf16.msra.mxu0 0
  %1566 = vmatprep.subr.bf16.mxu0 0
  %1567 = vmatpush1.bf16.msra.mxu0 0
  %1568 = vmatprep.mubr.bf16.mxu0 0
  %1569 = vmatmul.mubr.bf16.gmra.mrb[0].mxu0 %v1381
  %v1570 = vpop.f32.mrb[0].mxu0
  %v1571 = vadd.f32 0.0, %v1570
  %v1572 = vpop.f32.mrb[0].mxu0
  %v1573 = vadd.f32 0.0, %v1572
  %v1574 = vpop.f32.mrb[0].mxu0
  %v1575 = vpop.f32.mrb[0].mxu0
  %1576 = vdwg.mxu0
  %1577 = vmatprep.subr.bf16.mxu0 %v1190
  %1578 = vmatpush1.bf16.msra.mxu0 %v1189
  %1579 = vmatprep.subr.bf16.mxu0 %v1194
  %1580 = vmatpush1.bf16.msra.mxu0 %v1193
  %1581 = vmatprep.subr.bf16.mxu0 %v1198
  %1582 = vmatpush1.bf16.msra.mxu0 %v1197
  %1583 = vmatprep.subr.bf16.mxu0 %v1202
  %1584 = vmatpush1.bf16.msra.mxu0 %v1201
  %1585 = vmatprep.subr.bf16.mxu0 %v1206
  %1586 = vmatpush1.bf16.msra.mxu0 %v1205
  %1587 = vmatprep.subr.bf16.mxu0 %v1210
  %1588 = vmatpush1.bf16.msra.mxu0 %v1209
  %1589 = vmatprep.subr.bf16.mxu0 %v1214
  %1590 = vmatpush1.bf16.msra.mxu0 %v1213
  %1591 = vmatprep.subr.bf16.mxu0 %v1218
  %1592 = vmatpush1.bf16.msra.mxu0 %v1217
  %1593 = vmatprep.subr.bf16.mxu0 0
  %1594 = vmatpush1.bf16.msra.mxu0 0
  %1595 = vmatprep.subr.bf16.mxu0 0
  %1596 = vmatpush1.bf16.msra.mxu0 0
  %1597 = vmatprep.subr.bf16.mxu0 0
  %1598 = vmatpush1.bf16.msra.mxu0 0
  %1599 = vmatprep.subr.bf16.mxu0 0
  %1600 = vmatpush1.bf16.msra.mxu0 0
  %1601 = vmatprep.subr.bf16.mxu0 0
  %1602 = vmatpush1.bf16.msra.mxu0 0
  %1603 = vmatprep.subr.bf16.mxu0 0
  %1604 = vmatpush1.bf16.msra.mxu0 0
  %1605 = vmatprep.subr.bf16.mxu0 0
  %1606 = vmatpush1.bf16.msra.mxu0 0
  %1607 = vmatprep.subr.bf16.mxu0 0
  %1608 = vmatpush1.bf16.msra.mxu0 0
  %1609 = vmatprep.mubr.bf16.mxu0 0
  %1610 = vmatmul.mubr.bf16.gmra.mrb[0].mxu0 %v1494
  %v1611 = vpop.f32.mrb[0].mxu0
  %v1612 = vadd.f32 %v1530, %v1611
  %v1613 = vpop.f32.mrb[0].mxu0
  %v1614 = vadd.f32 %v1532, %v1613
  %v1615 = vpop.f32.mrb[0].mxu0
  %v1616 = vpop.f32.mrb[0].mxu0
  %1617 = vdwg.mxu0
  %1618 = vmatprep.subr.bf16.mxu0 %v1192
  %1619 = vmatpush1.bf16.msra.mxu0 %v1191
  %1620 = vmatprep.subr.bf16.mxu0 %v1196
  %1621 = vmatpush1.bf16.msra.mxu0 %v1195
  %1622 = vmatprep.subr.bf16.mxu0 %v1200
  %1623 = vmatpush1.bf16.msra.mxu0 %v1199
  %1624 = vmatprep.subr.bf16.mxu0 %v1204
  %1625 = vmatpush1.bf16.msra.mxu0 %v1203
  %1626 = vmatprep.subr.bf16.mxu0 %v1208
  %1627 = vmatpush1.bf16.msra.mxu0 %v1207
  %1628 = vmatprep.subr.bf16.mxu0 %v1212
  %1629 = vmatpush1.bf16.msra.mxu0 %v1211
  %1630 = vmatprep.subr.bf16.mxu0 %v1216
  %1631 = vmatpush1.bf16.msra.mxu0 %v1215
  %1632 = vmatprep.subr.bf16.mxu0 %v1220
  %1633 = vmatpush1.bf16.msra.mxu0 %v1219
  %1634 = vmatprep.subr.bf16.mxu0 0
  %1635 = vmatpush1.bf16.msra.mxu0 0
  %1636 = vmatprep.subr.bf16.mxu0 0
  %1637 = vmatpush1.bf16.msra.mxu0 0
  %1638 = vmatprep.subr.bf16.mxu0 0
  %1639 = vmatpush1.bf16.msra.mxu0 0
  %1640 = vmatprep.subr.bf16.mxu0 0
  %1641 = vmatpush1.bf16.msra.mxu0 0
  %1642 = vmatprep.subr.bf16.mxu0 0
  %1643 = vmatpush1.bf16.msra.mxu0 0
  %1644 = vmatprep.subr.bf16.mxu0 0
  %1645 = vmatpush1.bf16.msra.mxu0 0
  %1646 = vmatprep.subr.bf16.mxu0 0
  %1647 = vmatpush1.bf16.msra.mxu0 0
  %1648 = vmatprep.subr.bf16.mxu0 0
  %1649 = vmatpush1.bf16.msra.mxu0 0
  %1650 = vmatprep.mubr.bf16.mxu0 0
  %1651 = vmatmul.mubr.bf16.gmra.mrb[0].mxu0 %v1494
  %v1652 = vpop.f32.mrb[0].mxu0
  %v1653 = vadd.f32 %v1571, %v1652
  %v1654 = vpop.f32.mrb[0].mxu0
  %v1655 = vadd.f32 %v1573, %v1654
  %v1656 = vpop.f32.mrb[0].mxu0
  %v1657 = vpop.f32.mrb[0].mxu0
  %1658 = vdwg.mxu0
  %v1659 = vadd.f32 %v1612, %v1339
  %v1660 = vadd.f32 %v1614, %v1343
  %v1661 = vadd.f32 %v1653, %v1347
  %v1662 = vadd.f32 %v1655, %v1351
  %v1663 = vmul.f32 %v1659, %v571
  %v1664 = vmul.f32 %v1660, %v572
  %v1665 = vmul.f32 %v1661, %v573
  %v1666 = vmul.f32 %v1662, %v574
  %v1667 = vtanh.pop %v1663
  %v1668 = vtanh.pop %v1664
  %v1669 = vtanh.pop %v1665
  %v1670 = vtanh.pop %v1666
  %v1671 = vmul.f32 %v1667, %v571
  %v1672 = vmul.f32 %v1668, %v572
  %v1673 = vmul.f32 %v1669, %v573
  %v1674 = vmul.f32 %v1670, %v574
  %v1675 = vadd.f32 %v1671, %v575
  %v1676 = vadd.f32 %v1672, %v576
  %v1677 = vadd.f32 %v1673, %v577
  %v1678 = vadd.f32 %v1674, %v578
  %v1679 = vmul.f32 %v1676, %v1378
  %v1680 = vmul.f32 %v1675, %v1677
  %v1681 = vadd.f32 %v1679, %v1680
  %v1682 = vtanh.pop %v1681
  %v1683 = vmul.f32 %v1678, %v1682
  %v1684 = vpack.c.bf16 %v1683, %v1683
  %1685 = vmatprep.subr.bf16.mxu0 %v676
  %1686 = vmatpush1.bf16.msra.mxu0 %v675
  %1687 = vmatprep.subr.bf16.mxu0 %v680
  %1688 = vmatpush1.bf16.msra.mxu0 %v679
  %1689 = vmatprep.subr.bf16.mxu0 %v684
  %1690 = vmatpush1.bf16.msra.mxu0 %v683
  %1691 = vmatprep.subr.bf16.mxu0 %v688
  %1692 = vmatpush1.bf16.msra.mxu0 %v687
  %1693 = vmatprep.subr.bf16.mxu0 %v692
  %1694 = vmatpush1.bf16.msra.mxu0 %v691
  %1695 = vmatprep.subr.bf16.mxu0 %v696
  %1696 = vmatpush1.bf16.msra.mxu0 %v695
  %1697 = vmatprep.subr.bf16.mxu0 %v700
  %1698 = vmatpush1.bf16.msra.mxu0 %v699
  %1699 = vmatprep.subr.bf16.mxu0 %v704
  %1700 = vmatpush1.bf16.msra.mxu0 %v703
  %1701 = vmatprep.subr.bf16.mxu0 0
  %1702 = vmatpush1.bf16.msra.mxu0 0
  %1703 = vmatprep.subr.bf16.mxu0 0
  %1704 = vmatpush1.bf16.msra.mxu0 0
  %1705 = vmatprep.subr.bf16.mxu0 0
  %1706 = vmatpush1.bf16.msra.mxu0 0
  %1707 = vmatprep.subr.bf16.mxu0 0
  %1708 = vmatpush1.bf16.msra.mxu0 0
  %1709 = vmatprep.subr.bf16.mxu0 0
  %1710 = vmatpush1.bf16.msra.mxu0 0
  %1711 = vmatprep.subr.bf16.mxu0 0
  %1712 = vmatpush1.bf16.msra.mxu0 0
  %1713 = vmatprep.subr.bf16.mxu0 0
  %1714 = vmatpush1.bf16.msra.mxu0 0
  %1715 = vmatprep.subr.bf16.mxu0 0
  %1716 = vmatpush1.bf16.msra.mxu0 0
  %1717 = vmatprep.mubr.bf16.mxu0 0
  %1718 = vmatmul.mubr.bf16.gmra.mrb[0].mxu0 %v1494
  %v1719 = vpop.f32.mrb[0].mxu0
  %v1720 = vadd.f32 0.0, %v1719
  %v1721 = vpop.f32.mrb[0].mxu0
  %v1722 = vadd.f32 0.0, %v1721
  %v1723 = vpop.f32.mrb[0].mxu0
  %v1724 = vpop.f32.mrb[0].mxu0
  %1725 = vdwg.mxu0
  %1726 = vmatprep.subr.bf16.mxu0 %v678
  %1727 = vmatpush1.bf16.msra.mxu0 %v677
  %1728 = vmatprep.subr.bf16.mxu0 %v682
  %1729 = vmatpush1.bf16.msra.mxu0 %v681
  %1730 = vmatprep.subr.bf16.mxu0 %v686
  %1731 = vmatpush1.bf16.msra.mxu0 %v685
  %1732 = vmatprep.subr.bf16.mxu0 %v690
  %1733 = vmatpush1.bf16.msra.mxu0 %v689
  %1734 = vmatprep.subr.bf16.mxu0 %v694
  %1735 = vmatpush1.bf16.msra.mxu0 %v693
  %1736 = vmatprep.subr.bf16.mxu0 %v698
  %1737 = vmatpush1.bf16.msra.mxu0 %v697
  %1738 = vmatprep.subr.bf16.mxu0 %v702
  %1739 = vmatpush1.bf16.msra.mxu0 %v701
  %1740 = vmatprep.subr.bf16.mxu0 %v706
  %1741 = vmatpush1.bf16.msra.mxu0 %v705
  %1742 = vmatprep.subr.bf16.mxu0 0
  %1743 = vmatpush1.bf16.msra.mxu0 0
  %1744 = vmatprep.subr.bf16.mxu0 0
  %1745 = vmatpush1.bf16.msra.mxu0 0
  %1746 = vmatprep.subr.bf16.mxu0 0
  %1747 = vmatpush1.bf16.msra.mxu0 0
  %1748 = vmatprep.subr.bf16.mxu0 0
  %1749 = vmatpush1.bf16.msra.mxu0 0
  %1750 = vmatprep.subr.bf16.mxu0 0
  %1751 = vmatpush1.bf16.msra.mxu0 0
  %1752 = vmatprep.subr.bf16.mxu0 0
  %1753 = vmatpush1.bf16.msra.mxu0 0
  %1754 = vmatprep.subr.bf16.mxu0 0
  %1755 = vmatpush1.bf16.msra.mxu0 0
  %1756 = vmatprep.subr.bf16.mxu0 0
  %1757 = vmatpush1.bf16.msra.mxu0 0
  %1758 = vmatprep.mubr.bf16.mxu0 0
  %1759 = vmatmul.mubr.bf16.gmra.mrb[0].mxu0 %v1494
  %v1760 = vpop.f32.mrb[0].mxu0
  %v1761 = vadd.f32 0.0, %v1760
  %v1762 = vpop.f32.mrb[0].mxu0
  %v1763 = vadd.f32 0.0, %v1762
  %v1764 = vpop.f32.mrb[0].mxu0
  %v1765 = vpop.f32.mrb[0].mxu0
  %1766 = vdwg.mxu0
  %s1767 = scalar_lea.vmem [#allocation2], 64
  %v1768 = vld [vmem:[%s1767] sm:$0xff]
  %v1769 = vld [vmem:[%s1767 + $0x8] sm:$0xff]
  %v1770 = vld [vmem:[%s1767 + $0x10] sm:$0xff]
  %v1771 = vld [vmem:[%s1767 + $0x18] sm:$0xff]
  %v1772 = vadd.f32 %v1768, %v1720
  %v1773 = vadd.f32 %v1769, %v1722
  %v1774 = vadd.f32 %v1770, %v1761
  %v1775 = vadd.f32 %v1771, %v1763
  %v1776 = vmul.f32 %v1772, %v571
  %v1777 = vmul.f32 %v1773, %v572
  %v1778 = vmul.f32 %v1774, %v573
  %v1779 = vmul.f32 %v1775, %v574
  %v1780 = vtanh.pop %v1776
  %v1781 = vtanh.pop %v1777
  %v1782 = vtanh.pop %v1778
  %v1783 = vtanh.pop %v1779
  %v1784 = vmul.f32 %v1780, %v571
  %v1785 = vmul.f32 %v1781, %v572
  %v1786 = vmul.f32 %v1782, %v573
  %v1787 = vmul.f32 %v1783, %v574
  %v1788 = vadd.f32 %v1784, %v575
  %v1789 = vadd.f32 %v1785, %v576
  %v1790 = vadd.f32 %v1786, %v577
  %v1791 = vadd.f32 %v1787, %v578
  %v1792 = vmul.f32 %v1789, %v1491
  %v1793 = vmul.f32 %v1788, %v1790
  %v1794 = vadd.f32 %v1792, %v1793
  %v1795 = vtanh.pop %v1794
  %v1796 = vmul.f32 %v1791, %v1795
  %v1797 = vpack.c.bf16 %v1796, %v1796
  %1798 = vmatprep.subr.bf16.mxu0 %v948
  %1799 = vmatpush1.bf16.msra.mxu0 %v947
  %1800 = vmatprep.subr.bf16.mxu0 %v952
  %1801 = vmatpush1.bf16.msra.mxu0 %v951
  %1802 = vmatprep.subr.bf16.mxu0 %v956
  %1803 = vmatpush1.bf16.msra.mxu0 %v955
  %1804 = vmatprep.subr.bf16.mxu0 %v960
  %1805 = vmatpush1.bf16.msra.mxu0 %v959
  %1806 = vmatprep.subr.bf16.mxu0 %v964
  %1807 = vmatpush1.bf16.msra.mxu0 %v963
  %1808 = vmatprep.subr.bf16.mxu0 %v968
  %1809 = vmatpush1.bf16.msra.mxu0 %v967
  %1810 = vmatprep.subr.bf16.mxu0 %v972
  %1811 = vmatpush1.bf16.msra.mxu0 %v971
  %1812 = vmatprep.subr.bf16.mxu0 %v976
  %1813 = vmatpush1.bf16.msra.mxu0 %v975
  %1814 = vmatprep.subr.bf16.mxu0 0
  %1815 = vmatpush1.bf16.msra.mxu0 0
  %1816 = vmatprep.subr.bf16.mxu0 0
  %1817 = vmatpush1.bf16.msra.mxu0 0
  %1818 = vmatprep.subr.bf16.mxu0 0
  %1819 = vmatpush1.bf16.msra.mxu0 0
  %1820 = vmatprep.subr.bf16.mxu0 0
  %1821 = vmatpush1.bf16.msra.mxu0 0
  %1822 = vmatprep.subr.bf16.mxu0 0
  %1823 = vmatpush1.bf16.msra.mxu0 0
  %1824 = vmatprep.subr.bf16.mxu0 0
  %1825 = vmatpush1.bf16.msra.mxu0 0
  %1826 = vmatprep.subr.bf16.mxu0 0
  %1827 = vmatpush1.bf16.msra.mxu0 0
  %1828 = vmatprep.subr.bf16.mxu0 0
  %1829 = vmatpush1.bf16.msra.mxu0 0
  %1830 = vmatprep.mubr.bf16.mxu0 0
  %1831 = vmatmul.mubr.bf16.gmra.mrb[0].mxu0 %v1684
  %v1832 = vpop.f32.mrb[0].mxu0
  %v1833 = vadd.f32 0.0, %v1832
  %v1834 = vpop.f32.mrb[0].mxu0
  %v1835 = vadd.f32 0.0, %v1834
  %v1836 = vpop.f32.mrb[0].mxu0
  %v1837 = vpop.f32.mrb[0].mxu0
  %1838 = vdwg.mxu0
  %1839 = vmatprep.subr.bf16.mxu0 %v950
  %1840 = vmatpush1.bf16.msra.mxu0 %v949
  %1841 = vmatprep.subr.bf16.mxu0 %v954
  %1842 = vmatpush1.bf16.msra.mxu0 %v953
  %1843 = vmatprep.subr.bf16.mxu0 %v958
  %1844 = vmatpush1.bf16.msra.mxu0 %v957
  %1845 = vmatprep.subr.bf16.mxu0 %v962
  %1846 = vmatpush1.bf16.msra.mxu0 %v961
  %1847 = vmatprep.subr.bf16.mxu0 %v966
  %1848 = vmatpush1.bf16.msra.mxu0 %v965
  %1849 = vmatprep.subr.bf16.mxu0 %v970
  %1850 = vmatpush1.bf16.msra.mxu0 %v969
  %1851 = vmatprep.subr.bf16.mxu0 %v974
  %1852 = vmatpush1.bf16.msra.mxu0 %v973
  %1853 = vmatprep.subr.bf16.mxu0 %v978
  %1854 = vmatpush1.bf16.msra.mxu0 %v977
  %1855 = vmatprep.subr.bf16.mxu0 0
  %1856 = vmatpush1.bf16.msra.mxu0 0
  %1857 = vmatprep.subr.bf16.mxu0 0
  %1858 = vmatpush1.bf16.msra.mxu0 0
  %1859 = vmatprep.subr.bf16.mxu0 0
  %1860 = vmatpush1.bf16.msra.mxu0 0
  %1861 = vmatprep.subr.bf16.mxu0 0
  %1862 = vmatpush1.bf16.msra.mxu0 0
  %1863 = vmatprep.subr.bf16.mxu0 0
  %1864 = vmatpush1.bf16.msra.mxu0 0
  %1865 = vmatprep.subr.bf16.mxu0 0
  %1866 = vmatpush1.bf16.msra.mxu0 0
  %1867 = vmatprep.subr.bf16.mxu0 0
  %1868 = vmatpush1.bf16.msra.mxu0 0
  %1869 = vmatprep.subr.bf16.mxu0 0
  %1870 = vmatpush1.bf16.msra.mxu0 0
  %1871 = vmatprep.mubr.bf16.mxu0 0
  %1872 = vmatmul.mubr.bf16.gmra.mrb[0].mxu0 %v1684
  %v1873 = vpop.f32.mrb[0].mxu0
  %v1874 = vadd.f32 0.0, %v1873
  %v1875 = vpop.f32.mrb[0].mxu0
  %v1876 = vadd.f32 0.0, %v1875
  %v1877 = vpop.f32.mrb[0].mxu0
  %v1878 = vpop.f32.mrb[0].mxu0
  %1879 = vdwg.mxu0
  %1880 = vmatprep.subr.bf16.mxu0 %v1190
  %1881 = vmatpush1.bf16.msra.mxu0 %v1189
  %1882 = vmatprep.subr.bf16.mxu0 %v1194
  %1883 = vmatpush1.bf16.msra.mxu0 %v1193
  %1884 = vmatprep.subr.bf16.mxu0 %v1198
  %1885 = vmatpush1.bf16.msra.mxu0 %v1197
  %1886 = vmatprep.subr.bf16.mxu0 %v1202
  %1887 = vmatpush1.bf16.msra.mxu0 %v1201
  %1888 = vmatprep.subr.bf16.mxu0 %v1206
  %1889 = vmatpush1.bf16.msra.mxu0 %v1205
  %1890 = vmatprep.subr.bf16.mxu0 %v1210
  %1891 = vmatpush1.bf16.msra.mxu0 %v1209
  %1892 = vmatprep.subr.bf16.mxu0 %v1214
  %1893 = vmatpush1.bf16.msra.mxu0 %v1213
  %1894 = vmatprep.subr.bf16.mxu0 %v1218
  %1895 = vmatpush1.bf16.msra.mxu0 %v1217
  %1896 = vmatprep.subr.bf16.mxu0 0
  %1897 = vmatpush1.bf16.msra.mxu0 0
  %1898 = vmatprep.subr.bf16.mxu0 0
  %1899 = vmatpush1.bf16.msra.mxu0 0
  %1900 = vmatprep.subr.bf16.mxu0 0
  %1901 = vmatpush1.bf16.msra.mxu0 0
  %1902 = vmatprep.subr.bf16.mxu0 0
  %1903 = vmatpush1.bf16.msra.mxu0 0
  %1904 = vmatprep.subr.bf16.mxu0 0
  %1905 = vmatpush1.bf16.msra.mxu0 0
  %1906 = vmatprep.subr.bf16.mxu0 0
  %1907 = vmatpush1.bf16.msra.mxu0 0
  %1908 = vmatprep.subr.bf16.mxu0 0
  %1909 = vmatpush1.bf16.msra.mxu0 0
  %1910 = vmatprep.subr.bf16.mxu0 0
  %1911 = vmatpush1.bf16.msra.mxu0 0
  %1912 = vmatprep.mubr.bf16.mxu0 0
  %1913 = vmatmul.mubr.bf16.gmra.mrb[0].mxu0 %v1797
  %v1914 = vpop.f32.mrb[0].mxu0
  %v1915 = vadd.f32 %v1833, %v1914
  %v1916 = vpop.f32.mrb[0].mxu0
  %v1917 = vadd.f32 %v1835, %v1916
  %v1918 = vpop.f32.mrb[0].mxu0
  %v1919 = vpop.f32.mrb[0].mxu0
  %1920 = vdwg.mxu0
  %1921 = vmatprep.subr.bf16.mxu0 %v1192
  %1922 = vmatpush1.bf16.msra.mxu0 %v1191
  %1923 = vmatprep.subr.bf16.mxu0 %v1196
  %1924 = vmatpush1.bf16.msra.mxu0 %v1195
  %1925 = vmatprep.subr.bf16.mxu0 %v1200
  %1926 = vmatpush1.bf16.msra.mxu0 %v1199
  %1927 = vmatprep.subr.bf16.mxu0 %v1204
  %1928 = vmatpush1.bf16.msra.mxu0 %v1203
  %1929 = vmatprep.subr.bf16.mxu0 %v1208
  %1930 = vmatpush1.bf16.msra.mxu0 %v1207
  %1931 = vmatprep.subr.bf16.mxu0 %v1212
  %1932 = vmatpush1.bf16.msra.mxu0 %v1211
  %1933 = vmatprep.subr.bf16.mxu0 %v1216
  %1934 = vmatpush1.bf16.msra.mxu0 %v1215
  %1935 = vmatprep.subr.bf16.mxu0 %v1220
  %1936 = vmatpush1.bf16.msra.mxu0 %v1219
  %1937 = vmatprep.subr.bf16.mxu0 0
  %1938 = vmatpush1.bf16.msra.mxu0 0
  %1939 = vmatprep.subr.bf16.mxu0 0
  %1940 = vmatpush1.bf16.msra.mxu0 0
  %1941 = vmatprep.subr.bf16.mxu0 0
  %1942 = vmatpush1.bf16.msra.mxu0 0
  %1943 = vmatprep.subr.bf16.mxu0 0
  %1944 = vmatpush1.bf16.msra.mxu0 0
  %1945 = vmatprep.subr.bf16.mxu0 0
  %1946 = vmatpush1.bf16.msra.mxu0 0
  %1947 = vmatprep.subr.bf16.mxu0 0
  %1948 = vmatpush1.bf16.msra.mxu0 0
  %1949 = vmatprep.subr.bf16.mxu0 0
  %1950 = vmatpush1.bf16.msra.mxu0 0
  %1951 = vmatprep.subr.bf16.mxu0 0
  %1952 = vmatpush1.bf16.msra.mxu0 0
  %1953 = vmatprep.mubr.bf16.mxu0 0
  %1954 = vmatmul.mubr.bf16.gmra.mrb[0].mxu0 %v1797
  %v1955 = vpop.f32.mrb[0].mxu0
  %v1956 = vadd.f32 %v1874, %v1955
  %v1957 = vpop.f32.mrb[0].mxu0
  %v1958 = vadd.f32 %v1876, %v1957
  %v1959 = vpop.f32.mrb[0].mxu0
  %v1960 = vpop.f32.mrb[0].mxu0
  %1961 = vdwg.mxu0
  %v1962 = vadd.f32 %v1915, %v1339
  %v1963 = vadd.f32 %v1917, %v1343
  %v1964 = vadd.f32 %v1956, %v1347
  %v1965 = vadd.f32 %v1958, %v1351
  %v1966 = vmul.f32 %v1962, %v571
  %v1967 = vmul.f32 %v1963, %v572
  %v1968 = vmul.f32 %v1964, %v573
  %v1969 = vmul.f32 %v1965, %v574
  %v1970 = vtanh.pop %v1966
  %v1971 = vtanh.pop %v1967
  %v1972 = vtanh.pop %v1968
  %v1973 = vtanh.pop %v1969
  %v1974 = vmul.f32 %v1970, %v571
  %v1975 = vmul.f32 %v1971, %v572
  %v1976 = vmul.f32 %v1972, %v573
  %v1977 = vmul.f32 %v1973, %v574
  %v1978 = vadd.f32 %v1974, %v575
  %v1979 = vadd.f32 %v1975, %v576
  %v1980 = vadd.f32 %v1976, %v577
  %v1981 = vadd.f32 %v1977, %v578
  %v1982 = vmul.f32 %v1979, %v1681
  %v1983 = vmul.f32 %v1978, %v1980
  %v1984 = vadd.f32 %v1982, %v1983
  %v1985 = vtanh.pop %v1984
  %v1986 = vmul.f32 %v1981, %v1985
  %v1987 = vpack.c.bf16 %v1986, %v1986
  %1988 = vmatprep.subr.bf16.mxu0 %v676
  %1989 = vmatpush1.bf16.msra.mxu0 %v675
  %1990 = vmatprep.subr.bf16.mxu0 %v680
  %1991 = vmatpush1.bf16.msra.mxu0 %v679
  %1992 = vmatprep.subr.bf16.mxu0 %v684
  %1993 = vmatpush1.bf16.msra.mxu0 %v683
  %1994 = vmatprep.subr.bf16.mxu0 %v688
  %1995 = vmatpush1.bf16.msra.mxu0 %v687
  %1996 = vmatprep.subr.bf16.mxu0 %v692
  %1997 = vmatpush1.bf16.msra.mxu0 %v691
  %1998 = vmatprep.subr.bf16.mxu0 %v696
  %1999 = vmatpush1.bf16.msra.mxu0 %v695
  %2000 = vmatprep.subr.bf16.mxu0 %v700
  %2001 = vmatpush1.bf16.msra.mxu0 %v699
  %2002 = vmatprep.subr.bf16.mxu0 %v704
  %2003 = vmatpush1.bf16.msra.mxu0 %v703
  %2004 = vmatprep.subr.bf16.mxu0 0
  %2005 = vmatpush1.bf16.msra.mxu0 0
  %2006 = vmatprep.subr.bf16.mxu0 0
  %2007 = vmatpush1.bf16.msra.mxu0 0
  %2008 = vmatprep.subr.bf16.mxu0 0
  %2009 = vmatpush1.bf16.msra.mxu0 0
  %2010 = vmatprep.subr.bf16.mxu0 0
  %2011 = vmatpush1.bf16.msra.mxu0 0
  %2012 = vmatprep.subr.bf16.mxu0 0
  %2013 = vmatpush1.bf16.msra.mxu0 0
  %2014 = vmatprep.subr.bf16.mxu0 0
  %2015 = vmatpush1.bf16.msra.mxu0 0
  %2016 = vmatprep.subr.bf16.mxu0 0
  %2017 = vmatpush1.bf16.msra.mxu0 0
  %2018 = vmatprep.subr.bf16.mxu0 0
  %2019 = vmatpush1.bf16.msra.mxu0 0
  %2020 = vmatprep.mubr.bf16.mxu0 0
  %2021 = vmatmul.mubr.bf16.gmra.mrb[0].mxu0 %v1797
  %v2022 = vpop.f32.mrb[0].mxu0
  %v2023 = vadd.f32 0.0, %v2022
  %v2024 = vpop.f32.mrb[0].mxu0
  %v2025 = vadd.f32 0.0, %v2024
  %v2026 = vpop.f32.mrb[0].mxu0
  %v2027 = vpop.f32.mrb[0].mxu0
  %2028 = vdwg.mxu0
  %2029 = vmatprep.subr.bf16.mxu0 %v678
  %2030 = vmatpush1.bf16.msra.mxu0 %v677
  %2031 = vmatprep.subr.bf16.mxu0 %v682
  %2032 = vmatpush1.bf16.msra.mxu0 %v681
  %2033 = vmatprep.subr.bf16.mxu0 %v686
  %2034 = vmatpush1.bf16.msra.mxu0 %v685
  %2035 = vmatprep.subr.bf16.mxu0 %v690
  %2036 = vmatpush1.bf16.msra.mxu0 %v689
  %2037 = vmatprep.subr.bf16.mxu0 %v694
  %2038 = vmatpush1.bf16.msra.mxu0 %v693
  %2039 = vmatprep.subr.bf16.mxu0 %v698
  %2040 = vmatpush1.bf16.msra.mxu0 %v697
  %2041 = vmatprep.subr.bf16.mxu0 %v702
  %2042 = vmatpush1.bf16.msra.mxu0 %v701
  %2043 = vmatprep.subr.bf16.mxu0 %v706
  %2044 = vmatpush1.bf16.msra.mxu0 %v705
  %2045 = vmatprep.subr.bf16.mxu0 0
  %2046 = vmatpush1.bf16.msra.mxu0 0
  %2047 = vmatprep.subr.bf16.mxu0 0
  %2048 = vmatpush1.bf16.msra.mxu0 0
  %2049 = vmatprep.subr.bf16.mxu0 0
  %2050 = vmatpush1.bf16.msra.mxu0 0
  %2051 = vmatprep.subr.bf16.mxu0 0
  %2052 = vmatpush1.bf16.msra.mxu0 0
  %2053 = vmatprep.subr.bf16.mxu0 0
  %2054 = vmatpush1.bf16.msra.mxu0 0
  %2055 = vmatprep.subr.bf16.mxu0 0
  %2056 = vmatpush1.bf16.msra.mxu0 0
  %2057 = vmatprep.subr.bf16.mxu0 0
  %2058 = vmatpush1.bf16.msra.mxu0 0
  %2059 = vmatprep.subr.bf16.mxu0 0
  %2060 = vmatpush1.bf16.msra.mxu0 0
  %2061 = vmatprep.mubr.bf16.mxu0 0
  %2062 = vmatmul.mubr.bf16.gmra.mrb[0].mxu0 %v1797
  %v2063 = vpop.f32.mrb[0].mxu0
  %v2064 = vadd.f32 0.0, %v2063
  %v2065 = vpop.f32.mrb[0].mxu0
  %v2066 = vadd.f32 0.0, %v2065
  %v2067 = vpop.f32.mrb[0].mxu0
  %v2068 = vpop.f32.mrb[0].mxu0
  %2069 = vdwg.mxu0
  %s2070 = scalar_lea.vmem [#allocation2], 96
  %v2071 = vld [vmem:[%s2070] sm:$0xff]
  %v2072 = vld [vmem:[%s2070 + $0x8] sm:$0xff]
  %v2073 = vld [vmem:[%s2070 + $0x10] sm:$0xff]
  %v2074 = vld [vmem:[%s2070 + $0x18] sm:$0xff]
  %v2075 = vadd.f32 %v2071, %v2023
  %v2076 = vadd.f32 %v2072, %v2025
  %v2077 = vadd.f32 %v2073, %v2064
  %v2078 = vadd.f32 %v2074, %v2066
  %v2079 = vmul.f32 %v2075, %v571
  %v2080 = vmul.f32 %v2076, %v572
  %v2081 = vmul.f32 %v2077, %v573
  %v2082 = vmul.f32 %v2078, %v574
  %v2083 = vtanh.pop %v2079
  %v2084 = vtanh.pop %v2080
  %v2085 = vtanh.pop %v2081
  %v2086 = vtanh.pop %v2082
  %v2087 = vmul.f32 %v2083, %v571
  %v2088 = vmul.f32 %v2084, %v572
  %v2089 = vmul.f32 %v2085, %v573
  %v2090 = vmul.f32 %v2086, %v574
  %v2091 = vadd.f32 %v2087, %v575
  %v2092 = vadd.f32 %v2088, %v576
  %v2093 = vadd.f32 %v2089, %v577
  %v2094 = vadd.f32 %v2090, %v578
  %v2095 = vmul.f32 %v2092, %v1794
  %v2096 = vmul.f32 %v2091, %v2093
  %v2097 = vadd.f32 %v2095, %v2096
  %v2098 = vtanh.pop %v2097
  %v2099 = vmul.f32 %v2094, %v2098
  %v2100 = vpack.c.bf16 %v2099, %v2099
  %2101 = vmatprep.subr.bf16.mxu0 %v948
  %2102 = vmatpush1.bf16.msra.mxu0 %v947
  %2103 = vmatprep.subr.bf16.mxu0 %v952
  %2104 = vmatpush1.bf16.msra.mxu0 %v951
  %2105 = vmatprep.subr.bf16.mxu0 %v956
  %2106 = vmatpush1.bf16.msra.mxu0 %v955
  %2107 = vmatprep.subr.bf16.mxu0 %v960
  %2108 = vmatpush1.bf16.msra.mxu0 %v959
  %2109 = vmatprep.subr.bf16.mxu0 %v964
  %2110 = vmatpush1.bf16.msra.mxu0 %v963
  %2111 = vmatprep.subr.bf16.mxu0 %v968
  %2112 = vmatpush1.bf16.msra.mxu0 %v967
  %2113 = vmatprep.subr.bf16.mxu0 %v972
  %2114 = vmatpush1.bf16.msra.mxu0 %v971
  %2115 = vmatprep.subr.bf16.mxu0 %v976
  %2116 = vmatpush1.bf16.msra.mxu0 %v975
  %2117 = vmatprep.subr.bf16.mxu0 0
  %2118 = vmatpush1.bf16.msra.mxu0 0
  %2119 = vmatprep.subr.bf16.mxu0 0
  %2120 = vmatpush1.bf16.msra.mxu0 0
  %2121 = vmatprep.subr.bf16.mxu0 0
  %2122 = vmatpush1.bf16.msra.mxu0 0
  %2123 = vmatprep.subr.bf16.mxu0 0
  %2124 = vmatpush1.bf16.msra.mxu0 0
  %2125 = vmatprep.subr.bf16.mxu0 0
  %2126 = vmatpush1.bf16.msra.mxu0 0
  %2127 = vmatprep.subr.bf16.mxu0 0
  %2128 = vmatpush1.bf16.msra.mxu0 0
  %2129 = vmatprep.subr.bf16.mxu0 0
  %2130 = vmatpush1.bf16.msra.mxu0 0
  %2131 = vmatprep.subr.bf16.mxu0 0
  %2132 = vmatpush1.bf16.msra.mxu0 0
  %2133 = vmatprep.mubr.bf16.mxu0 0
  %2134 = vmatmul.mubr.bf16.gmra.mrb[0].mxu0 %v1987
  %v2135 = vpop.f32.mrb[0].mxu0
  %v2136 = vadd.f32 0.0, %v2135
  %v2137 = vpop.f32.mrb[0].mxu0
  %v2138 = vadd.f32 0.0, %v2137
  %v2139 = vpop.f32.mrb[0].mxu0
  %v2140 = vpop.f32.mrb[0].mxu0
  %2141 = vdwg.mxu0
  %2142 = vmatprep.subr.bf16.mxu0 %v950
  %2143 = vmatpush1.bf16.msra.mxu0 %v949
  %2144 = vmatprep.subr.bf16.mxu0 %v954
  %2145 = vmatpush1.bf16.msra.mxu0 %v953
  %2146 = vmatprep.subr.bf16.mxu0 %v958
  %2147 = vmatpush1.bf16.msra.mxu0 %v957
  %2148 = vmatprep.subr.bf16.mxu0 %v962
  %2149 = vmatpush1.bf16.msra.mxu0 %v961
  %2150 = vmatprep.subr.bf16.mxu0 %v966
  %2151 = vmatpush1.bf16.msra.mxu0 %v965
  %2152 = vmatprep.subr.bf16.mxu0 %v970
  %2153 = vmatpush1.bf16.msra.mxu0 %v969
  %2154 = vmatprep.subr.bf16.mxu0 %v974
  %2155 = vmatpush1.bf16.msra.mxu0 %v973
  %2156 = vmatprep.subr.bf16.mxu0 %v978
  %2157 = vmatpush1.bf16.msra.mxu0 %v977
  %2158 = vmatprep.subr.bf16.mxu0 0
  %2159 = vmatpush1.bf16.msra.mxu0 0
  %2160 = vmatprep.subr.bf16.mxu0 0
  %2161 = vmatpush1.bf16.msra.mxu0 0
  %2162 = vmatprep.subr.bf16.mxu0 0
  %2163 = vmatpush1.bf16.msra.mxu0 0
  %2164 = vmatprep.subr.bf16.mxu0 0
  %2165 = vmatpush1.bf16.msra.mxu0 0
  %2166 = vmatprep.subr.bf16.mxu0 0
  %2167 = vmatpush1.bf16.msra.mxu0 0
  %2168 = vmatprep.subr.bf16.mxu0 0
  %2169 = vmatpush1.bf16.msra.mxu0 0
  %2170 = vmatprep.subr.bf16.mxu0 0
  %2171 = vmatpush1.bf16.msra.mxu0 0
  %2172 = vmatprep.subr.bf16.mxu0 0
  %2173 = vmatpush1.bf16.msra.mxu0 0
  %2174 = vmatprep.mubr.bf16.mxu0 0
  %2175 = vmatmul.mubr.bf16.gmra.mrb[0].mxu0 %v1987
  %v2176 = vpop.f32.mrb[0].mxu0
  %v2177 = vadd.f32 0.0, %v2176
  %v2178 = vpop.f32.mrb[0].mxu0
  %v2179 = vadd.f32 0.0, %v2178
  %v2180 = vpop.f32.mrb[0].mxu0
  %v2181 = vpop.f32.mrb[0].mxu0
  %2182 = vdwg.mxu0
  %2183 = vmatprep.subr.bf16.mxu0 %v1190
  %2184 = vmatpush1.bf16.msra.mxu0 %v1189
  %2185 = vmatprep.subr.bf16.mxu0 %v1194
  %2186 = vmatpush1.bf16.msra.mxu0 %v1193
  %2187 = vmatprep.subr.bf16.mxu0 %v1198
  %2188 = vmatpush1.bf16.msra.mxu0 %v1197
  %2189 = vmatprep.subr.bf16.mxu0 %v1202
  %2190 = vmatpush1.bf16.msra.mxu0 %v1201
  %2191 = vmatprep.subr.bf16.mxu0 %v1206
  %2192 = vmatpush1.bf16.msra.mxu0 %v1205
  %2193 = vmatprep.subr.bf16.mxu0 %v1210
  %2194 = vmatpush1.bf16.msra.mxu0 %v1209
  %2195 = vmatprep.subr.bf16.mxu0 %v1214
  %2196 = vmatpush1.bf16.msra.mxu0 %v1213
  %2197 = vmatprep.subr.bf16.mxu0 %v1218
  %2198 = vmatpush1.bf16.msra.mxu0 %v1217
  %2199 = vmatprep.subr.bf16.mxu0 0
  %2200 = vmatpush1.bf16.msra.mxu0 0
  %2201 = vmatprep.subr.bf16.mxu0 0
  %2202 = vmatpush1.bf16.msra.mxu0 0
  %2203 = vmatprep.subr.bf16.mxu0 0
  %2204 = vmatpush1.bf16.msra.mxu0 0
  %2205 = vmatprep.subr.bf16.mxu0 0
  %2206 = vmatpush1.bf16.msra.mxu0 0
  %2207 = vmatprep.subr.bf16.mxu0 0
  %2208 = vmatpush1.bf16.msra.mxu0 0
  %2209 = vmatprep.subr.bf16.mxu0 0
  %2210 = vmatpush1.bf16.msra.mxu0 0
  %2211 = vmatprep.subr.bf16.mxu0 0
  %2212 = vmatpush1.bf16.msra.mxu0 0
  %2213 = vmatprep.subr.bf16.mxu0 0
  %2214 = vmatpush1.bf16.msra.mxu0 0
  %2215 = vmatprep.mubr.bf16.mxu0 0
  %2216 = vmatmul.mubr.bf16.gmra.mrb[0].mxu0 %v2100
  %v2217 = vpop.f32.mrb[0].mxu0
  %v2218 = vadd.f32 %v2136, %v2217
  %v2219 = vpop.f32.mrb[0].mxu0
  %v2220 = vadd.f32 %v2138, %v2219
  %v2221 = vpop.f32.mrb[0].mxu0
  %v2222 = vpop.f32.mrb[0].mxu0
  %2223 = vdwg.mxu0
  %2224 = vmatprep.subr.bf16.mxu0 %v1192
  %2225 = vmatpush1.bf16.msra.mxu0 %v1191
  %2226 = vmatprep.subr.bf16.mxu0 %v1196
  %2227 = vmatpush1.bf16.msra.mxu0 %v1195
  %2228 = vmatprep.subr.bf16.mxu0 %v1200
  %2229 = vmatpush1.bf16.msra.mxu0 %v1199
  %2230 = vmatprep.subr.bf16.mxu0 %v1204
  %2231 = vmatpush1.bf16.msra.mxu0 %v1203
  %2232 = vmatprep.subr.bf16.mxu0 %v1208
  %2233 = vmatpush1.bf16.msra.mxu0 %v1207
  %2234 = vmatprep.subr.bf16.mxu0 %v1212
  %2235 = vmatpush1.bf16.msra.mxu0 %v1211
  %2236 = vmatprep.subr.bf16.mxu0 %v1216
  %2237 = vmatpush1.bf16.msra.mxu0 %v1215
  %2238 = vmatprep.subr.bf16.mxu0 %v1220
  %2239 = vmatpush1.bf16.msra.mxu0 %v1219
  %2240 = vmatprep.subr.bf16.mxu0 0
  %2241 = vmatpush1.bf16.msra.mxu0 0
  %2242 = vmatprep.subr.bf16.mxu0 0
  %2243 = vmatpush1.bf16.msra.mxu0 0
  %2244 = vmatprep.subr.bf16.mxu0 0
  %2245 = vmatpush1.bf16.msra.mxu0 0
  %2246 = vmatprep.subr.bf16.mxu0 0
  %2247 = vmatpush1.bf16.msra.mxu0 0
  %2248 = vmatprep.subr.bf16.mxu0 0
  %2249 = vmatpush1.bf16.msra.mxu0 0
  %2250 = vmatprep.subr.bf16.mxu0 0
  %2251 = vmatpush1.bf16.msra.mxu0 0
  %2252 = vmatprep.subr.bf16.mxu0 0
  %2253 = vmatpush1.bf16.msra.mxu0 0
  %2254 = vmatprep.subr.bf16.mxu0 0
  %2255 = vmatpush1.bf16.msra.mxu0 0
  %2256 = vmatprep.mubr.bf16.mxu0 0
  %2257 = vmatmul.mubr.bf16.gmra.mrb[0].mxu0 %v2100
  %v2258 = vpop.f32.mrb[0].mxu0
  %v2259 = vadd.f32 %v2177, %v2258
  %v2260 = vpop.f32.mrb[0].mxu0
  %v2261 = vadd.f32 %v2179, %v2260
  %v2262 = vpop.f32.mrb[0].mxu0
  %v2263 = vpop.f32.mrb[0].mxu0
  %2264 = vdwg.mxu0
  %v2265 = vadd.f32 %v2218, %v1339
  %v2266 = vadd.f32 %v2220, %v1343
  %v2267 = vadd.f32 %v2259, %v1347
  %v2268 = vadd.f32 %v2261, %v1351
  %v2269 = vmul.f32 %v2265, %v571
  %v2270 = vmul.f32 %v2266, %v572
  %v2271 = vmul.f32 %v2267, %v573
  %v2272 = vmul.f32 %v2268, %v574
  %v2273 = vtanh.pop %v2269
  %v2274 = vtanh.pop %v2270
  %v2275 = vtanh.pop %v2271
  %v2276 = vtanh.pop %v2272
  %v2277 = vmul.f32 %v2273, %v571
  %v2278 = vmul.f32 %v2274, %v572
  %v2279 = vmul.f32 %v2275, %v573
  %v2280 = vmul.f32 %v2276, %v574
  %v2281 = vadd.f32 %v2277, %v575
  %v2282 = vadd.f32 %v2278, %v576
  %v2283 = vadd.f32 %v2279, %v577
  %v2284 = vadd.f32 %v2280, %v578
  %v2285 = vmul.f32 %v2282, %v1984
  %v2286 = vmul.f32 %v2281, %v2283
  %v2287 = vadd.f32 %v2285, %v2286
  %v2288 = vtanh.pop %v2287
  %v2289 = vmul.f32 %v2284, %v2288
  %v2290 = vpack.c.bf16 %v2289, %v2289
  %2291 = vmatprep.subr.bf16.mxu0 %v676
  %2292 = vmatpush1.bf16.msra.mxu0 %v675
  %2293 = vmatprep.subr.bf16.mxu0 %v680
  %2294 = vmatpush1.bf16.msra.mxu0 %v679
  %2295 = vmatprep.subr.bf16.mxu0 %v684
  %2296 = vmatpush1.bf16.msra.mxu0 %v683
  %2297 = vmatprep.subr.bf16.mxu0 %v688
  %2298 = vmatpush1.bf16.msra.mxu0 %v687
  %2299 = vmatprep.subr.bf16.mxu0 %v692
  %2300 = vmatpush1.bf16.msra.mxu0 %v691
  %2301 = vmatprep.subr.bf16.mxu0 %v696
  %2302 = vmatpush1.bf16.msra.mxu0 %v695
  %2303 = vmatprep.subr.bf16.mxu0 %v700
  %2304 = vmatpush1.bf16.msra.mxu0 %v699
  %2305 = vmatprep.subr.bf16.mxu0 %v704
  %2306 = vmatpush1.bf16.msra.mxu0 %v703
  %2307 = vmatprep.subr.bf16.mxu0 0
  %2308 = vmatpush1.bf16.msra.mxu0 0
  %2309 = vmatprep.subr.bf16.mxu0 0
  %2310 = vmatpush1.bf16.msra.mxu0 0
  %2311 = vmatprep.subr.bf16.mxu0 0
  %2312 = vmatpush1.bf16.msra.mxu0 0
  %2313 = vmatprep.subr.bf16.mxu0 0
  %2314 = vmatpush1.bf16.msra.mxu0 0
  %2315 = vmatprep.subr.bf16.mxu0 0
  %2316 = vmatpush1.bf16.msra.mxu0 0
  %2317 = vmatprep.subr.bf16.mxu0 0
  %2318 = vmatpush1.bf16.msra.mxu0 0
  %2319 = vmatprep.subr.bf16.mxu0 0
  %2320 = vmatpush1.bf16.msra.mxu0 0
  %2321 = vmatprep.subr.bf16.mxu0 0
  %2322 = vmatpush1.bf16.msra.mxu0 0
  %2323 = vmatprep.mubr.bf16.mxu0 0
  %2324 = vmatmul.mubr.bf16.gmra.mrb[0].mxu0 %v2100
  %v2325 = vpop.f32.mrb[0].mxu0
  %v2326 = vadd.f32 0.0, %v2325
  %v2327 = vpop.f32.mrb[0].mxu0
  %v2328 = vadd.f32 0.0, %v2327
  %v2329 = vpop.f32.mrb[0].mxu0
  %v2330 = vpop.f32.mrb[0].mxu0
  %2331 = vdwg.mxu0
  %2332 = vmatprep.subr.bf16.mxu0 %v678
  %2333 = vmatpush1.bf16.msra.mxu0 %v677
  %2334 = vmatprep.subr.bf16.mxu0 %v682
  %2335 = vmatpush1.bf16.msra.mxu0 %v681
  %2336 = vmatprep.subr.bf16.mxu0 %v686
  %2337 = vmatpush1.bf16.msra.mxu0 %v685
  %2338 = vmatprep.subr.bf16.mxu0 %v690
  %2339 = vmatpush1.bf16.msra.mxu0 %v689
  %2340 = vmatprep.subr.bf16.mxu0 %v694
  %2341 = vmatpush1.bf16.msra.mxu0 %v693
  %2342 = vmatprep.subr.bf16.mxu0 %v698
  %2343 = vmatpush1.bf16.msra.mxu0 %v697
  %2344 = vmatprep.subr.bf16.mxu0 %v702
  %2345 = vmatpush1.bf16.msra.mxu0 %v701
  %2346 = vmatprep.subr.bf16.mxu0 %v706
  %2347 = vmatpush1.bf16.msra.mxu0 %v705
  %2348 = vmatprep.subr.bf16.mxu0 0
  %2349 = vmatpush1.bf16.msra.mxu0 0
  %2350 = vmatprep.subr.bf16.mxu0 0
  %2351 = vmatpush1.bf16.msra.mxu0 0
  %2352 = vmatprep.subr.bf16.mxu0 0
  %2353 = vmatpush1.bf16.msra.mxu0 0
  %2354 = vmatprep.subr.bf16.mxu0 0
  %2355 = vmatpush1.bf16.msra.mxu0 0
  %2356 = vmatprep.subr.bf16.mxu0 0
  %2357 = vmatpush1.bf16.msra.mxu0 0
  %2358 = vmatprep.subr.bf16.mxu0 0
  %2359 = vmatpush1.bf16.msra.mxu0 0
  %2360 = vmatprep.subr.bf16.mxu0 0
  %2361 = vmatpush1.bf16.msra.mxu0 0
  %2362 = vmatprep.subr.bf16.mxu0 0
  %2363 = vmatpush1.bf16.msra.mxu0 0
  %2364 = vmatprep.mubr.bf16.mxu0 0
  %2365 = vmatmul.mubr.bf16.gmra.mrb[0].mxu0 %v2100
  %v2366 = vpop.f32.mrb[0].mxu0
  %v2367 = vadd.f32 0.0, %v2366
  %v2368 = vpop.f32.mrb[0].mxu0
  %v2369 = vadd.f32 0.0, %v2368
  %v2370 = vpop.f32.mrb[0].mxu0
  %v2371 = vpop.f32.mrb[0].mxu0
  %2372 = vdwg.mxu0
  %s2373 = scalar_lea.vmem [#allocation2], 128
  %v2374 = vld [vmem:[%s2373] sm:$0xff]
  %v2375 = vld [vmem:[%s2373 + $0x8] sm:$0xff]
  %v2376 = vld [vmem:[%s2373 + $0x10] sm:$0xff]
  %v2377 = vld [vmem:[%s2373 + $0x18] sm:$0xff]
  %v2378 = vadd.f32 %v2374, %v2326
  %v2379 = vadd.f32 %v2375, %v2328
  %v2380 = vadd.f32 %v2376, %v2367
  %v2381 = vadd.f32 %v2377, %v2369
  %v2382 = vmul.f32 %v2378, %v571
  %v2383 = vmul.f32 %v2379, %v572
  %v2384 = vmul.f32 %v2380, %v573
  %v2385 = vmul.f32 %v2381, %v574
  %v2386 = vtanh.pop %v2382
  %v2387 = vtanh.pop %v2383
  %v2388 = vtanh.pop %v2384
  %v2389 = vtanh.pop %v2385
  %v2390 = vmul.f32 %v2386, %v571
  %v2391 = vmul.f32 %v2387, %v572
  %v2392 = vmul.f32 %v2388, %v573
  %v2393 = vmul.f32 %v2389, %v574
  %v2394 = vadd.f32 %v2390, %v575
  %v2395 = vadd.f32 %v2391, %v576
  %v2396 = vadd.f32 %v2392, %v577
  %v2397 = vadd.f32 %v2393, %v578
  %v2398 = vmul.f32 %v2395, %v2097
  %v2399 = vmul.f32 %v2394, %v2396
  %v2400 = vadd.f32 %v2398, %v2399
  %v2401 = vtanh.pop %v2400
  %v2402 = vmul.f32 %v2397, %v2401
  %v2403 = vpack.c.bf16 %v2402, %v2402
  %2404 = vmatprep.subr.bf16.mxu0 %v948
  %2405 = vmatpush1.bf16.msra.mxu0 %v947
  %2406 = vmatprep.subr.bf16.mxu0 %v952
  %2407 = vmatpush1.bf16.msra.mxu0 %v951
  %2408 = vmatprep.subr.bf16.mxu0 %v956
  %2409 = vmatpush1.bf16.msra.mxu0 %v955
  %2410 = vmatprep.subr.bf16.mxu0 %v960
  %2411 = vmatpush1.bf16.msra.mxu0 %v959
  %2412 = vmatprep.subr.bf16.mxu0 %v964
  %2413 = vmatpush1.bf16.msra.mxu0 %v963
  %2414 = vmatprep.subr.bf16.mxu0 %v968
  %2415 = vmatpush1.bf16.msra.mxu0 %v967
  %2416 = vmatprep.subr.bf16.mxu0 %v972
  %2417 = vmatpush1.bf16.msra.mxu0 %v971
  %2418 = vmatprep.subr.bf16.mxu0 %v976
  %2419 = vmatpush1.bf16.msra.mxu0 %v975
  %2420 = vmatprep.subr.bf16.mxu0 0
  %2421 = vmatpush1.bf16.msra.mxu0 0
  %2422 = vmatprep.subr.bf16.mxu0 0
  %2423 = vmatpush1.bf16.msra.mxu0 0
  %2424 = vmatprep.subr.bf16.mxu0 0
  %2425 = vmatpush1.bf16.msra.mxu0 0
  %2426 = vmatprep.subr.bf16.mxu0 0
  %2427 = vmatpush1.bf16.msra.mxu0 0
  %2428 = vmatprep.subr.bf16.mxu0 0
  %2429 = vmatpush1.bf16.msra.mxu0 0
  %2430 = vmatprep.subr.bf16.mxu0 0
  %2431 = vmatpush1.bf16.msra.mxu0 0
  %2432 = vmatprep.subr.bf16.mxu0 0
  %2433 = vmatpush1.bf16.msra.mxu0 0
  %2434 = vmatprep.subr.bf16.mxu0 0
  %2435 = vmatpush1.bf16.msra.mxu0 0
  %2436 = vmatprep.mubr.bf16.mxu0 0
  %2437 = vmatmul.mubr.bf16.gmra.mrb[0].mxu0 %v2290
  %v2438 = vpop.f32.mrb[0].mxu0
  %v2439 = vadd.f32 0.0, %v2438
  %v2440 = vpop.f32.mrb[0].mxu0
  %v2441 = vadd.f32 0.0, %v2440
  %v2442 = vpop.f32.mrb[0].mxu0
  %v2443 = vpop.f32.mrb[0].mxu0
  %2444 = vdwg.mxu0
  %2445 = vmatprep.subr.bf16.mxu0 %v950
  %2446 = vmatpush1.bf16.msra.mxu0 %v949
  %2447 = vmatprep.subr.bf16.mxu0 %v954
  %2448 = vmatpush1.bf16.msra.mxu0 %v953
  %2449 = vmatprep.subr.bf16.mxu0 %v958
  %2450 = vmatpush1.bf16.msra.mxu0 %v957
  %2451 = vmatprep.subr.bf16.mxu0 %v962
  %2452 = vmatpush1.bf16.msra.mxu0 %v961
  %2453 = vmatprep.subr.bf16.mxu0 %v966
  %2454 = vmatpush1.bf16.msra.mxu0 %v965
  %2455 = vmatprep.subr.bf16.mxu0 %v970
  %2456 = vmatpush1.bf16.msra.mxu0 %v969
  %2457 = vmatprep.subr.bf16.mxu0 %v974
  %2458 = vmatpush1.bf16.msra.mxu0 %v973
  %2459 = vmatprep.subr.bf16.mxu0 %v978
  %2460 = vmatpush1.bf16.msra.mxu0 %v977
  %2461 = vmatprep.subr.bf16.mxu0 0
  %2462 = vmatpush1.bf16.msra.mxu0 0
  %2463 = vmatprep.subr.bf16.mxu0 0
  %2464 = vmatpush1.bf16.msra.mxu0 0
  %2465 = vmatprep.subr.bf16.mxu0 0
  %2466 = vmatpush1.bf16.msra.mxu0 0
  %2467 = vmatprep.subr.bf16.mxu0 0
  %2468 = vmatpush1.bf16.msra.mxu0 0
  %2469 = vmatprep.subr.bf16.mxu0 0
  %2470 = vmatpush1.bf16.msra.mxu0 0
  %2471 = vmatprep.subr.bf16.mxu0 0
  %2472 = vmatpush1.bf16.msra.mxu0 0
  %2473 = vmatprep.subr.bf16.mxu0 0
  %2474 = vmatpush1.bf16.msra.mxu0 0
  %2475 = vmatprep.subr.bf16.mxu0 0
  %2476 = vmatpush1.bf16.msra.mxu0 0
  %2477 = vmatprep.mubr.bf16.mxu0 0
  %2478 = vmatmul.mubr.bf16.gmra.mrb[0].mxu0 %v2290
  %v2479 = vpop.f32.mrb[0].mxu0
  %v2480 = vadd.f32 0.0, %v2479
  %v2481 = vpop.f32.mrb[0].mxu0
  %v2482 = vadd.f32 0.0, %v2481
  %v2483 = vpop.f32.mrb[0].mxu0
  %v2484 = vpop.f32.mrb[0].mxu0
  %2485 = vdwg.mxu0
  %2486 = vmatprep.subr.bf16.mxu0 %v1190
  %2487 = vmatpush1.bf16.msra.mxu0 %v1189
  %2488 = vmatprep.subr.bf16.mxu0 %v1194
  %2489 = vmatpush1.bf16.msra.mxu0 %v1193
  %2490 = vmatprep.subr.bf16.mxu0 %v1198
  %2491 = vmatpush1.bf16.msra.mxu0 %v1197
  %2492 = vmatprep.subr.bf16.mxu0 %v1202
  %2493 = vmatpush1.bf16.msra.mxu0 %v1201
  %2494 = vmatprep.subr.bf16.mxu0 %v1206
  %2495 = vmatpush1.bf16.msra.mxu0 %v1205
  %2496 = vmatprep.subr.bf16.mxu0 %v1210
  %2497 = vmatpush1.bf16.msra.mxu0 %v1209
  %2498 = vmatprep.subr.bf16.mxu0 %v1214
  %2499 = vmatpush1.bf16.msra.mxu0 %v1213
  %2500 = vmatprep.subr.bf16.mxu0 %v1218
  %2501 = vmatpush1.bf16.msra.mxu0 %v1217
  %2502 = vmatprep.subr.bf16.mxu0 0
  %2503 = vmatpush1.bf16.msra.mxu0 0
  %2504 = vmatprep.subr.bf16.mxu0 0
  %2505 = vmatpush1.bf16.msra.mxu0 0
  %2506 = vmatprep.subr.bf16.mxu0 0
  %2507 = vmatpush1.bf16.msra.mxu0 0
  %2508 = vmatprep.subr.bf16.mxu0 0
  %2509 = vmatpush1.bf16.msra.mxu0 0
  %2510 = vmatprep.subr.bf16.mxu0 0
  %2511 = vmatpush1.bf16.msra.mxu0 0
  %2512 = vmatprep.subr.bf16.mxu0 0
  %2513 = vmatpush1.bf16.msra.mxu0 0
  %2514 = vmatprep.subr.bf16.mxu0 0
  %2515 = vmatpush1.bf16.msra.mxu0 0
  %2516 = vmatprep.subr.bf16.mxu0 0
  %2517 = vmatpush1.bf16.msra.mxu0 0
  %2518 = vmatprep.mubr.bf16.mxu0 0
  %2519 = vmatmul.mubr.bf16.gmra.mrb[0].mxu0 %v2403
  %v2520 = vpop.f32.mrb[0].mxu0
  %v2521 = vadd.f32 %v2439, %v2520
  %v2522 = vpop.f32.mrb[0].mxu0
  %v2523 = vadd.f32 %v2441, %v2522
  %v2524 = vpop.f32.mrb[0].mxu0
  %v2525 = vpop.f32.mrb[0].mxu0
  %2526 = vdwg.mxu0
  %2527 = vmatprep.subr.bf16.mxu0 %v1192
  %2528 = vmatpush1.bf16.msra.mxu0 %v1191
  %2529 = vmatprep.subr.bf16.mxu0 %v1196
  %2530 = vmatpush1.bf16.msra.mxu0 %v1195
  %2531 = vmatprep.subr.bf16.mxu0 %v1200
  %2532 = vmatpush1.bf16.msra.mxu0 %v1199
  %2533 = vmatprep.subr.bf16.mxu0 %v1204
  %2534 = vmatpush1.bf16.msra.mxu0 %v1203
  %2535 = vmatprep.subr.bf16.mxu0 %v1208
  %2536 = vmatpush1.bf16.msra.mxu0 %v1207
  %2537 = vmatprep.subr.bf16.mxu0 %v1212
  %2538 = vmatpush1.bf16.msra.mxu0 %v1211
  %2539 = vmatprep.subr.bf16.mxu0 %v1216
  %2540 = vmatpush1.bf16.msra.mxu0 %v1215
  %2541 = vmatprep.subr.bf16.mxu0 %v1220
  %2542 = vmatpush1.bf16.msra.mxu0 %v1219
  %2543 = vmatprep.subr.bf16.mxu0 0
  %2544 = vmatpush1.bf16.msra.mxu0 0
  %2545 = vmatprep.subr.bf16.mxu0 0
  %2546 = vmatpush1.bf16.msra.mxu0 0
  %2547 = vmatprep.subr.bf16.mxu0 0
  %2548 = vmatpush1.bf16.msra.mxu0 0
  %2549 = vmatprep.subr.bf16.mxu0 0
  %2550 = vmatpush1.bf16.msra.mxu0 0
  %2551 = vmatprep.subr.bf16.mxu0 0
  %2552 = vmatpush1.bf16.msra.mxu0 0
  %2553 = vmatprep.subr.bf16.mxu0 0
  %2554 = vmatpush1.bf16.msra.mxu0 0
  %2555 = vmatprep.subr.bf16.mxu0 0
  %2556 = vmatpush1.bf16.msra.mxu0 0
  %2557 = vmatprep.subr.bf16.mxu0 0
  %2558 = vmatpush1.bf16.msra.mxu0 0
  %2559 = vmatprep.mubr.bf16.mxu0 0
  %2560 = vmatmul.mubr.bf16.gmra.mrb[0].mxu0 %v2403
  %v2561 = vpop.f32.mrb[0].mxu0
  %v2562 = vadd.f32 %v2480, %v2561
  %v2563 = vpop.f32.mrb[0].mxu0
  %v2564 = vadd.f32 %v2482, %v2563
  %v2565 = vpop.f32.mrb[0].mxu0
  %v2566 = vpop.f32.mrb[0].mxu0
  %2567 = vdwg.mxu0
  %v2568 = vadd.f32 %v2521, %v1339
  %v2569 = vadd.f32 %v2523, %v1343
  %v2570 = vadd.f32 %v2562, %v1347
  %v2571 = vadd.f32 %v2564, %v1351
  %v2572 = vmul.f32 %v2568, %v571
  %v2573 = vmul.f32 %v2569, %v572
  %v2574 = vmul.f32 %v2570, %v573
  %v2575 = vmul.f32 %v2571, %v574
  %v2576 = vtanh.pop %v2572
  %v2577 = vtanh.pop %v2573
  %v2578 = vtanh.pop %v2574
  %v2579 = vtanh.pop %v2575
  %v2580 = vmul.f32 %v2576, %v571
  %v2581 = vmul.f32 %v2577, %v572
  %v2582 = vmul.f32 %v2578, %v573
  %v2583 = vmul.f32 %v2579, %v574
  %v2584 = vadd.f32 %v2580, %v575
  %v2585 = vadd.f32 %v2581, %v576
  %v2586 = vadd.f32 %v2582, %v577
  %v2587 = vadd.f32 %v2583, %v578
  %v2588 = vmul.f32 %v2585, %v2287
  %v2589 = vmul.f32 %v2584, %v2586
  %v2590 = vadd.f32 %v2588, %v2589
  %v2591 = vtanh.pop %v2590
  %v2592 = vmul.f32 %v2587, %v2591
  %v2593 = vpack.c.bf16 %v2592, %v2592
  %2594 = vmatprep.subr.bf16.mxu0 %v676
  %2595 = vmatpush1.bf16.msra.mxu0 %v675
  %2596 = vmatprep.subr.bf16.mxu0 %v680
  %2597 = vmatpush1.bf16.msra.mxu0 %v679
  %2598 = vmatprep.subr.bf16.mxu0 %v684
  %2599 = vmatpush1.bf16.msra.mxu0 %v683
  %2600 = vmatprep.subr.bf16.mxu0 %v688
  %2601 = vmatpush1.bf16.msra.mxu0 %v687
  %2602 = vmatprep.subr.bf16.mxu0 %v692
  %2603 = vmatpush1.bf16.msra.mxu0 %v691
  %2604 = vmatprep.subr.bf16.mxu0 %v696
  %2605 = vmatpush1.bf16.msra.mxu0 %v695
  %2606 = vmatprep.subr.bf16.mxu0 %v700
  %2607 = vmatpush1.bf16.msra.mxu0 %v699
  %2608 = vmatprep.subr.bf16.mxu0 %v704
  %2609 = vmatpush1.bf16.msra.mxu0 %v703
  %2610 = vmatprep.subr.bf16.mxu0 0
  %2611 = vmatpush1.bf16.msra.mxu0 0
  %2612 = vmatprep.subr.bf16.mxu0 0
  %2613 = vmatpush1.bf16.msra.mxu0 0
  %2614 = vmatprep.subr.bf16.mxu0 0
  %2615 = vmatpush1.bf16.msra.mxu0 0
  %2616 = vmatprep.subr.bf16.mxu0 0
  %2617 = vmatpush1.bf16.msra.mxu0 0
  %2618 = vmatprep.subr.bf16.mxu0 0
  %2619 = vmatpush1.bf16.msra.mxu0 0
  %2620 = vmatprep.subr.bf16.mxu0 0
  %2621 = vmatpush1.bf16.msra.mxu0 0
  %2622 = vmatprep.subr.bf16.mxu0 0
  %2623 = vmatpush1.bf16.msra.mxu0 0
  %2624 = vmatprep.subr.bf16.mxu0 0
  %2625 = vmatpush1.bf16.msra.mxu0 0
  %2626 = vmatprep.mubr.bf16.mxu0 0
  %2627 = vmatmul.mubr.bf16.gmra.mrb[0].mxu0 %v2403
  %v2628 = vpop.f32.mrb[0].mxu0
  %v2629 = vadd.f32 0.0, %v2628
  %v2630 = vpop.f32.mrb[0].mxu0
  %v2631 = vadd.f32 0.0, %v2630
  %v2632 = vpop.f32.mrb[0].mxu0
  %v2633 = vpop.f32.mrb[0].mxu0
  %2634 = vdwg.mxu0
  %2635 = vmatprep.subr.bf16.mxu0 %v678
  %2636 = vmatpush1.bf16.msra.mxu0 %v677
  %2637 = vmatprep.subr.bf16.mxu0 %v682
  %2638 = vmatpush1.bf16.msra.mxu0 %v681
  %2639 = vmatprep.subr.bf16.mxu0 %v686
  %2640 = vmatpush1.bf16.msra.mxu0 %v685
  %2641 = vmatprep.subr.bf16.mxu0 %v690
  %2642 = vmatpush1.bf16.msra.mxu0 %v689
  %2643 = vmatprep.subr.bf16.mxu0 %v694
  %2644 = vmatpush1.bf16.msra.mxu0 %v693
  %2645 = vmatprep.subr.bf16.mxu0 %v698
  %2646 = vmatpush1.bf16.msra.mxu0 %v697
  %2647 = vmatprep.subr.bf16.mxu0 %v702
  %2648 = vmatpush1.bf16.msra.mxu0 %v701
  %2649 = vmatprep.subr.bf16.mxu0 %v706
  %2650 = vmatpush1.bf16.msra.mxu0 %v705
  %2651 = vmatprep.subr.bf16.mxu0 0
  %2652 = vmatpush1.bf16.msra.mxu0 0
  %2653 = vmatprep.subr.bf16.mxu0 0
  %2654 = vmatpush1.bf16.msra.mxu0 0
  %2655 = vmatprep.subr.bf16.mxu0 0
  %2656 = vmatpush1.bf16.msra.mxu0 0
  %2657 = vmatprep.subr.bf16.mxu0 0
  %2658 = vmatpush1.bf16.msra.mxu0 0
  %2659 = vmatprep.subr.bf16.mxu0 0
  %2660 = vmatpush1.bf16.msra.mxu0 0
  %2661 = vmatprep.subr.bf16.mxu0 0
  %2662 = vmatpush1.bf16.msra.mxu0 0
  %2663 = vmatprep.subr.bf16.mxu0 0
  %2664 = vmatpush1.bf16.msra.mxu0 0
  %2665 = vmatprep.subr.bf16.mxu0 0
  %2666 = vmatpush1.bf16.msra.mxu0 0
  %2667 = vmatprep.mubr.bf16.mxu0 0
  %2668 = vmatmul.mubr.bf16.gmra.mrb[0].mxu0 %v2403
  %v2669 = vpop.f32.mrb[0].mxu0
  %v2670 = vadd.f32 0.0, %v2669
  %v2671 = vpop.f32.mrb[0].mxu0
  %v2672 = vadd.f32 0.0, %v2671
  %v2673 = vpop.f32.mrb[0].mxu0
  %v2674 = vpop.f32.mrb[0].mxu0
  %2675 = vdwg.mxu0
  %s2676 = scalar_lea.vmem [#allocation2], 160
  %v2677 = vld [vmem:[%s2676] sm:$0xff]
  %v2678 = vld [vmem:[%s2676 + $0x8] sm:$0xff]
  %v2679 = vld [vmem:[%s2676 + $0x10] sm:$0xff]
  %v2680 = vld [vmem:[%s2676 + $0x18] sm:$0xff]
  %v2681 = vadd.f32 %v2677, %v2629
  %v2682 = vadd.f32 %v2678, %v2631
  %v2683 = vadd.f32 %v2679, %v2670
  %v2684 = vadd.f32 %v2680, %v2672
  %v2685 = vmul.f32 %v2681, %v571
  %v2686 = vmul.f32 %v2682, %v572
  %v2687 = vmul.f32 %v2683, %v573
  %v2688 = vmul.f32 %v2684, %v574
  %v2689 = vtanh.pop %v2685
  %v2690 = vtanh.pop %v2686
  %v2691 = vtanh.pop %v2687
  %v2692 = vtanh.pop %v2688
  %v2693 = vmul.f32 %v2689, %v571
  %v2694 = vmul.f32 %v2690, %v572
  %v2695 = vmul.f32 %v2691, %v573
  %v2696 = vmul.f32 %v2692, %v574
  %v2697 = vadd.f32 %v2693, %v575
  %v2698 = vadd.f32 %v2694, %v576
  %v2699 = vadd.f32 %v2695, %v577
  %v2700 = vadd.f32 %v2696, %v578
  %v2701 = vmul.f32 %v2698, %v2400
  %v2702 = vmul.f32 %v2697, %v2699
  %v2703 = vadd.f32 %v2701, %v2702
  %v2704 = vtanh.pop %v2703
  %v2705 = vmul.f32 %v2700, %v2704
  %v2706 = vpack.c.bf16 %v2705, %v2705
  %2707 = vmatprep.subr.bf16.mxu0 %v948
  %2708 = vmatpush1.bf16.msra.mxu0 %v947
  %2709 = vmatprep.subr.bf16.mxu0 %v952
  %2710 = vmatpush1.bf16.msra.mxu0 %v951
  %2711 = vmatprep.subr.bf16.mxu0 %v956
  %2712 = vmatpush1.bf16.msra.mxu0 %v955
  %2713 = vmatprep.subr.bf16.mxu0 %v960
  %2714 = vmatpush1.bf16.msra.mxu0 %v959
  %2715 = vmatprep.subr.bf16.mxu0 %v964
  %2716 = vmatpush1.bf16.msra.mxu0 %v963
  %2717 = vmatprep.subr.bf16.mxu0 %v968
  %2718 = vmatpush1.bf16.msra.mxu0 %v967
  %2719 = vmatprep.subr.bf16.mxu0 %v972
  %2720 = vmatpush1.bf16.msra.mxu0 %v971
  %2721 = vmatprep.subr.bf16.mxu0 %v976
  %2722 = vmatpush1.bf16.msra.mxu0 %v975
  %2723 = vmatprep.subr.bf16.mxu0 0
  %2724 = vmatpush1.bf16.msra.mxu0 0
  %2725 = vmatprep.subr.bf16.mxu0 0
  %2726 = vmatpush1.bf16.msra.mxu0 0
  %2727 = vmatprep.subr.bf16.mxu0 0
  %2728 = vmatpush1.bf16.msra.mxu0 0
  %2729 = vmatprep.subr.bf16.mxu0 0
  %2730 = vmatpush1.bf16.msra.mxu0 0
  %2731 = vmatprep.subr.bf16.mxu0 0
  %2732 = vmatpush1.bf16.msra.mxu0 0
  %2733 = vmatprep.subr.bf16.mxu0 0
  %2734 = vmatpush1.bf16.msra.mxu0 0
  %2735 = vmatprep.subr.bf16.mxu0 0
  %2736 = vmatpush1.bf16.msra.mxu0 0
  %2737 = vmatprep.subr.bf16.mxu0 0
  %2738 = vmatpush1.bf16.msra.mxu0 0
  %2739 = vmatprep.mubr.bf16.mxu0 0
  %2740 = vmatmul.mubr.bf16.gmra.mrb[0].mxu0 %v2593
  %v2741 = vpop.f32.mrb[0].mxu0
  %v2742 = vadd.f32 0.0, %v2741
  %v2743 = vpop.f32.mrb[0].mxu0
  %v2744 = vadd.f32 0.0, %v2743
  %v2745 = vpop.f32.mrb[0].mxu0
  %v2746 = vpop.f32.mrb[0].mxu0
  %2747 = vdwg.mxu0
  %2748 = vmatprep.subr.bf16.mxu0 %v950
  %2749 = vmatpush1.bf16.msra.mxu0 %v949
  %2750 = vmatprep.subr.bf16.mxu0 %v954
  %2751 = vmatpush1.bf16.msra.mxu0 %v953
  %2752 = vmatprep.subr.bf16.mxu0 %v958
  %2753 = vmatpush1.bf16.msra.mxu0 %v957
  %2754 = vmatprep.subr.bf16.mxu0 %v962
  %2755 = vmatpush1.bf16.msra.mxu0 %v961
  %2756 = vmatprep.subr.bf16.mxu0 %v966
  %2757 = vmatpush1.bf16.msra.mxu0 %v965
  %2758 = vmatprep.subr.bf16.mxu0 %v970
  %2759 = vmatpush1.bf16.msra.mxu0 %v969
  %2760 = vmatprep.subr.bf16.mxu0 %v974
  %2761 = vmatpush1.bf16.msra.mxu0 %v973
  %2762 = vmatprep.subr.bf16.mxu0 %v978
  %2763 = vmatpush1.bf16.msra.mxu0 %v977
  %2764 = vmatprep.subr.bf16.mxu0 0
  %2765 = vmatpush1.bf16.msra.mxu0 0
  %2766 = vmatprep.subr.bf16.mxu0 0
  %2767 = vmatpush1.bf16.msra.mxu0 0
  %2768 = vmatprep.subr.bf16.mxu0 0
  %2769 = vmatpush1.bf16.msra.mxu0 0
  %2770 = vmatprep.subr.bf16.mxu0 0
  %2771 = vmatpush1.bf16.msra.mxu0 0
  %2772 = vmatprep.subr.bf16.mxu0 0
  %2773 = vmatpush1.bf16.msra.mxu0 0
  %2774 = vmatprep.subr.bf16.mxu0 0
  %2775 = vmatpush1.bf16.msra.mxu0 0
  %2776 = vmatprep.subr.bf16.mxu0 0
  %2777 = vmatpush1.bf16.msra.mxu0 0
  %2778 = vmatprep.subr.bf16.mxu0 0
  %2779 = vmatpush1.bf16.msra.mxu0 0
  %2780 = vmatprep.mubr.bf16.mxu0 0
  %2781 = vmatmul.mubr.bf16.gmra.mrb[0].mxu0 %v2593
  %v2782 = vpop.f32.mrb[0].mxu0
  %v2783 = vadd.f32 0.0, %v2782
  %v2784 = vpop.f32.mrb[0].mxu0
  %v2785 = vadd.f32 0.0, %v2784
  %v2786 = vpop.f32.mrb[0].mxu0
  %v2787 = vpop.f32.mrb[0].mxu0
  %2788 = vdwg.mxu0
  %2789 = vmatprep.subr.bf16.mxu0 %v1190
  %2790 = vmatpush1.bf16.msra.mxu0 %v1189
  %2791 = vmatprep.subr.bf16.mxu0 %v1194
  %2792 = vmatpush1.bf16.msra.mxu0 %v1193
  %2793 = vmatprep.subr.bf16.mxu0 %v1198
  %2794 = vmatpush1.bf16.msra.mxu0 %v1197
  %2795 = vmatprep.subr.bf16.mxu0 %v1202
  %2796 = vmatpush1.bf16.msra.mxu0 %v1201
  %2797 = vmatprep.subr.bf16.mxu0 %v1206
  %2798 = vmatpush1.bf16.msra.mxu0 %v1205
  %2799 = vmatprep.subr.bf16.mxu0 %v1210
  %2800 = vmatpush1.bf16.msra.mxu0 %v1209
  %2801 = vmatprep.subr.bf16.mxu0 %v1214
  %2802 = vmatpush1.bf16.msra.mxu0 %v1213
  %2803 = vmatprep.subr.bf16.mxu0 %v1218
  %2804 = vmatpush1.bf16.msra.mxu0 %v1217
  %2805 = vmatprep.subr.bf16.mxu0 0
  %2806 = vmatpush1.bf16.msra.mxu0 0
  %2807 = vmatprep.subr.bf16.mxu0 0
  %2808 = vmatpush1.bf16.msra.mxu0 0
  %2809 = vmatprep.subr.bf16.mxu0 0
  %2810 = vmatpush1.bf16.msra.mxu0 0
  %2811 = vmatprep.subr.bf16.mxu0 0
  %2812 = vmatpush1.bf16.msra.mxu0 0
  %2813 = vmatprep.subr.bf16.mxu0 0
  %2814 = vmatpush1.bf16.msra.mxu0 0
  %2815 = vmatprep.subr.bf16.mxu0 0
  %2816 = vmatpush1.bf16.msra.mxu0 0
  %2817 = vmatprep.subr.bf16.mxu0 0
  %2818 = vmatpush1.bf16.msra.mxu0 0
  %2819 = vmatprep.subr.bf16.mxu0 0
  %2820 = vmatpush1.bf16.msra.mxu0 0
  %2821 = vmatprep.mubr.bf16.mxu0 0
  %2822 = vmatmul.mubr.bf16.gmra.mrb[0].mxu0 %v2706
  %v2823 = vpop.f32.mrb[0].mxu0
  %v2824 = vadd.f32 %v2742, %v2823
  %v2825 = vpop.f32.mrb[0].mxu0
  %v2826 = vadd.f32 %v2744, %v2825
  %v2827 = vpop.f32.mrb[0].mxu0
  %v2828 = vpop.f32.mrb[0].mxu0
  %2829 = vdwg.mxu0
  %2830 = vmatprep.subr.bf16.mxu0 %v1192
  %2831 = vmatpush1.bf16.msra.mxu0 %v1191
  %2832 = vmatprep.subr.bf16.mxu0 %v1196
  %2833 = vmatpush1.bf16.msra.mxu0 %v1195
  %2834 = vmatprep.subr.bf16.mxu0 %v1200
  %2835 = vmatpush1.bf16.msra.mxu0 %v1199
  %2836 = vmatprep.subr.bf16.mxu0 %v1204
  %2837 = vmatpush1.bf16.msra.mxu0 %v1203
  %2838 = vmatprep.subr.bf16.mxu0 %v1208
  %2839 = vmatpush1.bf16.msra.mxu0 %v1207
  %2840 = vmatprep.subr.bf16.mxu0 %v1212
  %2841 = vmatpush1.bf16.msra.mxu0 %v1211
  %2842 = vmatprep.subr.bf16.mxu0 %v1216
  %2843 = vmatpush1.bf16.msra.mxu0 %v1215
  %2844 = vmatprep.subr.bf16.mxu0 %v1220
  %2845 = vmatpush1.bf16.msra.mxu0 %v1219
  %2846 = vmatprep.subr.bf16.mxu0 0
  %2847 = vmatpush1.bf16.msra.mxu0 0
  %2848 = vmatprep.subr.bf16.mxu0 0
  %2849 = vmatpush1.bf16.msra.mxu0 0
  %2850 = vmatprep.subr.bf16.mxu0 0
  %2851 = vmatpush1.bf16.msra.mxu0 0
  %2852 = vmatprep.subr.bf16.mxu0 0
  %2853 = vmatpush1.bf16.msra.mxu0 0
  %2854 = vmatprep.subr.bf16.mxu0 0
  %2855 = vmatpush1.bf16.msra.mxu0 0
  %2856 = vmatprep.subr.bf16.mxu0 0
  %2857 = vmatpush1.bf16.msra.mxu0 0
  %2858 = vmatprep.subr.bf16.mxu0 0
  %2859 = vmatpush1.bf16.msra.mxu0 0
  %2860 = vmatprep.subr.bf16.mxu0 0
  %2861 = vmatpush1.bf16.msra.mxu0 0
  %2862 = vmatprep.mubr.bf16.mxu0 0
  %2863 = vmatmul.mubr.bf16.gmra.mrb[0].mxu0 %v2706
  %v2864 = vpop.f32.mrb[0].mxu0
  %v2865 = vadd.f32 %v2783, %v2864
  %v2866 = vpop.f32.mrb[0].mxu0
  %v2867 = vadd.f32 %v2785, %v2866
  %v2868 = vpop.f32.mrb[0].mxu0
  %v2869 = vpop.f32.mrb[0].mxu0
  %2870 = vdwg.mxu0
  %v2871 = vadd.f32 %v2824, %v1339
  %v2872 = vadd.f32 %v2826, %v1343
  %v2873 = vadd.f32 %v2865, %v1347
  %v2874 = vadd.f32 %v2867, %v1351
  %v2875 = vmul.f32 %v2871, %v571
  %v2876 = vmul.f32 %v2872, %v572
  %v2877 = vmul.f32 %v2873, %v573
  %v2878 = vmul.f32 %v2874, %v574
  %v2879 = vtanh.pop %v2875
  %v2880 = vtanh.pop %v2876
  %v2881 = vtanh.pop %v2877
  %v2882 = vtanh.pop %v2878
  %v2883 = vmul.f32 %v2879, %v571
  %v2884 = vmul.f32 %v2880, %v572
  %v2885 = vmul.f32 %v2881, %v573
  %v2886 = vmul.f32 %v2882, %v574
  %v2887 = vadd.f32 %v2883, %v575
  %v2888 = vadd.f32 %v2884, %v576
  %v2889 = vadd.f32 %v2885, %v577
  %v2890 = vadd.f32 %v2886, %v578
  %v2891 = vmul.f32 %v2888, %v2590
  %v2892 = vmul.f32 %v2887, %v2889
  %v2893 = vadd.f32 %v2891, %v2892
  %v2894 = vtanh.pop %v2893
  %v2895 = vmul.f32 %v2890, %v2894
  %v2896 = vpack.c.bf16 %v2895, %v2895
  %2897 = vmatprep.subr.bf16.mxu0 %v676
  %2898 = vmatpush1.bf16.msra.mxu0 %v675
  %2899 = vmatprep.subr.bf16.mxu0 %v680
  %2900 = vmatpush1.bf16.msra.mxu0 %v679
  %2901 = vmatprep.subr.bf16.mxu0 %v684
  %2902 = vmatpush1.bf16.msra.mxu0 %v683
  %2903 = vmatprep.subr.bf16.mxu0 %v688
  %2904 = vmatpush1.bf16.msra.mxu0 %v687
  %2905 = vmatprep.subr.bf16.mxu0 %v692
  %2906 = vmatpush1.bf16.msra.mxu0 %v691
  %2907 = vmatprep.subr.bf16.mxu0 %v696
  %2908 = vmatpush1.bf16.msra.mxu0 %v695
  %2909 = vmatprep.subr.bf16.mxu0 %v700
  %2910 = vmatpush1.bf16.msra.mxu0 %v699
  %2911 = vmatprep.subr.bf16.mxu0 %v704
  %2912 = vmatpush1.bf16.msra.mxu0 %v703
  %2913 = vmatprep.subr.bf16.mxu0 0
  %2914 = vmatpush1.bf16.msra.mxu0 0
  %2915 = vmatprep.subr.bf16.mxu0 0
  %2916 = vmatpush1.bf16.msra.mxu0 0
  %2917 = vmatprep.subr.bf16.mxu0 0
  %2918 = vmatpush1.bf16.msra.mxu0 0
  %2919 = vmatprep.subr.bf16.mxu0 0
  %2920 = vmatpush1.bf16.msra.mxu0 0
  %2921 = vmatprep.subr.bf16.mxu0 0
  %2922 = vmatpush1.bf16.msra.mxu0 0
  %2923 = vmatprep.subr.bf16.mxu0 0
  %2924 = vmatpush1.bf16.msra.mxu0 0
  %2925 = vmatprep.subr.bf16.mxu0 0
  %2926 = vmatpush1.bf16.msra.mxu0 0
  %2927 = vmatprep.subr.bf16.mxu0 0
  %2928 = vmatpush1.bf16.msra.mxu0 0
  %2929 = vmatprep.mubr.bf16.mxu0 0
  %2930 = vmatmul.mubr.bf16.gmra.mrb[0].mxu0 %v2706
  %v2931 = vpop.f32.mrb[0].mxu0
  %v2932 = vadd.f32 0.0, %v2931
  %v2933 = vpop.f32.mrb[0].mxu0
  %v2934 = vadd.f32 0.0, %v2933
  %v2935 = vpop.f32.mrb[0].mxu0
  %v2936 = vpop.f32.mrb[0].mxu0
  %2937 = vdwg.mxu0
  %2938 = vmatprep.subr.bf16.mxu0 %v678
  %2939 = vmatpush1.bf16.msra.mxu0 %v677
  %2940 = vmatprep.subr.bf16.mxu0 %v682
  %2941 = vmatpush1.bf16.msra.mxu0 %v681
  %2942 = vmatprep.subr.bf16.mxu0 %v686
  %2943 = vmatpush1.bf16.msra.mxu0 %v685
  %2944 = vmatprep.subr.bf16.mxu0 %v690
  %2945 = vmatpush1.bf16.msra.mxu0 %v689
  %2946 = vmatprep.subr.bf16.mxu0 %v694
  %2947 = vmatpush1.bf16.msra.mxu0 %v693
  %2948 = vmatprep.subr.bf16.mxu0 %v698
  %2949 = vmatpush1.bf16.msra.mxu0 %v697
  %2950 = vmatprep.subr.bf16.mxu0 %v702
  %2951 = vmatpush1.bf16.msra.mxu0 %v701
  %2952 = vmatprep.subr.bf16.mxu0 %v706
  %2953 = vmatpush1.bf16.msra.mxu0 %v705
  %2954 = vmatprep.subr.bf16.mxu0 0
  %2955 = vmatpush1.bf16.msra.mxu0 0
  %2956 = vmatprep.subr.bf16.mxu0 0
  %2957 = vmatpush1.bf16.msra.mxu0 0
  %2958 = vmatprep.subr.bf16.mxu0 0
  %2959 = vmatpush1.bf16.msra.mxu0 0
  %2960 = vmatprep.subr.bf16.mxu0 0
  %2961 = vmatpush1.bf16.msra.mxu0 0
  %2962 = vmatprep.subr.bf16.mxu0 0
  %2963 = vmatpush1.bf16.msra.mxu0 0
  %2964 = vmatprep.subr.bf16.mxu0 0
  %2965 = vmatpush1.bf16.msra.mxu0 0
  %2966 = vmatprep.subr.bf16.mxu0 0
  %2967 = vmatpush1.bf16.msra.mxu0 0
  %2968 = vmatprep.subr.bf16.mxu0 0
  %2969 = vmatpush1.bf16.msra.mxu0 0
  %2970 = vmatprep.mubr.bf16.mxu0 0
  %2971 = vmatmul.mubr.bf16.gmra.mrb[0].mxu0 %v2706
  %v2972 = vpop.f32.mrb[0].mxu0
  %v2973 = vadd.f32 0.0, %v2972
  %v2974 = vpop.f32.mrb[0].mxu0
  %v2975 = vadd.f32 0.0, %v2974
  %v2976 = vpop.f32.mrb[0].mxu0
  %v2977 = vpop.f32.mrb[0].mxu0
  %2978 = vdwg.mxu0
  %s2979 = scalar_lea.vmem [#allocation2], 192
  %v2980 = vld [vmem:[%s2979] sm:$0xff]
  %v2981 = vld [vmem:[%s2979 + $0x8] sm:$0xff]
  %v2982 = vld [vmem:[%s2979 + $0x10] sm:$0xff]
  %v2983 = vld [vmem:[%s2979 + $0x18] sm:$0xff]
  %v2984 = vadd.f32 %v2980, %v2932
  %v2985 = vadd.f32 %v2981, %v2934
  %v2986 = vadd.f32 %v2982, %v2973
  %v2987 = vadd.f32 %v2983, %v2975
  %v2988 = vmul.f32 %v2984, %v571
  %v2989 = vmul.f32 %v2985, %v572
  %v2990 = vmul.f32 %v2986, %v573
  %v2991 = vmul.f32 %v2987, %v574
  %v2992 = vtanh.pop %v2988
  %v2993 = vtanh.pop %v2989
  %v2994 = vtanh.pop %v2990
  %v2995 = vtanh.pop %v2991
  %v2996 = vmul.f32 %v2992, %v571
  %v2997 = vmul.f32 %v2993, %v572
  %v2998 = vmul.f32 %v2994, %v573
  %v2999 = vmul.f32 %v2995, %v574
  %v3000 = vadd.f32 %v2996, %v575
  %v3001 = vadd.f32 %v2997, %v576
  %v3002 = vadd.f32 %v2998, %v577
  %v3003 = vadd.f32 %v2999, %v578
  %v3004 = vmul.f32 %v3001, %v2703
  %v3005 = vmul.f32 %v3000, %v3002
  %v3006 = vadd.f32 %v3004, %v3005
  %v3007 = vtanh.pop %v3006
  %v3008 = vmul.f32 %v3003, %v3007
  %v3009 = vpack.c.bf16 %v3008, %v3008
  %3010 = vmatprep.subr.bf16.mxu0 %v948
  %3011 = vmatpush1.bf16.msra.mxu0 %v947
  %3012 = vmatprep.subr.bf16.mxu0 %v952
  %3013 = vmatpush1.bf16.msra.mxu0 %v951
  %3014 = vmatprep.subr.bf16.mxu0 %v956
  %3015 = vmatpush1.bf16.msra.mxu0 %v955
  %3016 = vmatprep.subr.bf16.mxu0 %v960
  %3017 = vmatpush1.bf16.msra.mxu0 %v959
  %3018 = vmatprep.subr.bf16.mxu0 %v964
  %3019 = vmatpush1.bf16.msra.mxu0 %v963
  %3020 = vmatprep.subr.bf16.mxu0 %v968
  %3021 = vmatpush1.bf16.msra.mxu0 %v967
  %3022 = vmatprep.subr.bf16.mxu0 %v972
  %3023 = vmatpush1.bf16.msra.mxu0 %v971
  %3024 = vmatprep.subr.bf16.mxu0 %v976
  %3025 = vmatpush1.bf16.msra.mxu0 %v975
  %3026 = vmatprep.subr.bf16.mxu0 0
  %3027 = vmatpush1.bf16.msra.mxu0 0
  %3028 = vmatprep.subr.bf16.mxu0 0
  %3029 = vmatpush1.bf16.msra.mxu0 0
  %3030 = vmatprep.subr.bf16.mxu0 0
  %3031 = vmatpush1.bf16.msra.mxu0 0
  %3032 = vmatprep.subr.bf16.mxu0 0
  %3033 = vmatpush1.bf16.msra.mxu0 0
  %3034 = vmatprep.subr.bf16.mxu0 0
  %3035 = vmatpush1.bf16.msra.mxu0 0
  %3036 = vmatprep.subr.bf16.mxu0 0
  %3037 = vmatpush1.bf16.msra.mxu0 0
  %3038 = vmatprep.subr.bf16.mxu0 0
  %3039 = vmatpush1.bf16.msra.mxu0 0
  %3040 = vmatprep.subr.bf16.mxu0 0
  %3041 = vmatpush1.bf16.msra.mxu0 0
  %3042 = vmatprep.mubr.bf16.mxu0 0
  %3043 = vmatmul.mubr.bf16.gmra.mrb[0].mxu0 %v2896
  %v3044 = vpop.f32.mrb[0].mxu0
  %v3045 = vadd.f32 0.0, %v3044
  %v3046 = vpop.f32.mrb[0].mxu0
  %v3047 = vadd.f32 0.0, %v3046
  %v3048 = vpop.f32.mrb[0].mxu0
  %v3049 = vpop.f32.mrb[0].mxu0
  %3050 = vdwg.mxu0
  %3051 = vmatprep.subr.bf16.mxu0 %v950
  %3052 = vmatpush1.bf16.msra.mxu0 %v949
  %3053 = vmatprep.subr.bf16.mxu0 %v954
  %3054 = vmatpush1.bf16.msra.mxu0 %v953
  %3055 = vmatprep.subr.bf16.mxu0 %v958
  %3056 = vmatpush1.bf16.msra.mxu0 %v957
  %3057 = vmatprep.subr.bf16.mxu0 %v962
  %3058 = vmatpush1.bf16.msra.mxu0 %v961
  %3059 = vmatprep.subr.bf16.mxu0 %v966
  %3060 = vmatpush1.bf16.msra.mxu0 %v965
  %3061 = vmatprep.subr.bf16.mxu0 %v970
  %3062 = vmatpush1.bf16.msra.mxu0 %v969
  %3063 = vmatprep.subr.bf16.mxu0 %v974
  %3064 = vmatpush1.bf16.msra.mxu0 %v973
  %3065 = vmatprep.subr.bf16.mxu0 %v978
  %3066 = vmatpush1.bf16.msra.mxu0 %v977
  %3067 = vmatprep.subr.bf16.mxu0 0
  %3068 = vmatpush1.bf16.msra.mxu0 0
  %3069 = vmatprep.subr.bf16.mxu0 0
  %3070 = vmatpush1.bf16.msra.mxu0 0
  %3071 = vmatprep.subr.bf16.mxu0 0
  %3072 = vmatpush1.bf16.msra.mxu0 0
  %3073 = vmatprep.subr.bf16.mxu0 0
  %3074 = vmatpush1.bf16.msra.mxu0 0
  %3075 = vmatprep.subr.bf16.mxu0 0
  %3076 = vmatpush1.bf16.msra.mxu0 0
  %3077 = vmatprep.subr.bf16.mxu0 0
  %3078 = vmatpush1.bf16.msra.mxu0 0
  %3079 = vmatprep.subr.bf16.mxu0 0
  %3080 = vmatpush1.bf16.msra.mxu0 0
  %3081 = vmatprep.subr.bf16.mxu0 0
  %3082 = vmatpush1.bf16.msra.mxu0 0
  %3083 = vmatprep.mubr.bf16.mxu0 0
  %3084 = vmatmul.mubr.bf16.gmra.mrb[0].mxu0 %v2896
  %v3085 = vpop.f32.mrb[0].mxu0
  %v3086 = vadd.f32 0.0, %v3085
  %v3087 = vpop.f32.mrb[0].mxu0
  %v3088 = vadd.f32 0.0, %v3087
  %v3089 = vpop.f32.mrb[0].mxu0
  %v3090 = vpop.f32.mrb[0].mxu0
  %3091 = vdwg.mxu0
  %3092 = vmatprep.subr.bf16.mxu0 %v1190
  %3093 = vmatpush1.bf16.msra.mxu0 %v1189
  %3094 = vmatprep.subr.bf16.mxu0 %v1194
  %3095 = vmatpush1.bf16.msra.mxu0 %v1193
  %3096 = vmatprep.subr.bf16.mxu0 %v1198
  %3097 = vmatpush1.bf16.msra.mxu0 %v1197
  %3098 = vmatprep.subr.bf16.mxu0 %v1202
  %3099 = vmatpush1.bf16.msra.mxu0 %v1201
  %3100 = vmatprep.subr.bf16.mxu0 %v1206
  %3101 = vmatpush1.bf16.msra.mxu0 %v1205
  %3102 = vmatprep.subr.bf16.mxu0 %v1210
  %3103 = vmatpush1.bf16.msra.mxu0 %v1209
  %3104 = vmatprep.subr.bf16.mxu0 %v1214
  %3105 = vmatpush1.bf16.msra.mxu0 %v1213
  %3106 = vmatprep.subr.bf16.mxu0 %v1218
  %3107 = vmatpush1.bf16.msra.mxu0 %v1217
  %3108 = vmatprep.subr.bf16.mxu0 0
  %3109 = vmatpush1.bf16.msra.mxu0 0
  %3110 = vmatprep.subr.bf16.mxu0 0
  %3111 = vmatpush1.bf16.msra.mxu0 0
  %3112 = vmatprep.subr.bf16.mxu0 0
  %3113 = vmatpush1.bf16.msra.mxu0 0
  %3114 = vmatprep.subr.bf16.mxu0 0
  %3115 = vmatpush1.bf16.msra.mxu0 0
  %3116 = vmatprep.subr.bf16.mxu0 0
  %3117 = vmatpush1.bf16.msra.mxu0 0
  %3118 = vmatprep.subr.bf16.mxu0 0
  %3119 = vmatpush1.bf16.msra.mxu0 0
  %3120 = vmatprep.subr.bf16.mxu0 0
  %3121 = vmatpush1.bf16.msra.mxu0 0
  %3122 = vmatprep.subr.bf16.mxu0 0
  %3123 = vmatpush1.bf16.msra.mxu0 0
  %3124 = vmatprep.mubr.bf16.mxu0 0
  %3125 = vmatmul.mubr.bf16.gmra.mrb[0].mxu0 %v3009
  %v3126 = vpop.f32.mrb[0].mxu0
  %v3127 = vadd.f32 %v3045, %v3126
  %v3128 = vpop.f32.mrb[0].mxu0
  %v3129 = vadd.f32 %v3047, %v3128
  %v3130 = vpop.f32.mrb[0].mxu0
  %v3131 = vpop.f32.mrb[0].mxu0
  %3132 = vdwg.mxu0
  %3133 = vmatprep.subr.bf16.mxu0 %v1192
  %3134 = vmatpush1.bf16.msra.mxu0 %v1191
  %3135 = vmatprep.subr.bf16.mxu0 %v1196
  %3136 = vmatpush1.bf16.msra.mxu0 %v1195
  %3137 = vmatprep.subr.bf16.mxu0 %v1200
  %3138 = vmatpush1.bf16.msra.mxu0 %v1199
  %3139 = vmatprep.subr.bf16.mxu0 %v1204
  %3140 = vmatpush1.bf16.msra.mxu0 %v1203
  %3141 = vmatprep.subr.bf16.mxu0 %v1208
  %3142 = vmatpush1.bf16.msra.mxu0 %v1207
  %3143 = vmatprep.subr.bf16.mxu0 %v1212
  %3144 = vmatpush1.bf16.msra.mxu0 %v1211
  %3145 = vmatprep.subr.bf16.mxu0 %v1216
  %3146 = vmatpush1.bf16.msra.mxu0 %v1215
  %3147 = vmatprep.subr.bf16.mxu0 %v1220
  %3148 = vmatpush1.bf16.msra.mxu0 %v1219
  %3149 = vmatprep.subr.bf16.mxu0 0
  %3150 = vmatpush1.bf16.msra.mxu0 0
  %3151 = vmatprep.subr.bf16.mxu0 0
  %3152 = vmatpush1.bf16.msra.mxu0 0
  %3153 = vmatprep.subr.bf16.mxu0 0
  %3154 = vmatpush1.bf16.msra.mxu0 0
  %3155 = vmatprep.subr.bf16.mxu0 0
  %3156 = vmatpush1.bf16.msra.mxu0 0
  %3157 = vmatprep.subr.bf16.mxu0 0
  %3158 = vmatpush1.bf16.msra.mxu0 0
  %3159 = vmatprep.subr.bf16.mxu0 0
  %3160 = vmatpush1.bf16.msra.mxu0 0
  %3161 = vmatprep.subr.bf16.mxu0 0
  %3162 = vmatpush1.bf16.msra.mxu0 0
  %3163 = vmatprep.subr.bf16.mxu0 0
  %3164 = vmatpush1.bf16.msra.mxu0 0
  %3165 = vmatprep.mubr.bf16.mxu0 0
  %3166 = vmatmul.mubr.bf16.gmra.mrb[0].mxu0 %v3009
  %v3167 = vpop.f32.mrb[0].mxu0
  %v3168 = vadd.f32 %v3086, %v3167
  %v3169 = vpop.f32.mrb[0].mxu0
  %v3170 = vadd.f32 %v3088, %v3169
  %v3171 = vpop.f32.mrb[0].mxu0
  %v3172 = vpop.f32.mrb[0].mxu0
  %3173 = vdwg.mxu0
  %v3174 = vadd.f32 %v3127, %v1339
  %v3175 = vadd.f32 %v3129, %v1343
  %v3176 = vadd.f32 %v3168, %v1347
  %v3177 = vadd.f32 %v3170, %v1351
  %v3178 = vmul.f32 %v3174, %v571
  %v3179 = vmul.f32 %v3175, %v572
  %v3180 = vmul.f32 %v3176, %v573
  %v3181 = vmul.f32 %v3177, %v574
  %v3182 = vtanh.pop %v3178
  %v3183 = vtanh.pop %v3179
  %v3184 = vtanh.pop %v3180
  %v3185 = vtanh.pop %v3181
  %v3186 = vmul.f32 %v3182, %v571
  %v3187 = vmul.f32 %v3183, %v572
  %v3188 = vmul.f32 %v3184, %v573
  %v3189 = vmul.f32 %v3185, %v574
  %v3190 = vadd.f32 %v3186, %v575
  %v3191 = vadd.f32 %v3187, %v576
  %v3192 = vadd.f32 %v3188, %v577
  %v3193 = vadd.f32 %v3189, %v578
  %v3194 = vmul.f32 %v3191, %v2893
  %v3195 = vmul.f32 %v3190, %v3192
  %v3196 = vadd.f32 %v3194, %v3195
  %v3197 = vtanh.pop %v3196
  %v3198 = vmul.f32 %v3193, %v3197
  %v3199 = vpack.c.bf16 %v3198, %v3198
  %3200 = vmatprep.subr.bf16.mxu0 %v676
  %3201 = vmatpush1.bf16.msra.mxu0 %v675
  %3202 = vmatprep.subr.bf16.mxu0 %v680
  %3203 = vmatpush1.bf16.msra.mxu0 %v679
  %3204 = vmatprep.subr.bf16.mxu0 %v684
  %3205 = vmatpush1.bf16.msra.mxu0 %v683
  %3206 = vmatprep.subr.bf16.mxu0 %v688
  %3207 = vmatpush1.bf16.msra.mxu0 %v687
  %3208 = vmatprep.subr.bf16.mxu0 %v692
  %3209 = vmatpush1.bf16.msra.mxu0 %v691
  %3210 = vmatprep.subr.bf16.mxu0 %v696
  %3211 = vmatpush1.bf16.msra.mxu0 %v695
  %3212 = vmatprep.subr.bf16.mxu0 %v700
  %3213 = vmatpush1.bf16.msra.mxu0 %v699
  %3214 = vmatprep.subr.bf16.mxu0 %v704
  %3215 = vmatpush1.bf16.msra.mxu0 %v703
  %3216 = vmatprep.subr.bf16.mxu0 0
  %3217 = vmatpush1.bf16.msra.mxu0 0
  %3218 = vmatprep.subr.bf16.mxu0 0
  %3219 = vmatpush1.bf16.msra.mxu0 0
  %3220 = vmatprep.subr.bf16.mxu0 0
  %3221 = vmatpush1.bf16.msra.mxu0 0
  %3222 = vmatprep.subr.bf16.mxu0 0
  %3223 = vmatpush1.bf16.msra.mxu0 0
  %3224 = vmatprep.subr.bf16.mxu0 0
  %3225 = vmatpush1.bf16.msra.mxu0 0
  %3226 = vmatprep.subr.bf16.mxu0 0
  %3227 = vmatpush1.bf16.msra.mxu0 0
  %3228 = vmatprep.subr.bf16.mxu0 0
  %3229 = vmatpush1.bf16.msra.mxu0 0
  %3230 = vmatprep.subr.bf16.mxu0 0
  %3231 = vmatpush1.bf16.msra.mxu0 0
  %3232 = vmatprep.mubr.bf16.mxu0 0
  %3233 = vmatmul.mubr.bf16.gmra.mrb[0].mxu0 %v3009
  %v3234 = vpop.f32.mrb[0].mxu0
  %v3235 = vadd.f32 0.0, %v3234
  %v3236 = vpop.f32.mrb[0].mxu0
  %v3237 = vadd.f32 0.0, %v3236
  %v3238 = vpop.f32.mrb[0].mxu0
  %v3239 = vpop.f32.mrb[0].mxu0
  %3240 = vdwg.mxu0
  %3241 = vmatprep.subr.bf16.mxu0 %v678
  %3242 = vmatpush1.bf16.msra.mxu0 %v677
  %3243 = vmatprep.subr.bf16.mxu0 %v682
  %3244 = vmatpush1.bf16.msra.mxu0 %v681
  %3245 = vmatprep.subr.bf16.mxu0 %v686
  %3246 = vmatpush1.bf16.msra.mxu0 %v685
  %3247 = vmatprep.subr.bf16.mxu0 %v690
  %3248 = vmatpush1.bf16.msra.mxu0 %v689
  %3249 = vmatprep.subr.bf16.mxu0 %v694
  %3250 = vmatpush1.bf16.msra.mxu0 %v693
  %3251 = vmatprep.subr.bf16.mxu0 %v698
  %3252 = vmatpush1.bf16.msra.mxu0 %v697
  %3253 = vmatprep.subr.bf16.mxu0 %v702
  %3254 = vmatpush1.bf16.msra.mxu0 %v701
  %3255 = vmatprep.subr.bf16.mxu0 %v706
  %3256 = vmatpush1.bf16.msra.mxu0 %v705
  %3257 = vmatprep.subr.bf16.mxu0 0
  %3258 = vmatpush1.bf16.msra.mxu0 0
  %3259 = vmatprep.subr.bf16.mxu0 0
  %3260 = vmatpush1.bf16.msra.mxu0 0
  %3261 = vmatprep.subr.bf16.mxu0 0
  %3262 = vmatpush1.bf16.msra.mxu0 0
  %3263 = vmatprep.subr.bf16.mxu0 0
  %3264 = vmatpush1.bf16.msra.mxu0 0
  %3265 = vmatprep.subr.bf16.mxu0 0
  %3266 = vmatpush1.bf16.msra.mxu0 0
  %3267 = vmatprep.subr.bf16.mxu0 0
  %3268 = vmatpush1.bf16.msra.mxu0 0
  %3269 = vmatprep.subr.bf16.mxu0 0
  %3270 = vmatpush1.bf16.msra.mxu0 0
  %3271 = vmatprep.subr.bf16.mxu0 0
  %3272 = vmatpush1.bf16.msra.mxu0 0
  %3273 = vmatprep.mubr.bf16.mxu0 0
  %3274 = vmatmul.mubr.bf16.gmra.mrb[0].mxu0 %v3009
  %v3275 = vpop.f32.mrb[0].mxu0
  %v3276 = vadd.f32 0.0, %v3275
  %v3277 = vpop.f32.mrb[0].mxu0
  %v3278 = vadd.f32 0.0, %v3277
  %v3279 = vpop.f32.mrb[0].mxu0
  %v3280 = vpop.f32.mrb[0].mxu0
  %3281 = vdwg.mxu0
  %s3282 = scalar_lea.vmem [#allocation2], 224
  %v3283 = vld [vmem:[%s3282] sm:$0xff]
  %v3284 = vld [vmem:[%s3282 + $0x8] sm:$0xff]
  %v3285 = vld [vmem:[%s3282 + $0x10] sm:$0xff]
  %v3286 = vld [vmem:[%s3282 + $0x18] sm:$0xff]
  %v3287 = vadd.f32 %v3283, %v3235
  %v3288 = vadd.f32 %v3284, %v3237
  %v3289 = vadd.f32 %v3285, %v3276
  %v3290 = vadd.f32 %v3286, %v3278
  %v3291 = vmul.f32 %v3287, %v571
  %v3292 = vmul.f32 %v3288, %v572
  %v3293 = vmul.f32 %v3289, %v573
  %v3294 = vmul.f32 %v3290, %v574
  %v3295 = vtanh.pop %v3291
  %v3296 = vtanh.pop %v3292
  %v3297 = vtanh.pop %v3293
  %v3298 = vtanh.pop %v3294
  %v3299 = vmul.f32 %v3295, %v571
  %v3300 = vmul.f32 %v3296, %v572
  %v3301 = vmul.f32 %v3297, %v573
  %v3302 = vmul.f32 %v3298, %v574
  %v3303 = vadd.f32 %v3299, %v575
  %v3304 = vadd.f32 %v3300, %v576
  %v3305 = vadd.f32 %v3301, %v577
  %v3306 = vadd.f32 %v3302, %v578
  %v3307 = vmul.f32 %v3304, %v3006
  %v3308 = vmul.f32 %v3303, %v3305
  %v3309 = vadd.f32 %v3307, %v3308
  %v3310 = vtanh.pop %v3309
  %v3311 = vmul.f32 %v3306, %v3310
  %v3312 = vpack.c.bf16 %v3311, %v3311
  %3313 = vmatprep.subr.bf16.mxu0 %v948
  %3314 = vmatpush1.bf16.msra.mxu0 %v947
  %3315 = vmatprep.subr.bf16.mxu0 %v952
  %3316 = vmatpush1.bf16.msra.mxu0 %v951
  %3317 = vmatprep.subr.bf16.mxu0 %v956
  %3318 = vmatpush1.bf16.msra.mxu0 %v955
  %3319 = vmatprep.subr.bf16.mxu0 %v960
  %3320 = vmatpush1.bf16.msra.mxu0 %v959
  %3321 = vmatprep.subr.bf16.mxu0 %v964
  %3322 = vmatpush1.bf16.msra.mxu0 %v963
  %3323 = vmatprep.subr.bf16.mxu0 %v968
  %3324 = vmatpush1.bf16.msra.mxu0 %v967
  %3325 = vmatprep.subr.bf16.mxu0 %v972
  %3326 = vmatpush1.bf16.msra.mxu0 %v971
  %3327 = vmatprep.subr.bf16.mxu0 %v976
  %3328 = vmatpush1.bf16.msra.mxu0 %v975
  %3329 = vmatprep.subr.bf16.mxu0 0
  %3330 = vmatpush1.bf16.msra.mxu0 0
  %3331 = vmatprep.subr.bf16.mxu0 0
  %3332 = vmatpush1.bf16.msra.mxu0 0
  %3333 = vmatprep.subr.bf16.mxu0 0
  %3334 = vmatpush1.bf16.msra.mxu0 0
  %3335 = vmatprep.subr.bf16.mxu0 0
  %3336 = vmatpush1.bf16.msra.mxu0 0
  %3337 = vmatprep.subr.bf16.mxu0 0
  %3338 = vmatpush1.bf16.msra.mxu0 0
  %3339 = vmatprep.subr.bf16.mxu0 0
  %3340 = vmatpush1.bf16.msra.mxu0 0
  %3341 = vmatprep.subr.bf16.mxu0 0
  %3342 = vmatpush1.bf16.msra.mxu0 0
  %3343 = vmatprep.subr.bf16.mxu0 0
  %3344 = vmatpush1.bf16.msra.mxu0 0
  %3345 = vmatprep.mubr.bf16.mxu0 0
  %3346 = vmatmul.mubr.bf16.gmra.mrb[0].mxu0 %v3199
  %v3347 = vpop.f32.mrb[0].mxu0
  %v3348 = vadd.f32 0.0, %v3347
  %v3349 = vpop.f32.mrb[0].mxu0
  %v3350 = vadd.f32 0.0, %v3349
  %v3351 = vpop.f32.mrb[0].mxu0
  %v3352 = vpop.f32.mrb[0].mxu0
  %3353 = vdwg.mxu0
  %3354 = vmatprep.subr.bf16.mxu0 %v950
  %3355 = vmatpush1.bf16.msra.mxu0 %v949
  %3356 = vmatprep.subr.bf16.mxu0 %v954
  %3357 = vmatpush1.bf16.msra.mxu0 %v953
  %3358 = vmatprep.subr.bf16.mxu0 %v958
  %3359 = vmatpush1.bf16.msra.mxu0 %v957
  %3360 = vmatprep.subr.bf16.mxu0 %v962
  %3361 = vmatpush1.bf16.msra.mxu0 %v961
  %3362 = vmatprep.subr.bf16.mxu0 %v966
  %3363 = vmatpush1.bf16.msra.mxu0 %v965
  %3364 = vmatprep.subr.bf16.mxu0 %v970
  %3365 = vmatpush1.bf16.msra.mxu0 %v969
  %3366 = vmatprep.subr.bf16.mxu0 %v974
  %3367 = vmatpush1.bf16.msra.mxu0 %v973
  %3368 = vmatprep.subr.bf16.mxu0 %v978
  %3369 = vmatpush1.bf16.msra.mxu0 %v977
  %3370 = vmatprep.subr.bf16.mxu0 0
  %3371 = vmatpush1.bf16.msra.mxu0 0
  %3372 = vmatprep.subr.bf16.mxu0 0
  %3373 = vmatpush1.bf16.msra.mxu0 0
  %3374 = vmatprep.subr.bf16.mxu0 0
  %3375 = vmatpush1.bf16.msra.mxu0 0
  %3376 = vmatprep.subr.bf16.mxu0 0
  %3377 = vmatpush1.bf16.msra.mxu0 0
  %3378 = vmatprep.subr.bf16.mxu0 0
  %3379 = vmatpush1.bf16.msra.mxu0 0
  %3380 = vmatprep.subr.bf16.mxu0 0
  %3381 = vmatpush1.bf16.msra.mxu0 0
  %3382 = vmatprep.subr.bf16.mxu0 0
  %3383 = vmatpush1.bf16.msra.mxu0 0
  %3384 = vmatprep.subr.bf16.mxu0 0
  %3385 = vmatpush1.bf16.msra.mxu0 0
  %3386 = vmatprep.mubr.bf16.mxu0 0
  %3387 = vmatmul.mubr.bf16.gmra.mrb[0].mxu0 %v3199
  %v3388 = vpop.f32.mrb[0].mxu0
  %v3389 = vadd.f32 0.0, %v3388
  %v3390 = vpop.f32.mrb[0].mxu0
  %v3391 = vadd.f32 0.0, %v3390
  %v3392 = vpop.f32.mrb[0].mxu0
  %v3393 = vpop.f32.mrb[0].mxu0
  %3394 = vdwg.mxu0
  %3395 = vmatprep.subr.bf16.mxu0 %v1190
  %3396 = vmatpush1.bf16.msra.mxu0 %v1189
  %3397 = vmatprep.subr.bf16.mxu0 %v1194
  %3398 = vmatpush1.bf16.msra.mxu0 %v1193
  %3399 = vmatprep.subr.bf16.mxu0 %v1198
  %3400 = vmatpush1.bf16.msra.mxu0 %v1197
  %3401 = vmatprep.subr.bf16.mxu0 %v1202
  %3402 = vmatpush1.bf16.msra.mxu0 %v1201
  %3403 = vmatprep.subr.bf16.mxu0 %v1206
  %3404 = vmatpush1.bf16.msra.mxu0 %v1205
  %3405 = vmatprep.subr.bf16.mxu0 %v1210
  %3406 = vmatpush1.bf16.msra.mxu0 %v1209
  %3407 = vmatprep.subr.bf16.mxu0 %v1214
  %3408 = vmatpush1.bf16.msra.mxu0 %v1213
  %3409 = vmatprep.subr.bf16.mxu0 %v1218
  %3410 = vmatpush1.bf16.msra.mxu0 %v1217
  %3411 = vmatprep.subr.bf16.mxu0 0
  %3412 = vmatpush1.bf16.msra.mxu0 0
  %3413 = vmatprep.subr.bf16.mxu0 0
  %3414 = vmatpush1.bf16.msra.mxu0 0
  %3415 = vmatprep.subr.bf16.mxu0 0
  %3416 = vmatpush1.bf16.msra.mxu0 0
  %3417 = vmatprep.subr.bf16.mxu0 0
  %3418 = vmatpush1.bf16.msra.mxu0 0
  %3419 = vmatprep.subr.bf16.mxu0 0
  %3420 = vmatpush1.bf16.msra.mxu0 0
  %3421 = vmatprep.subr.bf16.mxu0 0
  %3422 = vmatpush1.bf16.msra.mxu0 0
  %3423 = vmatprep.subr.bf16.mxu0 0
  %3424 = vmatpush1.bf16.msra.mxu0 0
  %3425 = vmatprep.subr.bf16.mxu0 0
  %3426 = vmatpush1.bf16.msra.mxu0 0
  %3427 = vmatprep.mubr.bf16.mxu0 0
  %3428 = vmatmul.mubr.bf16.gmra.mrb[0].mxu0 %v3312
  %v3429 = vpop.f32.mrb[0].mxu0
  %v3430 = vadd.f32 %v3348, %v3429
  %v3431 = vpop.f32.mrb[0].mxu0
  %v3432 = vadd.f32 %v3350, %v3431
  %v3433 = vpop.f32.mrb[0].mxu0
  %v3434 = vpop.f32.mrb[0].mxu0
  %3435 = vdwg.mxu0
  %3436 = vmatprep.subr.bf16.mxu0 %v1192
  %3437 = vmatpush1.bf16.msra.mxu0 %v1191
  %3438 = vmatprep.subr.bf16.mxu0 %v1196
  %3439 = vmatpush1.bf16.msra.mxu0 %v1195
  %3440 = vmatprep.subr.bf16.mxu0 %v1200
  %3441 = vmatpush1.bf16.msra.mxu0 %v1199
  %3442 = vmatprep.subr.bf16.mxu0 %v1204
  %3443 = vmatpush1.bf16.msra.mxu0 %v1203
  %3444 = vmatprep.subr.bf16.mxu0 %v1208
  %3445 = vmatpush1.bf16.msra.mxu0 %v1207
  %3446 = vmatprep.subr.bf16.mxu0 %v1212
  %3447 = vmatpush1.bf16.msra.mxu0 %v1211
  %3448 = vmatprep.subr.bf16.mxu0 %v1216
  %3449 = vmatpush1.bf16.msra.mxu0 %v1215
  %3450 = vmatprep.subr.bf16.mxu0 %v1220
  %3451 = vmatpush1.bf16.msra.mxu0 %v1219
  %3452 = vmatprep.subr.bf16.mxu0 0
  %3453 = vmatpush1.bf16.msra.mxu0 0
  %3454 = vmatprep.subr.bf16.mxu0 0
  %3455 = vmatpush1.bf16.msra.mxu0 0
  %3456 = vmatprep.subr.bf16.mxu0 0
  %3457 = vmatpush1.bf16.msra.mxu0 0
  %3458 = vmatprep.subr.bf16.mxu0 0
  %3459 = vmatpush1.bf16.msra.mxu0 0
  %3460 = vmatprep.subr.bf16.mxu0 0
  %3461 = vmatpush1.bf16.msra.mxu0 0
  %3462 = vmatprep.subr.bf16.mxu0 0
  %3463 = vmatpush1.bf16.msra.mxu0 0
  %3464 = vmatprep.subr.bf16.mxu0 0
  %3465 = vmatpush1.bf16.msra.mxu0 0
  %3466 = vmatprep.subr.bf16.mxu0 0
  %3467 = vmatpush1.bf16.msra.mxu0 0
  %3468 = vmatprep.mubr.bf16.mxu0 0
  %3469 = vmatmul.mubr.bf16.gmra.mrb[0].mxu0 %v3312
  %v3470 = vpop.f32.mrb[0].mxu0
  %v3471 = vadd.f32 %v3389, %v3470
  %v3472 = vpop.f32.mrb[0].mxu0
  %v3473 = vadd.f32 %v3391, %v3472
  %v3474 = vpop.f32.mrb[0].mxu0
  %v3475 = vpop.f32.mrb[0].mxu0
  %3476 = vdwg.mxu0
  %v3477 = vadd.f32 %v3430, %v1339
  %v3478 = vadd.f32 %v3432, %v1343
  %v3479 = vadd.f32 %v3471, %v1347
  %v3480 = vadd.f32 %v3473, %v1351
  %v3481 = vmul.f32 %v3477, %v571
  %v3482 = vmul.f32 %v3478, %v572
  %v3483 = vmul.f32 %v3479, %v573
  %v3484 = vmul.f32 %v3480, %v574
  %v3485 = vtanh.pop %v3481
  %v3486 = vtanh.pop %v3482
  %v3487 = vtanh.pop %v3483
  %v3488 = vtanh.pop %v3484
  %v3489 = vmul.f32 %v3485, %v571
  %v3490 = vmul.f32 %v3486, %v572
  %v3491 = vmul.f32 %v3487, %v573
  %v3492 = vmul.f32 %v3488, %v574
  %v3493 = vadd.f32 %v3489, %v575
  %v3494 = vadd.f32 %v3490, %v576
  %v3495 = vadd.f32 %v3491, %v577
  %v3496 = vadd.f32 %v3492, %v578
  %v3497 = vmul.f32 %v3494, %v3196
  %v3498 = vmul.f32 %v3493, %v3495
  %v3499 = vadd.f32 %v3497, %v3498
  %v3500 = vtanh.pop %v3499
  %v3501 = vmul.f32 %v3496, %v3500
  %v3502 = vpack.c.bf16 %v3501, %v3501
  %v3503 = vld [vmem:[%s7] sm:$0xf]
  %v3504 = vld [vmem:[%s7 + $0x4] sm:$0xf]
  %v3505 = vld [vmem:[%s7 + $0x8] sm:$0xf]
  %v3506 = vld [vmem:[%s7 + $0xc] sm:$0xf]
  %v3507 = vld [vmem:[%s7 + $0x10] sm:$0xf]
  %v3508 = vld [vmem:[%s7 + $0x14] sm:$0xf]
  %v3509 = vld [vmem:[%s7 + $0x18] sm:$0xf]
  %v3510 = vld [vmem:[%s7 + $0x1c] sm:$0xf]
  %v3511 = vld [vmem:[%s7 + $0x20] sm:$0xf]
  %v3512 = vld [vmem:[%s7 + $0x24] sm:$0xf]
  %v3513 = vld [vmem:[%s7 + $0x28] sm:$0xf]
  %v3514 = vld [vmem:[%s7 + $0x2c] sm:$0xf]
  %v3515 = vld [vmem:[%s7 + $0x30] sm:$0xf]
  %v3516 = vld [vmem:[%s7 + $0x34] sm:$0xf]
  %v3517 = vld [vmem:[%s7 + $0x38] sm:$0xf]
  %v3518 = vld [vmem:[%s7 + $0x3c] sm:$0xf]
  %v3519 = vld [vmem:[%s8] sm:$0x1]
  %v3521 = vlaneseq
  %v3522 = vshrl.u32 %v3521, 7
  %v3523 = vsub.s32 0, %v3522
  %v3524 = vrot.slane %v3519, %v3523
  %v3542 = vunpack.c.l.b16 %v3503
  %v3543 = vunpack.c.l.b16 %v3504
  %v3544 = vunpack.c.l.b16 %v3505
  %v3545 = vunpack.c.l.b16 %v3506
  %v3546 = vunpack.c.l.b16 %v3507
  %v3547 = vunpack.c.l.b16 %v3508
  %v3548 = vunpack.c.l.b16 %v3509
  %v3549 = vunpack.c.l.b16 %v3510
  %v3550 = vunpack.c.l.b16 %v3511
  %v3551 = vunpack.c.l.b16 %v3512
  %v3552 = vunpack.c.l.b16 %v3513
  %v3553 = vunpack.c.l.b16 %v3514
  %v3554 = vunpack.c.l.b16 %v3515
  %v3555 = vunpack.c.l.b16 %v3516
  %v3556 = vunpack.c.l.b16 %v3517
  %v3557 = vunpack.c.l.b16 %v3518
  %v3558 = vpack.c.b16 %v3543, %v3542
  %v3559 = vpack.c.b16 %v3545, %v3544
  %v3560 = vpack.c.b16 %v3547, %v3546
  %v3561 = vpack.c.b16 %v3549, %v3548
  %v3562 = vpack.c.b16 %v3551, %v3550
  %v3563 = vpack.c.b16 %v3553, %v3552
  %v3564 = vpack.c.b16 %v3555, %v3554
  %v3565 = vpack.c.b16 %v3557, %v3556
  %3574 = vmatprep.subr.bf16.mxu0 0
  %3575 = vmatpush1.bf16.msra.mxu0 %v3558
  %3576 = vmatprep.subr.bf16.mxu0 0
  %3577 = vmatpush1.bf16.msra.mxu0 %v3559
  %3578 = vmatprep.subr.bf16.mxu0 0
  %3579 = vmatpush1.bf16.msra.mxu0 %v3560
  %3580 = vmatprep.subr.bf16.mxu0 0
  %3581 = vmatpush1.bf16.msra.mxu0 %v3561
  %3582 = vmatprep.subr.bf16.mxu0 0
  %3583 = vmatpush1.bf16.msra.mxu0 %v3562
  %3584 = vmatprep.subr.bf16.mxu0 0
  %3585 = vmatpush1.bf16.msra.mxu0 %v3563
  %3586 = vmatprep.subr.bf16.mxu0 0
  %3587 = vmatpush1.bf16.msra.mxu0 %v3564
  %3588 = vmatprep.subr.bf16.mxu0 0
  %3589 = vmatpush1.bf16.msra.mxu0 %v3565
  %3590 = vmatprep.subr.bf16.mxu0 0
  %3591 = vmatpush1.bf16.msra.mxu0 0
  %3592 = vmatprep.subr.bf16.mxu0 0
  %3593 = vmatpush1.bf16.msra.mxu0 0
  %3594 = vmatprep.subr.bf16.mxu0 0
  %3595 = vmatpush1.bf16.msra.mxu0 0
  %3596 = vmatprep.subr.bf16.mxu0 0
  %3597 = vmatpush1.bf16.msra.mxu0 0
  %3598 = vmatprep.subr.bf16.mxu0 0
  %3599 = vmatpush1.bf16.msra.mxu0 0
  %3600 = vmatprep.subr.bf16.mxu0 0
  %3601 = vmatpush1.bf16.msra.mxu0 0
  %3602 = vmatprep.subr.bf16.mxu0 0
  %3603 = vmatpush1.bf16.msra.mxu0 0
  %3604 = vmatprep.subr.bf16.mxu0 0
  %3605 = vmatpush1.bf16.msra.mxu0 0
  %3606 = vmatprep.mubr.bf16.mxu0 0
  %3607 = vmatmul.mubr.bf16.gmra.mrb[0].mxu0 %v3502
  %v3608 = vpop.f32.mrb[0].mxu0
  %v3609 = vadd.f32 %v3524, %v3608
  %v3610 = vpop.f32.mrb[0].mxu0
  %v3611 = vpop.f32.mrb[0].mxu0
  %v3612 = vpop.f32.mrb[0].mxu0
  %3613 = vdwg.mxu0
  %3614 = vmax.xlane.f32.xlu0 %v3609
  %v3615 = vpop.xlane.xlu0 %3614
  %v3616 = vsub.f32 %v3609, %v3615
  %v3617 = vmul.f32 %v3616, 1.442695
  %v3618 = vpow.pop %v3617
  %3619 = vadd.xlane.f32.xlu0 %v3618
  %v3620 = vpop.xlane.xlu0 %3619
  %v3621 = vrcp.pop %v3620
  %v3622 = vmul.f32 %v3618, %v3621
  %3623 = vst [vmem:[%s9] sm:$0xff] %v3622
  // Predicated region
  $region38: #{_lambda_.1} parent=0 // pred_check
    _
  $region39: #{_lambda_.1} parent=0 // pred_check_branch
    %3625 = sbr.rel (0) target = $region41
  $region40: #{_lambda_.1} parent=0 // pred_region
    _
  $region41: #{_lambda_.1} parent=0 // pred_fallthru
    _
  // Predicated region
  $region42: #{_lambda_.1} parent=0 // pred_check
    _
  $region43: #{_lambda_.1} parent=0 // pred_check_branch
    %3627 = sbr.rel (0) target = $region45
  $region44: #{_lambda_.1} parent=0 // pred_region
    _
  $region45: #{_lambda_.1} parent=0 // pred_fallthru
    _

</llo_original>
